<compile_context>
chip_gen: v5e
topology: v5e:2x2
jax: 0.10.0
libtpu: 0.0.40
codegen_flags: <defaults>
</compile_context>

<pallas_src>
import numpy as np
import jax
import jax.numpy as jnp
from jax.experimental import pallas as pl
from jax.experimental.pallas import tpu as pltpu


def _round_up(a, m):
    return ((a + m - 1) // m) * m


def _cdiv(a, b):
    return (a + b - 1) // b


def _magnitude_kernel(blk_a_ref, blk_b_ref, basis_ref, out_ref):
    """One row-tile of |STFT|.

    blk_a_ref : (tm, hop) f32  hop-blocks [i*tm, (i+1)*tm) of the padded signal
    blk_b_ref : (tm, hop) f32  hop-blocks [(i+1)*tm, (i+2)*tm)  (next tile)
    basis_ref : (N, N)  bf16   window-folded, symmetry-packed real-DFT basis
    out_ref   : (tm, n_out_pad) f32
    """
    tm, hop = blk_a_ref.shape
    n = basis_ref.shape[0]
    r = n // hop                       # hop-blocks per frame (= fft / hop)
    half = n // 2

    # In-kernel framing: frame row t of this tile spans hop-blocks t..t+r-1 of
    # the concatenated (2*tm, hop) slab.  Assembling the (tm, N) frame tile in
    # VMEM costs ~r*tm*hop element moves — negligible next to the 2*tm*N*N
    # matmul FLOPs — and lets the MXU run a single full-depth K=N contraction
    # instead of r shallow K=hop ones (matters on v6e/v7x 256-deep MXUs).
    cat = jnp.concatenate([blk_a_ref[...], blk_b_ref[...]], axis=0)     # (2tm, hop)
    frames = jnp.concatenate([cat[j:j + tm, :] for j in range(r)], axis=1)

    t = jnp.dot(frames.astype(jnp.bfloat16), basis_ref[...],
                preferred_element_type=jnp.float32)                     # (tm, N) f32

    # Columns 0..N/2 of t hold Re(X_k); columns N/2+1..N-1 hold Im(X_k) for
    # k = 1..N/2-1 (the identically-zero sin columns of bins 0 and N/2 were
    # dropped by the symmetry packing).  Swapping the two aligned halves
    # (128-aligned lane slices -> vreg moves) brings Im(X_k) into lane k;
    # mask the two garbage lanes (k = 0 and k = N/2).
    swapped = jnp.concatenate([t[:, half:], t[:, :half]], axis=1)
    lane = jax.lax.broadcasted_iota(jnp.int32, t.shape, 1)
    im = jnp.where((lane == 0) | (lane == half), 0.0, swapped)
    mag = jnp.sqrt(t * t + im * im)

    # 128-aligned slice to the lane-dense output width (padding lanes beyond
    # n_freq hold mirrored-spectrum garbage; the wrapper slices them off).
    out_ref[...] = mag[:, :out_ref.shape[-1]].astype(out_ref.dtype)


def _choose_tiling(n_frames, batch, fft_size, hop_size, n_out_pad,
                   row_align=16, max_tile=2048, vmem_budget=20 << 20):
    """Pick (tile_rows, n_row_tiles): big tiles within a VMEM budget, even grid."""
    # Conservative per-row VMEM bytes: blocks A/B (2 specs, double-buffered,
    # f32) + output tile (double-buffered f32) + kernel temporaries
    # (cat/frames f32+bf16/t/swap/mag ~ 6.5 x fft x 4B).
    per_row = 16 * hop_size + 8 * n_out_pad + 26 * fft_size
    max_tm = (vmem_budget // per_row) // row_align * row_align
    max_tm = max(row_align, min(max_tile, max_tm))
    n_tiles = max(1, _cdiv(n_frames, max_tm))
    # v7x megacore: when we split rows anyway, keep the total number of
    # parallel grid steps even so both TensorCores get balanced work.
    if n_tiles > 1 and (n_tiles * batch) % 2 == 1:
        n_tiles += 1
    tm = _round_up(_cdiv(n_frames, n_tiles), row_align)
    return tm, n_tiles


def magnitude(x, fft_size=1024, hop_size=128, win_length=None):
    """x: (B, 1, T) float32  ->  (B, 1 + T // hop_size, fft_size // 2 + 1) float32."""
    if win_length is None:
        win_length = fft_size
    assert win_length == fft_size, "win_length != fft_size not supported"
    assert fft_size % 128 == 0, "fft_size must be a multiple of 128"
    assert fft_size % hop_size == 0, "fft_size must be a multiple of hop_size"

    B, C, T = x.shape
    assert C == 1
    sig = x[:, 0, :].astype(jnp.float32)

    # torch.stft(center=True, pad_mode='reflect')
    pad = fft_size // 2
    sig_pad = jnp.pad(sig, ((0, 0), (pad, pad)), mode="reflect")       # (B, T + fft)

    n_frames = 1 + T // hop_size
    n_freq = fft_size // 2 + 1
    n_out_pad = _round_up(n_freq, 128)
    r = fft_size // hop_size

    tm, n_tiles = _choose_tiling(n_frames, B, fft_size, hop_size, n_out_pad)
    assert r <= tm, "fft_size/hop_size must not exceed the row tile"
    n_frames_pad = n_tiles * tm
    n_blocks_pad = (n_tiles + 1) * tm        # "next tile" spec reads one tile past

    # Hop-block view of the padded signal: (B, n_blocks, hop).  This is the
    # ONLY signal stream the kernel reads — no fft/hop-duplicated frames array.
    total = sig_pad.shape[1]
    n_blocks = _cdiv(total, hop_size)
    sig_pad = jnp.pad(sig_pad, ((0, 0), (0, n_blocks * hop_size - total)))
    blocks = sig_pad.reshape(B, n_blocks, hop_size)
    blocks = jnp.pad(blocks, ((0, 0), (0, n_blocks_pad - n_blocks), (0, 0)))

    # Window-folded, symmetry-packed real-DFT basis (host-built constant):
    #   cols 0..N/2     : hann[n] *  cos(2*pi*n*k/N), k = 0..N/2
    #   cols N/2+1..N-1 : hann[n] * -sin(2*pi*n*k/N), k = 1..N/2-1
    half = fft_size // 2
    nvec = np.arange(fft_size, dtype=np.float64)
    window = 0.5 - 0.5 * np.cos(2.0 * np.pi * nvec / win_length)       # periodic Hann
    nn = nvec[:, None]
    basis = np.empty((fft_size, fft_size), np.float64)
    basis[:, :half + 1] = np.cos(2.0 * np.pi * nn * np.arange(half + 1) / fft_size)
    basis[:, half + 1:] = -np.sin(2.0 * np.pi * nn * np.arange(1, half) / fft_size)
    basis *= window[:, None]                                           # fold window
    basis = jnp.asarray(basis.astype(np.float32), dtype=jnp.bfloat16)  # MXU-native

    out = pl.pallas_call(
        _magnitude_kernel,
        out_shape=jax.ShapeDtypeStruct((B, n_frames_pad, n_out_pad), jnp.float32),
        grid_spec=pltpu.PrefetchScalarGridSpec(
            num_scalar_prefetch=0,
            grid=(B, n_tiles),
            in_specs=[
                pl.BlockSpec((None, tm, hop_size), lambda b, i: (b, i, 0)),
                pl.BlockSpec((None, tm, hop_size), lambda b, i: (b, i + 1, 0)),
                # Constant index_map -> the basis is DMA'd once and revisited.
                # TODO(synk): pipeline_mode=pl.Buffered(1) here would reclaim
                # the unused second basis buffer for very large fft_size.
                pl.BlockSpec((fft_size, fft_size), lambda b, i: (0, 0)),
            ],
            out_specs=pl.BlockSpec((None, tm, n_out_pad), lambda b, i: (b, i, 0)),
        ),
        compiler_params=pltpu.CompilerParams(
            dimension_semantics=("parallel", "parallel"),
            vmem_limit_bytes=32 << 20),
    )(blocks, blocks, basis)

    # Trim row padding and the garbage lanes beyond n_freq.
    return out[:, :n_frames, :n_freq]


def _reference(x, fft_size, hop_size):
    """Pure-JAX reference (torch.stft center/reflect/hann + abs + transpose)."""
    B, _, T = x.shape
    sig = x[:, 0, :]
    pad = fft_size // 2
    sig_pad = jnp.pad(sig, ((0, 0), (pad, pad)), mode="reflect")
    n_frames = 1 + T // hop_size
    idx = jnp.arange(n_frames)[:, None] * hop_size + jnp.arange(fft_size)[None, :]
    frames = sig_pad[:, idx]                                           # (B, F, N)
    n = jnp.arange(fft_size)
    window = 0.5 - 0.5 * jnp.cos(2.0 * jnp.pi * n / fft_size)
    spec = jnp.fft.rfft(frames * window[None, None, :], axis=-1)
    return jnp.abs(spec)                                               # (B, F, n_freq)


if __name__ == "__main__":
    key = jax.random.PRNGKey(0)
    B, T = 2, 1024
    fft_size, hop_size = 1024, 128        # module defaults
    x = jax.random.normal(key, (B, 1, T), dtype=jnp.float32)

    out = magnitude(x, fft_size=fft_size, hop_size=hop_size)
    out = jax.block_until_ready(out)

    ref = _reference(x, fft_size, hop_size)
    assert out.shape == (B, 1 + T // hop_size, fft_size // 2 + 1), out.shape
    # Loose tolerance: bf16 MXU matmul-DFT (f32 accumulation) vs f32 jnp.fft.rfft.
    np.testing.assert_allclose(np.asarray(out), np.asarray(ref),
                               rtol=5e-2, atol=2.5e-1)

    print("KERNEL_OK")
</pallas_src>

<mosaic_0001>
module attributes {stable_mosaic.version = 11 : i64} {
  func.func @_magnitude_kernel(%arg0: i32, %arg1: i32, %arg2: memref<1x16x128xf32, #tpu.memory_space<vmem>>, %arg3: memref<1x16x128xf32, #tpu.memory_space<vmem>>, %arg4: memref<1024x1024xbf16, #tpu.memory_space<vmem>>, %arg5: memref<1x16x640xf32, #tpu.memory_space<vmem>>) attributes {dimension_semantics = [#tpu.dimension_semantics<parallel>, #tpu.dimension_semantics<parallel>], iteration_bounds = array<i64: 2, 1>, scalar_prefetch = 0 : i64, scratch_operands = 0 : i64, tpu.core_type = #tpu.core_type<tc>, window_params = [{transform_indices = @transform_0, window_bounds = array<i64: 1, 16, 128>}, {transform_indices = @transform_1, window_bounds = array<i64: 1, 16, 128>}, {pipeline_mode = #tpu.pipeline_mode<synchronous>, transform_indices = @transform_2, window_bounds = array<i64: 1024, 1024>}, {transform_indices = @transform_3, window_bounds = array<i64: 1, 16, 640>}]} {
    %c0 = arith.constant 0 : index
    %c0_0 = arith.constant 0 : index
    %c0_1 = arith.constant 0 : index
    %0 = vector.load %arg2[%c0, %c0_0, %c0_1] : memref<1x16x128xf32, #tpu.memory_space<vmem>>, vector<1x16x128xf32>
    %1 = vector.shape_cast %0 : vector<1x16x128xf32> to vector<16x128xf32>
    %c0_2 = arith.constant 0 : index
    %c0_3 = arith.constant 0 : index
    %c0_4 = arith.constant 0 : index
    %2 = vector.load %arg3[%c0_2, %c0_3, %c0_4] : memref<1x16x128xf32, #tpu.memory_space<vmem>>, vector<1x16x128xf32>
    %3 = vector.shape_cast %2 : vector<1x16x128xf32> to vector<16x128xf32>
    %4 = tpu.concatenate %1, %3 in 0 : vector<16x128xf32>, vector<16x128xf32> -> vector<32x128xf32>
    %5 = vector.extract_strided_slice %4 {offsets = [0, 0], sizes = [16, 128], strides = [1, 1]} : vector<32x128xf32> to vector<16x128xf32>
    %6 = vector.extract_strided_slice %4 {offsets = [1, 0], sizes = [16, 128], strides = [1, 1]} : vector<32x128xf32> to vector<16x128xf32>
    %7 = vector.extract_strided_slice %4 {offsets = [2, 0], sizes = [16, 128], strides = [1, 1]} : vector<32x128xf32> to vector<16x128xf32>
    %8 = vector.extract_strided_slice %4 {offsets = [3, 0], sizes = [16, 128], strides = [1, 1]} : vector<32x128xf32> to vector<16x128xf32>
    %9 = vector.extract_strided_slice %4 {offsets = [4, 0], sizes = [16, 128], strides = [1, 1]} : vector<32x128xf32> to vector<16x128xf32>
    %10 = vector.extract_strided_slice %4 {offsets = [5, 0], sizes = [16, 128], strides = [1, 1]} : vector<32x128xf32> to vector<16x128xf32>
    %11 = vector.extract_strided_slice %4 {offsets = [6, 0], sizes = [16, 128], strides = [1, 1]} : vector<32x128xf32> to vector<16x128xf32>
    %12 = vector.extract_strided_slice %4 {offsets = [7, 0], sizes = [16, 128], strides = [1, 1]} : vector<32x128xf32> to vector<16x128xf32>
    %13 = tpu.concatenate %5, %6, %7, %8, %9, %10, %11, %12 in 1 : vector<16x128xf32>, vector<16x128xf32>, vector<16x128xf32>, vector<16x128xf32>, vector<16x128xf32>, vector<16x128xf32>, vector<16x128xf32>, vector<16x128xf32> -> vector<16x1024xf32>
    %14 = arith.truncf %13 : vector<16x1024xf32> to vector<16x1024xbf16>
    %c0_5 = arith.constant 0 : index
    %c0_6 = arith.constant 0 : index
    %15 = vector.load %arg4[%c0_5, %c0_6] : memref<1024x1024xbf16, #tpu.memory_space<vmem>>, vector<1024x1024xbf16>
    %cst = arith.constant dense<0.000000e+00> : vector<16x1024xf32>
    %16 = tpu.matmul %14, %15, %cst {dimension_numbers = #tpu.dot_dimension_numbers<[1], [0], [0], [1], [0, 0, 1, 1], [], []>} : vector<16x1024xbf16>, vector<1024x1024xbf16>, vector<16x1024xf32> -> vector<16x1024xf32>
    %17 = vector.extract_strided_slice %16 {offsets = [0, 512], sizes = [16, 512], strides = [1, 1]} : vector<16x1024xf32> to vector<16x512xf32>
    %18 = vector.extract_strided_slice %16 {offsets = [0, 0], sizes = [16, 512], strides = [1, 1]} : vector<16x1024xf32> to vector<16x512xf32>
    %19 = tpu.concatenate %17, %18 in 1 : vector<16x512xf32>, vector<16x512xf32> -> vector<16x1024xf32>
    %20 = tpu.iota {dimensions = array<i32: 1>} : vector<16x1024xi32>
    %c0_i32 = arith.constant 0 : i32
    %21 = vector.broadcast %c0_i32 : i32 to vector<16x1024xi32>
    %22 = arith.cmpi eq, %20, %21 : vector<16x1024xi32>
    %c512_i32 = arith.constant 512 : i32
    %23 = vector.broadcast %c512_i32 : i32 to vector<16x1024xi32>
    %24 = arith.cmpi eq, %20, %23 : vector<16x1024xi32>
    %25 = arith.ori %22, %24 : vector<16x1024xi1>
    %cst_7 = arith.constant 0.000000e+00 : f32
    %26 = vector.broadcast %cst_7 : f32 to vector<16x1024xf32>
    %27 = arith.select %25, %26, %19 : vector<16x1024xi1>, vector<16x1024xf32>
    %28 = arith.mulf %16, %16 : vector<16x1024xf32>
    %29 = arith.mulf %27, %27 : vector<16x1024xf32>
    %30 = arith.addf %28, %29 : vector<16x1024xf32>
    %31 = math.sqrt %30 : vector<16x1024xf32>
    %32 = vector.extract_strided_slice %31 {offsets = [0, 0], sizes = [16, 640], strides = [1, 1]} : vector<16x1024xf32> to vector<16x640xf32>
    %c0_8 = arith.constant 0 : index
    %c0_9 = arith.constant 0 : index
    %c0_10 = arith.constant 0 : index
    %33 = vector.load %arg5[%c0_8, %c0_9, %c0_10] : memref<1x16x640xf32, #tpu.memory_space<vmem>>, vector<1x16x640xf32>
    %34 = vector.shape_cast %33 : vector<1x16x640xf32> to vector<16x640xf32>
    %35 = vector.shape_cast %32 : vector<16x640xf32> to vector<1x16x640xf32>
    tpu.vector_store %arg5[%c0_8, %c0_9, %c0_10], %35 {strides = array<i32>} : memref<1x16x640xf32, #tpu.memory_space<vmem>>, vector<1x16x640xf32>,
    return
  }
  func.func @transform_0(%arg0: i32, %arg1: i32) -> (i32, i32, i32) {
    %c0_i32 = arith.constant 0 : i32
    %c0_i32_0 = arith.constant 0 : i32
    return %arg0, %arg1, %c0_i32 : i32, i32, i32
  }
  func.func @transform_1(%arg0: i32, %arg1: i32) -> (i32, i32, i32) {
    %c1_i32 = arith.constant 1 : i32
    %0 = arith.addi %arg1, %c1_i32 : i32
    %c0_i32 = arith.constant 0 : i32
    %c0_i32_0 = arith.constant 0 : i32
    return %arg0, %0, %c0_i32 : i32, i32, i32
  }
  func.func @transform_2(%arg0: i32, %arg1: i32) -> (i32, i32) {
    %c0_i32 = arith.constant 0 : i32
    %c0_i32_0 = arith.constant 0 : i32
    %c0_i32_1 = arith.constant 0 : i32
    return %c0_i32, %c0_i32_0 : i32, i32
  }
  func.func @transform_3(%arg0: i32, %arg1: i32) -> (i32, i32, i32) {
    %c0_i32 = arith.constant 0 : i32
    %c0_i32_0 = arith.constant 0 : i32
    return %arg0, %arg1, %c0_i32 : i32, i32, i32
  }
}

</mosaic_0001>

<llo_original>
// kernel: tpu_custom_call.1
$region0: #{tpu_custom_call.1}
  #allocation0 [shape = 'u32[]', space=smem, size = 0x4, offset = 0x4, fixed_abs, tag = 'smem constant byte address 0x4 - core index']
  #allocation1 [shape = 'u32[72,128]{1,0:T(1,128)}', space=vmem, size = 0x9000, scoped, tag = 'internal scratch']
  %s0 = inlined_call_operand.hbm [shape: f32[2,32,128], index: 0, kind: input, shape index: {}]
  %s1 = inlined_call_operand.hbm [shape: f32[2,32,128], index: 1, kind: input, shape index: {}]
  %s2 = inlined_call_operand.hbm [shape: bf16[1024,1024], index: 2, kind: input, shape index: {}]
  %s3 = inlined_call_operand.hbm [shape: f32[2,16,640], index: 3, kind: output, shape index: {}]
  %s4 = sld [smem:[#allocation0]]
  $region57: #{tpu_custom_call.1} parent=0
    _
  %s6 = ssub.s32 1, %s4
  %s7 = scalar_select 0, %s6, %s4
  $region1: #{tpu_custom_call.1} parent=0
    #allocation2 [shape = 'u8[16384]{0}', space=vmem, size = 0x4000, scoped, tag = 'input window, operand 0']
    #allocation3 [shape = 's32[2]{0}', space=sflag, size = 0x8, scoped, tag = 'scoped memory for tpu_custom_call.1']
    #allocation4 [shape = 's32[2]{0}', space=sflag, size = 0x8, scoped, tag = 'scoped memory for tpu_custom_call.1']
    #allocation5 [shape = 'u8[16384]{0}', space=vmem, size = 0x4000, scoped, tag = 'input window, operand 1']
    #allocation6 [shape = 's32[2]{0}', space=sflag, size = 0x8, scoped, tag = 'scoped memory for tpu_custom_call.1']
    #allocation7 [shape = 'u8[2097152]{0}', space=vmem, size = 0x200000, scoped, tag = 'input window, operand 2, single buffered']
    #allocation8 [shape = 'u8[81920]{0}', space=vmem, size = 0x14000, scoped, tag = 'output window, operand 0']
    %8 = vsyncpa [#allocation3], 0
    %s9 = scalar_lea.sflag [#allocation3], 1
    %10 = vsyncpa %s9, 0
    %11 = vsyncpa [#allocation6], 0
    %s12 = scalar_lea.sflag [#allocation6], 1
    %13 = vsyncpa %s12, 0
    %14 = vsyncpa [#allocation4], 0
    %s15 = scalar_lea.sflag [#allocation4], 1
    %16 = vsyncpa %s15, 0
    loop: start=0, step=1, limit=4
    $region2: #{tpu_custom_call.1} parent=1 // loop_pre_header
      _
    $region3: #{tpu_custom_call.1} parent=1 // loop_header
      %s18 = sphi 0, %s22
      %p19 = scmp.ge.s32.totalorder %s18, 4
      %s25 = sphi 0, %s37
      %s26 = sphi 0, %s33
      %s27 = sphi 0, %s25
      %s28 = sphi 0, %s26
      %s29 = sphi 0, %s27
      %s30 = sphi 0, %s28
      %s42 = sphi 0, %s44
      %s45 = sphi 0, %s42
      %s46 = sphi 0, %s45
      %s62 = sphi 0, %s46
      %s72 = sphi 0, %s74
      %s75 = sphi 0, %s72
      %s76 = sphi 0, %s75
      %s92 = sphi 0, %s76
      %s96 = sphi 0, %s96
      %s98 = sphi 0, %s96
      %s99 = sphi 0, %s98
      %s113 = sphi 0, %s99
      %s121 = sphi 0, %s123
      %s124 = sphi 0, %s121
      %s125 = sphi 0, %s124
      %s141 = sphi 0, %s125
    $region4: #{tpu_custom_call.1} parent=1 // loop_header_branch
      %21 = sbr.rel (%p19) target = $region8
    $region5: #{tpu_custom_call.1} parent=1 // loop_body
      %s23 = ssub.s32 %s18, 1
      %s24 = ssub.s32 %s18, 2
      %s31 = sadd.s32 1, %s26
      %p32 = scmp.ge.s32.totalorder %s31, 1
      %s33 = scalar_select %p32, 0, %s31
      %s34 = sadd.s32 1, %s25
      %s35 = scalar_select %p32, %s34, %s25
      %p36 = scmp.ge.s32.totalorder %s35, 2
      %s37 = scalar_select %p36, 0, %s35
      %s38 = ssub.s32 %s25, %s37
      %s39 = ssub.s32 %s26, %s33
      %s40 = sor.u32 %s38, %s39
      %p41 = scmp.eq.s32.totalorder %s40, 0
      %s43 = sadd.s32 %s42, 1
      %s44 = scalar_select %p41, %s42, %s43
      %p47 = pneg %p41
      %p48 = scmp.eq.s32.totalorder %s18, 1
      %p49 = por %p47, %p48
      %p50 = scmp.ne.s32.totalorder %s42, %s45
      %p51 = scmp.eq.s32.totalorder %s18, 0
      %p52 = por %p50, %p51
      %p53 = scmp.ne.s32.totalorder %s42, %s45
      %p54 = scmp.eq.s32.totalorder %s23, 1
      %p55 = por %p53, %p54
      %p56 = scmp.ne.s32.totalorder %s45, %s46
      %p57 = scmp.eq.s32.totalorder %s23, 0
      %p58 = por %p56, %p57
      %p59 = scmp.ne.s32.totalorder %s45, %s46
      %p60 = scmp.eq.s32.totalorder %s24, 1
      %p61 = por %p59, %p60
      %p63 = scmp.ne.s32.totalorder %s46, %s62
      %p64 = scmp.eq.s32.totalorder %s24, 0
      %p65 = por %p63, %p64
      %s66 = sadd.s32 %s26, 1
      %s67 = sadd.s32 %s33, 1
      %s68 = ssub.s32 %s25, %s37
      %s69 = ssub.s32 %s66, %s67
      %s70 = sor.u32 %s68, %s69
      %p71 = scmp.eq.s32.totalorder %s70, 0
      %s73 = sadd.s32 %s72, 1
      %s74 = scalar_select %p71, %s72, %s73
      %p77 = pneg %p71
      %p78 = scmp.eq.s32.totalorder %s18, 1
      %p79 = por %p77, %p78
      %p80 = scmp.ne.s32.totalorder %s72, %s75
      %p81 = scmp.eq.s32.totalorder %s18, 0
      %p82 = por %p80, %p81
      %p83 = scmp.ne.s32.totalorder %s72, %s75
      %p84 = scmp.eq.s32.totalorder %s23, 1
      %p85 = por %p83, %p84
      %p86 = scmp.ne.s32.totalorder %s75, %s76
      %p87 = scmp.eq.s32.totalorder %s23, 0
      %p88 = por %p86, %p87
      %p89 = scmp.ne.s32.totalorder %s75, %s76
      %p90 = scmp.eq.s32.totalorder %s24, 1
      %p91 = por %p89, %p90
      %p93 = scmp.ne.s32.totalorder %s76, %s92
      %p94 = scmp.eq.s32.totalorder %s24, 0
      %p95 = por %p93, %p94
      %s97 = sadd.s32 %s96, 1
      %p100 = scmp.eq.s32.totalorder %s18, 1
      %p101 = scmp.ne.s32.totalorder %s96, %s98
      %p102 = scmp.eq.s32.totalorder %s18, 0
      %p103 = por %p101, %p102
      %p104 = scmp.ne.s32.totalorder %s96, %s98
      %p105 = scmp.eq.s32.totalorder %s23, 1
      %p106 = por %p104, %p105
      %p107 = scmp.ne.s32.totalorder %s98, %s99
      %p108 = scmp.eq.s32.totalorder %s23, 0
      %p109 = por %p107, %p108
      %p110 = scmp.ne.s32.totalorder %s98, %s99
      %p111 = scmp.eq.s32.totalorder %s24, 1
      %p112 = por %p110, %p111
      %p114 = scmp.ne.s32.totalorder %s99, %s113
      %p115 = scmp.eq.s32.totalorder %s24, 0
      %p116 = por %p114, %p115
      %s117 = ssub.s32 %s25, %s37
      %s118 = ssub.s32 %s26, %s33
      %s119 = sor.u32 %s117, %s118
      %p120 = scmp.eq.s32.totalorder %s119, 0
      %s122 = sadd.s32 %s121, 1
      %s123 = scalar_select %p120, %s121, %s122
      %p126 = pneg %p120
      %p127 = scmp.eq.s32.totalorder %s18, 1
      %p128 = por %p126, %p127
      %p129 = scmp.ne.s32.totalorder %s121, %s124
      %p130 = scmp.eq.s32.totalorder %s18, 0
      %p131 = por %p129, %p130
      %p132 = scmp.ne.s32.totalorder %s121, %s124
      %p133 = scmp.eq.s32.totalorder %s23, 1
      %p134 = por %p132, %p133
      %p135 = scmp.ne.s32.totalorder %s124, %s125
      %p136 = scmp.eq.s32.totalorder %s23, 0
      %p137 = por %p135, %p136
      %p138 = scmp.ne.s32.totalorder %s124, %s125
      %p139 = scmp.eq.s32.totalorder %s24, 1
      %p140 = por %p138, %p139
      %p142 = scmp.ne.s32.totalorder %s125, %s141
      %p143 = scmp.eq.s32.totalorder %s24, 0
      %p144 = por %p142, %p143
      %p145 = scmp.le.s32.totalorder 1, %s18
      %p146 = scmp.lt.s32.totalorder %s18, 3
      %p147 = pnand %p145, %p146
      %p148 = pneg %p147
      // Predicated region
      $region9: #{tpu_custom_call.1} parent=5 // pred_check
        _
      $region10: #{tpu_custom_call.1} parent=5 // pred_check_branch
        %150 = sbr.rel (%p147) target = $region12
      $region11: #{tpu_custom_call.1} parent=5 // pred_region
        %s151 = ssub.s32 %s18, 1
        // Predicated region
        $region13: #{tpu_custom_call.1} parent=11 // pred_check
          %p152 = pneg %p109
        $region14: #{tpu_custom_call.1} parent=11 // pred_check_branch
          %154 = sbr.rel (%p152) target = $region16
        $region15: #{tpu_custom_call.1} parent=11 // pred_region
          %156 = vsyncadd [#allocation6], 0
          %s157 = sshll.u32 %s2, 4
          %s158 = int_to_ptr.hbm [resolvable:$true] %s157
          %s159 = sshll.u32 [#allocation7], 4
          %s160 = int_to_ptr.vmem [resolvable:$true] %s159
          %165 = dma.hbm_to_vmem [thread:$0]  %s158, 65536, %s160, [#allocation6], 512, 512, 32
        $region16: #{tpu_custom_call.1} parent=11 // pred_fallthru
          _
      $region12: #{tpu_custom_call.1} parent=5 // pred_fallthru
        _
      %p166 = scmp.lt.s32.totalorder %s18, 2
      // Predicated region
      $region17: #{tpu_custom_call.1} parent=5 // pred_check
        %p167 = pneg %p166
      $region18: #{tpu_custom_call.1} parent=5 // pred_check_branch
        %169 = sbr.rel (%p167) target = $region20
      $region19: #{tpu_custom_call.1} parent=5 // pred_region
        // Predicated region
        $region21: #{tpu_custom_call.1} parent=19 // pred_check
          %p170 = pneg %p52
        $region22: #{tpu_custom_call.1} parent=19 // pred_check_branch
          %172 = sbr.rel (%p170) target = $region24
        $region23: #{tpu_custom_call.1} parent=19 // pred_region
          %s173 = sand.u32 %s42, 1
          %s174 = scalar_lea.sflag [#allocation3], %s173
          %s175 = sand.u32 %s42, 1
          %s176 = smul.addr %s175, 16
          %s177 = scalar_lea.vmem [#allocation2], %s176
          %s178 = smul.u32 2, %s26
          %180 = vsyncadd %s174, 0
          %s181 = smul.addr %s25, 4
          %s182 = sadd.s32 %s178, %s181
          %s183 = smul.addr %s182, 8
          %s184 = scalar_lea.hbm %s0, %s183
          %s185 = sshll.u32 %s184, 4
          %s186 = int_to_ptr.hbm [resolvable:$true] %s185
          %s187 = sshll.u32 %s177, 4
          %s188 = int_to_ptr.vmem [resolvable:$true] %s187
          %193 = dma.hbm_to_vmem [thread:$0]  %s186, 256, %s188, %s174, 128, 128, 8
        $region24: #{tpu_custom_call.1} parent=19 // pred_fallthru
          _
        // Predicated region
        $region25: #{tpu_custom_call.1} parent=19 // pred_check
          %p194 = pneg %p82
        $region26: #{tpu_custom_call.1} parent=19 // pred_check_branch
          %196 = sbr.rel (%p194) target = $region28
        $region27: #{tpu_custom_call.1} parent=19 // pred_region
          %s197 = sand.u32 %s18, 1
          %s198 = scalar_lea.sflag [#allocation6], %s197
          %s199 = sand.u32 %s72, 1
          %s200 = smul.addr %s199, 16
          %s201 = scalar_lea.vmem [#allocation5], %s200
          %s202 = sadd.s32 %s26, 1
          %s203 = smul.u32 2, %s202
          %205 = vsyncadd %s198, 0
          %s206 = smul.addr %s25, 4
          %s207 = sadd.s32 %s203, %s206
          %s208 = smul.addr %s207, 8
          %s209 = scalar_lea.hbm %s1, %s208
          %s210 = sshll.u32 %s209, 4
          %s211 = int_to_ptr.hbm [resolvable:$true] %s210
          %s212 = sshll.u32 %s201, 4
          %s213 = int_to_ptr.vmem [resolvable:$true] %s212
          %218 = dma.hbm_to_vmem [thread:$0]  %s211, 256, %s213, %s198, 128, 128, 8
        $region28: #{tpu_custom_call.1} parent=19 // pred_fallthru
          _
      $region20: #{tpu_custom_call.1} parent=5 // pred_fallthru
        _
      %p219 = scmp.le.s32.totalorder 1, %s18
      %p220 = scmp.lt.s32.totalorder %s18, 3
      %p221 = pnand %p219, %p220
      %p222 = pneg %p221
      // Predicated region
      $region29: #{tpu_custom_call.1} parent=5 // pred_check
        _
      $region30: #{tpu_custom_call.1} parent=5 // pred_check_branch
        %224 = sbr.rel (%p221) target = $region32
      $region31: #{tpu_custom_call.1} parent=5 // pred_region
        %s225 = ssub.s32 %s18, 1
        %s226 = sand.u32 %s45, 1
        %s227 = scalar_lea.sflag [#allocation3], %s226
        %s228 = sand.u32 %s45, 1
        %s229 = smul.addr %s228, 16
        %s230 = scalar_lea.vmem [#allocation2], %s229
        // Predicated region
        $region33: #{tpu_custom_call.1} parent=31 // pred_check
          %p231 = pneg %p58
        $region34: #{tpu_custom_call.1} parent=31 // pred_check_branch
          %233 = sbr.rel (%p231) target = $region36
        $region35: #{tpu_custom_call.1} parent=31 // pred_region
          %235 = dma.done %s227, 256
        $region36: #{tpu_custom_call.1} parent=31 // pred_fallthru
          _
        %s236 = sand.u32 %s23, 1
        %s237 = scalar_lea.sflag [#allocation6], %s236
        %s238 = sand.u32 %s75, 1
        %s239 = smul.addr %s238, 16
        %s240 = scalar_lea.vmem [#allocation5], %s239
        // Predicated region
        $region37: #{tpu_custom_call.1} parent=31 // pred_check
          %p241 = pneg %p88
        $region38: #{tpu_custom_call.1} parent=31 // pred_check_branch
          %243 = sbr.rel (%p241) target = $region40
        $region39: #{tpu_custom_call.1} parent=31 // pred_region
          %245 = dma.done %s237, 256
        $region40: #{tpu_custom_call.1} parent=31 // pred_fallthru
          _
        // Predicated region
        $region41: #{tpu_custom_call.1} parent=31 // pred_check
          %p246 = pneg %p109
        $region42: #{tpu_custom_call.1} parent=31 // pred_check_branch
          %248 = sbr.rel (%p246) target = $region44
        $region43: #{tpu_custom_call.1} parent=31 // pred_region
          %250 = dma.done [#allocation6], 65536
        $region44: #{tpu_custom_call.1} parent=31 // pred_fallthru
          _
        %s251 = sand.u32 %s45, 1
        %s252 = scalar_lea.sflag [#allocation3], %s251
        %s253 = sand.u32 %s45, 1
        %s254 = smul.addr %s253, 16
        %s255 = scalar_lea.vmem [#allocation2], %s254
        %p256 = pneg %p58
        %p257 = pneg %p55
        %s258 = sand.u32 %s23, 1
        %s259 = scalar_lea.sflag [#allocation6], %s258
        %s260 = sand.u32 %s75, 1
        %s261 = smul.addr %s260, 16
        %s262 = scalar_lea.vmem [#allocation5], %s261
        %p263 = pneg %p88
        %p264 = pneg %p85
        %p265 = pneg %p109
        %p266 = pneg %p106
        %p267 = pneg %p137
        %p268 = pneg %p134
        %s269 = sand.u32 %s124, 1
        %s270 = scalar_lea.sflag [#allocation4], %s269
        %s271 = sand.u32 %s124, 1
        %s272 = smul.addr %s271, 80
        %s273 = scalar_lea.vmem [#allocation8], %s272
        %s274 = smul.u32 2, %s28
        %s275 = sadd.s32 %s28, 1
        %s276 = smul.u32 2, %s275
        %s277 = smul.u32 2, %s28
        %v278 = vld [vmem:[%s230] sm:$0xff]
        %v279 = vld [vmem:[%s230 + $0x8] sm:$0xff]
        %v280 = vld [vmem:[%s240] sm:$0xff]
        %vm284 = vcmask 1046528
        %v285 = vrot.slane %v278, 1
        %v286 = vrot.slane %v279, 1
        %v287 = vsel %vm284, %v285, %v286
        %v288 = vrot.slane %v280, 1
        %v289 = vsel %vm284, %v286, %v288
        %vm292 = vcmask 1045504
        %v293 = vrot.slane %v278, 2
        %v294 = vrot.slane %v279, 2
        %v295 = vsel %vm292, %v293, %v294
        %v296 = vrot.slane %v280, 2
        %v297 = vsel %vm292, %v294, %v296
        %vm300 = vcmask 1044480
        %v301 = vrot.slane %v278, 3
        %v302 = vrot.slane %v279, 3
        %v303 = vsel %vm300, %v301, %v302
        %v304 = vrot.slane %v280, 3
        %v305 = vsel %vm300, %v302, %v304
        %vm308 = vcmask 1043456
        %v309 = vrot.slane %v278, 4
        %v310 = vrot.slane %v279, 4
        %v311 = vsel %vm308, %v309, %v310
        %v312 = vrot.slane %v280, 4
        %v313 = vsel %vm308, %v310, %v312
        %vm316 = vcmask 1042432
        %v317 = vrot.slane %v278, 5
        %v318 = vrot.slane %v279, 5
        %v319 = vsel %vm316, %v317, %v318
        %v320 = vrot.slane %v280, 5
        %v321 = vsel %vm316, %v318, %v320
        %vm324 = vcmask 1041408
        %v325 = vrot.slane %v278, 6
        %v326 = vrot.slane %v279, 6
        %v327 = vsel %vm324, %v325, %v326
        %v328 = vrot.slane %v280, 6
        %v329 = vsel %vm324, %v326, %v328
        %vm332 = vcmask 1040384
        %v333 = vrot.slane %v278, 7
        %v334 = vrot.slane %v279, 7
        %v335 = vsel %vm332, %v333, %v334
        %v336 = vrot.slane %v280, 7
        %v337 = vsel %vm332, %v334, %v336
        %v340 = vpack.c.bf16 %v279, %v278
        %v341 = vpack.c.bf16 %v289, %v287
        %v342 = vpack.c.bf16 %v297, %v295
        %v343 = vpack.c.bf16 %v305, %v303
        %v344 = vpack.c.bf16 %v313, %v311
        %v345 = vpack.c.bf16 %v321, %v319
        %v346 = vpack.c.bf16 %v329, %v327
        %v347 = vpack.c.bf16 %v337, %v335
        %v348 = vld [vmem:[#allocation7] sm:$0xff]
        %v349 = vld [vmem:[#allocation7 + $0x8] sm:$0xff]
        %v350 = vld [vmem:[#allocation7 + $0x10] sm:$0xff]
        %v351 = vld [vmem:[#allocation7 + $0x18] sm:$0xff]
        %v352 = vld [vmem:[#allocation7 + $0x20] sm:$0xff]
        %v353 = vld [vmem:[#allocation7 + $0x28] sm:$0xff]
        %v354 = vld [vmem:[#allocation7 + $0x30] sm:$0xff]
        %v355 = vld [vmem:[#allocation7 + $0x38] sm:$0xff]
        %v356 = vld [vmem:[#allocation7 + $0x40] sm:$0xff]
        %v357 = vld [vmem:[#allocation7 + $0x48] sm:$0xff]
        %v358 = vld [vmem:[#allocation7 + $0x50] sm:$0xff]
        %v359 = vld [vmem:[#allocation7 + $0x58] sm:$0xff]
        %v360 = vld [vmem:[#allocation7 + $0x60] sm:$0xff]
        %v361 = vld [vmem:[#allocation7 + $0x68] sm:$0xff]
        %v362 = vld [vmem:[#allocation7 + $0x70] sm:$0xff]
        %v363 = vld [vmem:[#allocation7 + $0x78] sm:$0xff]
        %v364 = vld [vmem:[#allocation7 + $0x80] sm:$0xff]
        %v365 = vld [vmem:[#allocation7 + $0x88] sm:$0xff]
        %v366 = vld [vmem:[#allocation7 + $0x90] sm:$0xff]
        %v367 = vld [vmem:[#allocation7 + $0x98] sm:$0xff]
        %v368 = vld [vmem:[#allocation7 + $0xa0] sm:$0xff]
        %v369 = vld [vmem:[#allocation7 + $0xa8] sm:$0xff]
        %v370 = vld [vmem:[#allocation7 + $0xb0] sm:$0xff]
        %v371 = vld [vmem:[#allocation7 + $0xb8] sm:$0xff]
        %v372 = vld [vmem:[#allocation7 + $0xc0] sm:$0xff]
        %v373 = vld [vmem:[#allocation7 + $0xc8] sm:$0xff]
        %v374 = vld [vmem:[#allocation7 + $0xd0] sm:$0xff]
        %v375 = vld [vmem:[#allocation7 + $0xd8] sm:$0xff]
        %v376 = vld [vmem:[#allocation7 + $0xe0] sm:$0xff]
        %v377 = vld [vmem:[#allocation7 + $0xe8] sm:$0xff]
        %v378 = vld [vmem:[#allocation7 + $0xf0] sm:$0xff]
        %v379 = vld [vmem:[#allocation7 + $0xf8] sm:$0xff]
        %v380 = vld [vmem:[#allocation7 + $0x100] sm:$0xff]
        %v381 = vld [vmem:[#allocation7 + $0x108] sm:$0xff]
        %v382 = vld [vmem:[#allocation7 + $0x110] sm:$0xff]
        %v383 = vld [vmem:[#allocation7 + $0x118] sm:$0xff]
        %v384 = vld [vmem:[#allocation7 + $0x120] sm:$0xff]
        %v385 = vld [vmem:[#allocation7 + $0x128] sm:$0xff]
        %v386 = vld [vmem:[#allocation7 + $0x130] sm:$0xff]
        %v387 = vld [vmem:[#allocation7 + $0x138] sm:$0xff]
        %v388 = vld [vmem:[#allocation7 + $0x140] sm:$0xff]
        %v389 = vld [vmem:[#allocation7 + $0x148] sm:$0xff]
        %v390 = vld [vmem:[#allocation7 + $0x150] sm:$0xff]
        %v391 = vld [vmem:[#allocation7 + $0x158] sm:$0xff]
        %v392 = vld [vmem:[#allocation7 + $0x160] sm:$0xff]
        %v393 = vld [vmem:[#allocation7 + $0x168] sm:$0xff]
        %v394 = vld [vmem:[#allocation7 + $0x170] sm:$0xff]
        %v395 = vld [vmem:[#allocation7 + $0x178] sm:$0xff]
        %v396 = vld [vmem:[#allocation7 + $0x180] sm:$0xff]
        %v397 = vld [vmem:[#allocation7 + $0x188] sm:$0xff]
        %v398 = vld [vmem:[#allocation7 + $0x190] sm:$0xff]
        %v399 = vld [vmem:[#allocation7 + $0x198] sm:$0xff]
        %v400 = vld [vmem:[#allocation7 + $0x1a0] sm:$0xff]
        %v401 = vld [vmem:[#allocation7 + $0x1a8] sm:$0xff]
        %v402 = vld [vmem:[#allocation7 + $0x1b0] sm:$0xff]
        %v403 = vld [vmem:[#allocation7 + $0x1b8] sm:$0xff]
        %v404 = vld [vmem:[#allocation7 + $0x1c0] sm:$0xff]
        %v405 = vld [vmem:[#allocation7 + $0x1c8] sm:$0xff]
        %v406 = vld [vmem:[#allocation7 + $0x1d0] sm:$0xff]
        %v407 = vld [vmem:[#allocation7 + $0x1d8] sm:$0xff]
        %v408 = vld [vmem:[#allocation7 + $0x1e0] sm:$0xff]
        %v409 = vld [vmem:[#allocation7 + $0x1e8] sm:$0xff]
        %v410 = vld [vmem:[#allocation7 + $0x1f0] sm:$0xff]
        %v411 = vld [vmem:[#allocation7 + $0x1f8] sm:$0xff]
        %v412 = vld [vmem:[#allocation7 + $0x200] sm:$0xff]
        %v413 = vld [vmem:[#allocation7 + $0x208] sm:$0xff]
        %v414 = vld [vmem:[#allocation7 + $0x210] sm:$0xff]
        %v415 = vld [vmem:[#allocation7 + $0x218] sm:$0xff]
        %v416 = vld [vmem:[#allocation7 + $0x220] sm:$0xff]
        %v417 = vld [vmem:[#allocation7 + $0x228] sm:$0xff]
        %v418 = vld [vmem:[#allocation7 + $0x230] sm:$0xff]
        %v419 = vld [vmem:[#allocation7 + $0x238] sm:$0xff]
        %v420 = vld [vmem:[#allocation7 + $0x240] sm:$0xff]
        %v421 = vld [vmem:[#allocation7 + $0x248] sm:$0xff]
        %v422 = vld [vmem:[#allocation7 + $0x250] sm:$0xff]
        %v423 = vld [vmem:[#allocation7 + $0x258] sm:$0xff]
        %v424 = vld [vmem:[#allocation7 + $0x260] sm:$0xff]
        %v425 = vld [vmem:[#allocation7 + $0x268] sm:$0xff]
        %v426 = vld [vmem:[#allocation7 + $0x270] sm:$0xff]
        %v427 = vld [vmem:[#allocation7 + $0x278] sm:$0xff]
        %v428 = vld [vmem:[#allocation7 + $0x280] sm:$0xff]
        %v429 = vld [vmem:[#allocation7 + $0x288] sm:$0xff]
        %v430 = vld [vmem:[#allocation7 + $0x290] sm:$0xff]
        %v431 = vld [vmem:[#allocation7 + $0x298] sm:$0xff]
        %v432 = vld [vmem:[#allocation7 + $0x2a0] sm:$0xff]
        %v433 = vld [vmem:[#allocation7 + $0x2a8] sm:$0xff]
        %v434 = vld [vmem:[#allocation7 + $0x2b0] sm:$0xff]
        %v435 = vld [vmem:[#allocation7 + $0x2b8] sm:$0xff]
        %v436 = vld [vmem:[#allocation7 + $0x2c0] sm:$0xff]
        %v437 = vld [vmem:[#allocation7 + $0x2c8] sm:$0xff]
        %v438 = vld [vmem:[#allocation7 + $0x2d0] sm:$0xff]
        %v439 = vld [vmem:[#allocation7 + $0x2d8] sm:$0xff]
        %v440 = vld [vmem:[#allocation7 + $0x2e0] sm:$0xff]
        %v441 = vld [vmem:[#allocation7 + $0x2e8] sm:$0xff]
        %v442 = vld [vmem:[#allocation7 + $0x2f0] sm:$0xff]
        %v443 = vld [vmem:[#allocation7 + $0x2f8] sm:$0xff]
        %v444 = vld [vmem:[#allocation7 + $0x300] sm:$0xff]
        %v445 = vld [vmem:[#allocation7 + $0x308] sm:$0xff]
        %v446 = vld [vmem:[#allocation7 + $0x310] sm:$0xff]
        %v447 = vld [vmem:[#allocation7 + $0x318] sm:$0xff]
        %v448 = vld [vmem:[#allocation7 + $0x320] sm:$0xff]
        %v449 = vld [vmem:[#allocation7 + $0x328] sm:$0xff]
        %v450 = vld [vmem:[#allocation7 + $0x330] sm:$0xff]
        %v451 = vld [vmem:[#allocation7 + $0x338] sm:$0xff]
        %v452 = vld [vmem:[#allocation7 + $0x340] sm:$0xff]
        %v453 = vld [vmem:[#allocation7 + $0x348] sm:$0xff]
        %v454 = vld [vmem:[#allocation7 + $0x350] sm:$0xff]
        %v455 = vld [vmem:[#allocation7 + $0x358] sm:$0xff]
        %v456 = vld [vmem:[#allocation7 + $0x360] sm:$0xff]
        %v457 = vld [vmem:[#allocation7 + $0x368] sm:$0xff]
        %v458 = vld [vmem:[#allocation7 + $0x370] sm:$0xff]
        %v459 = vld [vmem:[#allocation7 + $0x378] sm:$0xff]
        %v460 = vld [vmem:[#allocation7 + $0x380] sm:$0xff]
        %v461 = vld [vmem:[#allocation7 + $0x388] sm:$0xff]
        %v462 = vld [vmem:[#allocation7 + $0x390] sm:$0xff]
        %v463 = vld [vmem:[#allocation7 + $0x398] sm:$0xff]
        %v464 = vld [vmem:[#allocation7 + $0x3a0] sm:$0xff]
        %v465 = vld [vmem:[#allocation7 + $0x3a8] sm:$0xff]
        %v466 = vld [vmem:[#allocation7 + $0x3b0] sm:$0xff]
        %v467 = vld [vmem:[#allocation7 + $0x3b8] sm:$0xff]
        %v468 = vld [vmem:[#allocation7 + $0x3c0] sm:$0xff]
        %v469 = vld [vmem:[#allocation7 + $0x3c8] sm:$0xff]
        %v470 = vld [vmem:[#allocation7 + $0x3d0] sm:$0xff]
        %v471 = vld [vmem:[#allocation7 + $0x3d8] sm:$0xff]
        %v472 = vld [vmem:[#allocation7 + $0x3e0] sm:$0xff]
        %v473 = vld [vmem:[#allocation7 + $0x3e8] sm:$0xff]
        %v474 = vld [vmem:[#allocation7 + $0x3f0] sm:$0xff]
        %v475 = vld [vmem:[#allocation7 + $0x3f8] sm:$0xff]
        %v476 = vld [vmem:[#allocation7 + $0x400] sm:$0xff]
        %v477 = vld [vmem:[#allocation7 + $0x408] sm:$0xff]
        %v478 = vld [vmem:[#allocation7 + $0x410] sm:$0xff]
        %v479 = vld [vmem:[#allocation7 + $0x418] sm:$0xff]
        %v480 = vld [vmem:[#allocation7 + $0x420] sm:$0xff]
        %v481 = vld [vmem:[#allocation7 + $0x428] sm:$0xff]
        %v482 = vld [vmem:[#allocation7 + $0x430] sm:$0xff]
        %v483 = vld [vmem:[#allocation7 + $0x438] sm:$0xff]
        %v484 = vld [vmem:[#allocation7 + $0x440] sm:$0xff]
        %v485 = vld [vmem:[#allocation7 + $0x448] sm:$0xff]
        %v486 = vld [vmem:[#allocation7 + $0x450] sm:$0xff]
        %v487 = vld [vmem:[#allocation7 + $0x458] sm:$0xff]
        %v488 = vld [vmem:[#allocation7 + $0x460] sm:$0xff]
        %v489 = vld [vmem:[#allocation7 + $0x468] sm:$0xff]
        %v490 = vld [vmem:[#allocation7 + $0x470] sm:$0xff]
        %v491 = vld [vmem:[#allocation7 + $0x478] sm:$0xff]
        %v492 = vld [vmem:[#allocation7 + $0x480] sm:$0xff]
        %v493 = vld [vmem:[#allocation7 + $0x488] sm:$0xff]
        %v494 = vld [vmem:[#allocation7 + $0x490] sm:$0xff]
        %v495 = vld [vmem:[#allocation7 + $0x498] sm:$0xff]
        %v496 = vld [vmem:[#allocation7 + $0x4a0] sm:$0xff]
        %v497 = vld [vmem:[#allocation7 + $0x4a8] sm:$0xff]
        %v498 = vld [vmem:[#allocation7 + $0x4b0] sm:$0xff]
        %v499 = vld [vmem:[#allocation7 + $0x4b8] sm:$0xff]
        %v500 = vld [vmem:[#allocation7 + $0x4c0] sm:$0xff]
        %v501 = vld [vmem:[#allocation7 + $0x4c8] sm:$0xff]
        %v502 = vld [vmem:[#allocation7 + $0x4d0] sm:$0xff]
        %v503 = vld [vmem:[#allocation7 + $0x4d8] sm:$0xff]
        %v504 = vld [vmem:[#allocation7 + $0x4e0] sm:$0xff]
        %v505 = vld [vmem:[#allocation7 + $0x4e8] sm:$0xff]
        %v506 = vld [vmem:[#allocation7 + $0x4f0] sm:$0xff]
        %v507 = vld [vmem:[#allocation7 + $0x4f8] sm:$0xff]
        %v508 = vld [vmem:[#allocation7 + $0x500] sm:$0xff]
        %v509 = vld [vmem:[#allocation7 + $0x508] sm:$0xff]
        %v510 = vld [vmem:[#allocation7 + $0x510] sm:$0xff]
        %v511 = vld [vmem:[#allocation7 + $0x518] sm:$0xff]
        %v512 = vld [vmem:[#allocation7 + $0x520] sm:$0xff]
        %v513 = vld [vmem:[#allocation7 + $0x528] sm:$0xff]
        %v514 = vld [vmem:[#allocation7 + $0x530] sm:$0xff]
        %v515 = vld [vmem:[#allocation7 + $0x538] sm:$0xff]
        %v516 = vld [vmem:[#allocation7 + $0x540] sm:$0xff]
        %v517 = vld [vmem:[#allocation7 + $0x548] sm:$0xff]
        %v518 = vld [vmem:[#allocation7 + $0x550] sm:$0xff]
        %v519 = vld [vmem:[#allocation7 + $0x558] sm:$0xff]
        %v520 = vld [vmem:[#allocation7 + $0x560] sm:$0xff]
        %v521 = vld [vmem:[#allocation7 + $0x568] sm:$0xff]
        %v522 = vld [vmem:[#allocation7 + $0x570] sm:$0xff]
        %v523 = vld [vmem:[#allocation7 + $0x578] sm:$0xff]
        %v524 = vld [vmem:[#allocation7 + $0x580] sm:$0xff]
        %v525 = vld [vmem:[#allocation7 + $0x588] sm:$0xff]
        %v526 = vld [vmem:[#allocation7 + $0x590] sm:$0xff]
        %v527 = vld [vmem:[#allocation7 + $0x598] sm:$0xff]
        %v528 = vld [vmem:[#allocation7 + $0x5a0] sm:$0xff]
        %v529 = vld [vmem:[#allocation7 + $0x5a8] sm:$0xff]
        %v530 = vld [vmem:[#allocation7 + $0x5b0] sm:$0xff]
        %v531 = vld [vmem:[#allocation7 + $0x5b8] sm:$0xff]
        %v532 = vld [vmem:[#allocation7 + $0x5c0] sm:$0xff]
        %v533 = vld [vmem:[#allocation7 + $0x5c8] sm:$0xff]
        %v534 = vld [vmem:[#allocation7 + $0x5d0] sm:$0xff]
        %v535 = vld [vmem:[#allocation7 + $0x5d8] sm:$0xff]
        %v536 = vld [vmem:[#allocation7 + $0x5e0] sm:$0xff]
        %v537 = vld [vmem:[#allocation7 + $0x5e8] sm:$0xff]
        %v538 = vld [vmem:[#allocation7 + $0x5f0] sm:$0xff]
        %v539 = vld [vmem:[#allocation7 + $0x5f8] sm:$0xff]
        %v540 = vld [vmem:[#allocation7 + $0x600] sm:$0xff]
        %v541 = vld [vmem:[#allocation7 + $0x608] sm:$0xff]
        %v542 = vld [vmem:[#allocation7 + $0x610] sm:$0xff]
        %v543 = vld [vmem:[#allocation7 + $0x618] sm:$0xff]
        %v544 = vld [vmem:[#allocation7 + $0x620] sm:$0xff]
        %v545 = vld [vmem:[#allocation7 + $0x628] sm:$0xff]
        %v546 = vld [vmem:[#allocation7 + $0x630] sm:$0xff]
        %v547 = vld [vmem:[#allocation7 + $0x638] sm:$0xff]
        %v548 = vld [vmem:[#allocation7 + $0x640] sm:$0xff]
        %v549 = vld [vmem:[#allocation7 + $0x648] sm:$0xff]
        %v550 = vld [vmem:[#allocation7 + $0x650] sm:$0xff]
        %v551 = vld [vmem:[#allocation7 + $0x658] sm:$0xff]
        %v552 = vld [vmem:[#allocation7 + $0x660] sm:$0xff]
        %v553 = vld [vmem:[#allocation7 + $0x668] sm:$0xff]
        %v554 = vld [vmem:[#allocation7 + $0x670] sm:$0xff]
        %v555 = vld [vmem:[#allocation7 + $0x678] sm:$0xff]
        %v556 = vld [vmem:[#allocation7 + $0x680] sm:$0xff]
        %v557 = vld [vmem:[#allocation7 + $0x688] sm:$0xff]
        %v558 = vld [vmem:[#allocation7 + $0x690] sm:$0xff]
        %v559 = vld [vmem:[#allocation7 + $0x698] sm:$0xff]
        %v560 = vld [vmem:[#allocation7 + $0x6a0] sm:$0xff]
        %v561 = vld [vmem:[#allocation7 + $0x6a8] sm:$0xff]
        %v562 = vld [vmem:[#allocation7 + $0x6b0] sm:$0xff]
        %v563 = vld [vmem:[#allocation7 + $0x6b8] sm:$0xff]
        %v564 = vld [vmem:[#allocation7 + $0x6c0] sm:$0xff]
        %v565 = vld [vmem:[#allocation7 + $0x6c8] sm:$0xff]
        %v566 = vld [vmem:[#allocation7 + $0x6d0] sm:$0xff]
        %v567 = vld [vmem:[#allocation7 + $0x6d8] sm:$0xff]
        %v568 = vld [vmem:[#allocation7 + $0x6e0] sm:$0xff]
        %v569 = vld [vmem:[#allocation7 + $0x6e8] sm:$0xff]
        %v570 = vld [vmem:[#allocation7 + $0x6f0] sm:$0xff]
        %v571 = vld [vmem:[#allocation7 + $0x6f8] sm:$0xff]
        %v572 = vld [vmem:[#allocation7 + $0x700] sm:$0xff]
        %v573 = vld [vmem:[#allocation7 + $0x708] sm:$0xff]
        %v574 = vld [vmem:[#allocation7 + $0x710] sm:$0xff]
        %v575 = vld [vmem:[#allocation7 + $0x718] sm:$0xff]
        %v576 = vld [vmem:[#allocation7 + $0x720] sm:$0xff]
        %v577 = vld [vmem:[#allocation7 + $0x728] sm:$0xff]
        %v578 = vld [vmem:[#allocation7 + $0x730] sm:$0xff]
        %v579 = vld [vmem:[#allocation7 + $0x738] sm:$0xff]
        %v580 = vld [vmem:[#allocation7 + $0x740] sm:$0xff]
        %v581 = vld [vmem:[#allocation7 + $0x748] sm:$0xff]
        %v582 = vld [vmem:[#allocation7 + $0x750] sm:$0xff]
        %v583 = vld [vmem:[#allocation7 + $0x758] sm:$0xff]
        %v584 = vld [vmem:[#allocation7 + $0x760] sm:$0xff]
        %v585 = vld [vmem:[#allocation7 + $0x768] sm:$0xff]
        %v586 = vld [vmem:[#allocation7 + $0x770] sm:$0xff]
        %v587 = vld [vmem:[#allocation7 + $0x778] sm:$0xff]
        %v588 = vld [vmem:[#allocation7 + $0x780] sm:$0xff]
        %v589 = vld [vmem:[#allocation7 + $0x788] sm:$0xff]
        %v590 = vld [vmem:[#allocation7 + $0x790] sm:$0xff]
        %v591 = vld [vmem:[#allocation7 + $0x798] sm:$0xff]
        %v592 = vld [vmem:[#allocation7 + $0x7a0] sm:$0xff]
        %v593 = vld [vmem:[#allocation7 + $0x7a8] sm:$0xff]
        %v594 = vld [vmem:[#allocation7 + $0x7b0] sm:$0xff]
        %v595 = vld [vmem:[#allocation7 + $0x7b8] sm:$0xff]
        %v596 = vld [vmem:[#allocation7 + $0x7c0] sm:$0xff]
        %v597 = vld [vmem:[#allocation7 + $0x7c8] sm:$0xff]
        %v598 = vld [vmem:[#allocation7 + $0x7d0] sm:$0xff]
        %v599 = vld [vmem:[#allocation7 + $0x7d8] sm:$0xff]
        %v600 = vld [vmem:[#allocation7 + $0x7e0] sm:$0xff]
        %v601 = vld [vmem:[#allocation7 + $0x7e8] sm:$0xff]
        %v602 = vld [vmem:[#allocation7 + $0x7f0] sm:$0xff]
        %v603 = vld [vmem:[#allocation7 + $0x7f8] sm:$0xff]
        %v604 = vld [vmem:[#allocation7 + $0x800] sm:$0xff]
        %v605 = vld [vmem:[#allocation7 + $0x808] sm:$0xff]
        %v606 = vld [vmem:[#allocation7 + $0x810] sm:$0xff]
        %v607 = vld [vmem:[#allocation7 + $0x818] sm:$0xff]
        %v608 = vld [vmem:[#allocation7 + $0x820] sm:$0xff]
        %v609 = vld [vmem:[#allocation7 + $0x828] sm:$0xff]
        %v610 = vld [vmem:[#allocation7 + $0x830] sm:$0xff]
        %v611 = vld [vmem:[#allocation7 + $0x838] sm:$0xff]
        %v612 = vld [vmem:[#allocation7 + $0x840] sm:$0xff]
        %v613 = vld [vmem:[#allocation7 + $0x848] sm:$0xff]
        %v614 = vld [vmem:[#allocation7 + $0x850] sm:$0xff]
        %v615 = vld [vmem:[#allocation7 + $0x858] sm:$0xff]
        %v616 = vld [vmem:[#allocation7 + $0x860] sm:$0xff]
        %v617 = vld [vmem:[#allocation7 + $0x868] sm:$0xff]
        %v618 = vld [vmem:[#allocation7 + $0x870] sm:$0xff]
        %v619 = vld [vmem:[#allocation7 + $0x878] sm:$0xff]
        %v620 = vld [vmem:[#allocation7 + $0x880] sm:$0xff]
        %v621 = vld [vmem:[#allocation7 + $0x888] sm:$0xff]
        %v622 = vld [vmem:[#allocation7 + $0x890] sm:$0xff]
        %v623 = vld [vmem:[#allocation7 + $0x898] sm:$0xff]
        %v624 = vld [vmem:[#allocation7 + $0x8a0] sm:$0xff]
        %v625 = vld [vmem:[#allocation7 + $0x8a8] sm:$0xff]
        %v626 = vld [vmem:[#allocation7 + $0x8b0] sm:$0xff]
        %v627 = vld [vmem:[#allocation7 + $0x8b8] sm:$0xff]
        %v628 = vld [vmem:[#allocation7 + $0x8c0] sm:$0xff]
        %v629 = vld [vmem:[#allocation7 + $0x8c8] sm:$0xff]
        %v630 = vld [vmem:[#allocation7 + $0x8d0] sm:$0xff]
        %v631 = vld [vmem:[#allocation7 + $0x8d8] sm:$0xff]
        %v632 = vld [vmem:[#allocation7 + $0x8e0] sm:$0xff]
        %v633 = vld [vmem:[#allocation7 + $0x8e8] sm:$0xff]
        %v634 = vld [vmem:[#allocation7 + $0x8f0] sm:$0xff]
        %v635 = vld [vmem:[#allocation7 + $0x8f8] sm:$0xff]
        %v636 = vld [vmem:[#allocation7 + $0x900] sm:$0xff]
        %v637 = vld [vmem:[#allocation7 + $0x908] sm:$0xff]
        %v638 = vld [vmem:[#allocation7 + $0x910] sm:$0xff]
        %v639 = vld [vmem:[#allocation7 + $0x918] sm:$0xff]
        %v640 = vld [vmem:[#allocation7 + $0x920] sm:$0xff]
        %v641 = vld [vmem:[#allocation7 + $0x928] sm:$0xff]
        %v642 = vld [vmem:[#allocation7 + $0x930] sm:$0xff]
        %v643 = vld [vmem:[#allocation7 + $0x938] sm:$0xff]
        %v644 = vld [vmem:[#allocation7 + $0x940] sm:$0xff]
        %v645 = vld [vmem:[#allocation7 + $0x948] sm:$0xff]
        %v646 = vld [vmem:[#allocation7 + $0x950] sm:$0xff]
        %v647 = vld [vmem:[#allocation7 + $0x958] sm:$0xff]
        %v648 = vld [vmem:[#allocation7 + $0x960] sm:$0xff]
        %v649 = vld [vmem:[#allocation7 + $0x968] sm:$0xff]
        %v650 = vld [vmem:[#allocation7 + $0x970] sm:$0xff]
        %v651 = vld [vmem:[#allocation7 + $0x978] sm:$0xff]
        %v652 = vld [vmem:[#allocation7 + $0x980] sm:$0xff]
        %v653 = vld [vmem:[#allocation7 + $0x988] sm:$0xff]
        %v654 = vld [vmem:[#allocation7 + $0x990] sm:$0xff]
        %v655 = vld [vmem:[#allocation7 + $0x998] sm:$0xff]
        %v656 = vld [vmem:[#allocation7 + $0x9a0] sm:$0xff]
        %v657 = vld [vmem:[#allocation7 + $0x9a8] sm:$0xff]
        %v658 = vld [vmem:[#allocation7 + $0x9b0] sm:$0xff]
        %v659 = vld [vmem:[#allocation7 + $0x9b8] sm:$0xff]
        %v660 = vld [vmem:[#allocation7 + $0x9c0] sm:$0xff]
        %v661 = vld [vmem:[#allocation7 + $0x9c8] sm:$0xff]
        %v662 = vld [vmem:[#allocation7 + $0x9d0] sm:$0xff]
        %v663 = vld [vmem:[#allocation7 + $0x9d8] sm:$0xff]
        %v664 = vld [vmem:[#allocation7 + $0x9e0] sm:$0xff]
        %v665 = vld [vmem:[#allocation7 + $0x9e8] sm:$0xff]
        %v666 = vld [vmem:[#allocation7 + $0x9f0] sm:$0xff]
        %v667 = vld [vmem:[#allocation7 + $0x9f8] sm:$0xff]
        %v668 = vld [vmem:[#allocation7 + $0xa00] sm:$0xff]
        %v669 = vld [vmem:[#allocation7 + $0xa08] sm:$0xff]
        %v670 = vld [vmem:[#allocation7 + $0xa10] sm:$0xff]
        %v671 = vld [vmem:[#allocation7 + $0xa18] sm:$0xff]
        %v672 = vld [vmem:[#allocation7 + $0xa20] sm:$0xff]
        %v673 = vld [vmem:[#allocation7 + $0xa28] sm:$0xff]
        %v674 = vld [vmem:[#allocation7 + $0xa30] sm:$0xff]
        %v675 = vld [vmem:[#allocation7 + $0xa38] sm:$0xff]
        %v676 = vld [vmem:[#allocation7 + $0xa40] sm:$0xff]
        %v677 = vld [vmem:[#allocation7 + $0xa48] sm:$0xff]
        %v678 = vld [vmem:[#allocation7 + $0xa50] sm:$0xff]
        %v679 = vld [vmem:[#allocation7 + $0xa58] sm:$0xff]
        %v680 = vld [vmem:[#allocation7 + $0xa60] sm:$0xff]
        %v681 = vld [vmem:[#allocation7 + $0xa68] sm:$0xff]
        %v682 = vld [vmem:[#allocation7 + $0xa70] sm:$0xff]
        %v683 = vld [vmem:[#allocation7 + $0xa78] sm:$0xff]
        %v684 = vld [vmem:[#allocation7 + $0xa80] sm:$0xff]
        %v685 = vld [vmem:[#allocation7 + $0xa88] sm:$0xff]
        %v686 = vld [vmem:[#allocation7 + $0xa90] sm:$0xff]
        %v687 = vld [vmem:[#allocation7 + $0xa98] sm:$0xff]
        %v688 = vld [vmem:[#allocation7 + $0xaa0] sm:$0xff]
        %v689 = vld [vmem:[#allocation7 + $0xaa8] sm:$0xff]
        %v690 = vld [vmem:[#allocation7 + $0xab0] sm:$0xff]
        %v691 = vld [vmem:[#allocation7 + $0xab8] sm:$0xff]
        %v692 = vld [vmem:[#allocation7 + $0xac0] sm:$0xff]
        %v693 = vld [vmem:[#allocation7 + $0xac8] sm:$0xff]
        %v694 = vld [vmem:[#allocation7 + $0xad0] sm:$0xff]
        %v695 = vld [vmem:[#allocation7 + $0xad8] sm:$0xff]
        %v696 = vld [vmem:[#allocation7 + $0xae0] sm:$0xff]
        %v697 = vld [vmem:[#allocation7 + $0xae8] sm:$0xff]
        %v698 = vld [vmem:[#allocation7 + $0xaf0] sm:$0xff]
        %v699 = vld [vmem:[#allocation7 + $0xaf8] sm:$0xff]
        %v700 = vld [vmem:[#allocation7 + $0xb00] sm:$0xff]
        %v701 = vld [vmem:[#allocation7 + $0xb08] sm:$0xff]
        %v702 = vld [vmem:[#allocation7 + $0xb10] sm:$0xff]
        %v703 = vld [vmem:[#allocation7 + $0xb18] sm:$0xff]
        %v704 = vld [vmem:[#allocation7 + $0xb20] sm:$0xff]
        %v705 = vld [vmem:[#allocation7 + $0xb28] sm:$0xff]
        %v706 = vld [vmem:[#allocation7 + $0xb30] sm:$0xff]
        %v707 = vld [vmem:[#allocation7 + $0xb38] sm:$0xff]
        %v708 = vld [vmem:[#allocation7 + $0xb40] sm:$0xff]
        %v709 = vld [vmem:[#allocation7 + $0xb48] sm:$0xff]
        %v710 = vld [vmem:[#allocation7 + $0xb50] sm:$0xff]
        %v711 = vld [vmem:[#allocation7 + $0xb58] sm:$0xff]
        %v712 = vld [vmem:[#allocation7 + $0xb60] sm:$0xff]
        %v713 = vld [vmem:[#allocation7 + $0xb68] sm:$0xff]
        %v714 = vld [vmem:[#allocation7 + $0xb70] sm:$0xff]
        %v715 = vld [vmem:[#allocation7 + $0xb78] sm:$0xff]
        %v716 = vld [vmem:[#allocation7 + $0xb80] sm:$0xff]
        %v717 = vld [vmem:[#allocation7 + $0xb88] sm:$0xff]
        %v718 = vld [vmem:[#allocation7 + $0xb90] sm:$0xff]
        %v719 = vld [vmem:[#allocation7 + $0xb98] sm:$0xff]
        %v720 = vld [vmem:[#allocation7 + $0xba0] sm:$0xff]
        %v721 = vld [vmem:[#allocation7 + $0xba8] sm:$0xff]
        %v722 = vld [vmem:[#allocation7 + $0xbb0] sm:$0xff]
        %v723 = vld [vmem:[#allocation7 + $0xbb8] sm:$0xff]
        %v724 = vld [vmem:[#allocation7 + $0xbc0] sm:$0xff]
        %v725 = vld [vmem:[#allocation7 + $0xbc8] sm:$0xff]
        %v726 = vld [vmem:[#allocation7 + $0xbd0] sm:$0xff]
        %v727 = vld [vmem:[#allocation7 + $0xbd8] sm:$0xff]
        %v728 = vld [vmem:[#allocation7 + $0xbe0] sm:$0xff]
        %v729 = vld [vmem:[#allocation7 + $0xbe8] sm:$0xff]
        %v730 = vld [vmem:[#allocation7 + $0xbf0] sm:$0xff]
        %v731 = vld [vmem:[#allocation7 + $0xbf8] sm:$0xff]
        %v732 = vld [vmem:[#allocation7 + $0xc00] sm:$0xff]
        %v733 = vld [vmem:[#allocation7 + $0xc08] sm:$0xff]
        %v734 = vld [vmem:[#allocation7 + $0xc10] sm:$0xff]
        %v735 = vld [vmem:[#allocation7 + $0xc18] sm:$0xff]
        %v736 = vld [vmem:[#allocation7 + $0xc20] sm:$0xff]
        %v737 = vld [vmem:[#allocation7 + $0xc28] sm:$0xff]
        %v738 = vld [vmem:[#allocation7 + $0xc30] sm:$0xff]
        %v739 = vld [vmem:[#allocation7 + $0xc38] sm:$0xff]
        %v740 = vld [vmem:[#allocation7 + $0xc40] sm:$0xff]
        %v741 = vld [vmem:[#allocation7 + $0xc48] sm:$0xff]
        %v742 = vld [vmem:[#allocation7 + $0xc50] sm:$0xff]
        %v743 = vld [vmem:[#allocation7 + $0xc58] sm:$0xff]
        %v744 = vld [vmem:[#allocation7 + $0xc60] sm:$0xff]
        %v745 = vld [vmem:[#allocation7 + $0xc68] sm:$0xff]
        %v746 = vld [vmem:[#allocation7 + $0xc70] sm:$0xff]
        %v747 = vld [vmem:[#allocation7 + $0xc78] sm:$0xff]
        %v748 = vld [vmem:[#allocation7 + $0xc80] sm:$0xff]
        %v749 = vld [vmem:[#allocation7 + $0xc88] sm:$0xff]
        %v750 = vld [vmem:[#allocation7 + $0xc90] sm:$0xff]
        %v751 = vld [vmem:[#allocation7 + $0xc98] sm:$0xff]
        %v752 = vld [vmem:[#allocation7 + $0xca0] sm:$0xff]
        %v753 = vld [vmem:[#allocation7 + $0xca8] sm:$0xff]
        %v754 = vld [vmem:[#allocation7 + $0xcb0] sm:$0xff]
        %v755 = vld [vmem:[#allocation7 + $0xcb8] sm:$0xff]
        %v756 = vld [vmem:[#allocation7 + $0xcc0] sm:$0xff]
        %v757 = vld [vmem:[#allocation7 + $0xcc8] sm:$0xff]
        %v758 = vld [vmem:[#allocation7 + $0xcd0] sm:$0xff]
        %v759 = vld [vmem:[#allocation7 + $0xcd8] sm:$0xff]
        %v760 = vld [vmem:[#allocation7 + $0xce0] sm:$0xff]
        %v761 = vld [vmem:[#allocation7 + $0xce8] sm:$0xff]
        %v762 = vld [vmem:[#allocation7 + $0xcf0] sm:$0xff]
        %v763 = vld [vmem:[#allocation7 + $0xcf8] sm:$0xff]
        %v764 = vld [vmem:[#allocation7 + $0xd00] sm:$0xff]
        %v765 = vld [vmem:[#allocation7 + $0xd08] sm:$0xff]
        %v766 = vld [vmem:[#allocation7 + $0xd10] sm:$0xff]
        %v767 = vld [vmem:[#allocation7 + $0xd18] sm:$0xff]
        %v768 = vld [vmem:[#allocation7 + $0xd20] sm:$0xff]
        %v769 = vld [vmem:[#allocation7 + $0xd28] sm:$0xff]
        %v770 = vld [vmem:[#allocation7 + $0xd30] sm:$0xff]
        %v771 = vld [vmem:[#allocation7 + $0xd38] sm:$0xff]
        %v772 = vld [vmem:[#allocation7 + $0xd40] sm:$0xff]
        %v773 = vld [vmem:[#allocation7 + $0xd48] sm:$0xff]
        %v774 = vld [vmem:[#allocation7 + $0xd50] sm:$0xff]
        %v775 = vld [vmem:[#allocation7 + $0xd58] sm:$0xff]
        %v776 = vld [vmem:[#allocation7 + $0xd60] sm:$0xff]
        %v777 = vld [vmem:[#allocation7 + $0xd68] sm:$0xff]
        %v778 = vld [vmem:[#allocation7 + $0xd70] sm:$0xff]
        %v779 = vld [vmem:[#allocation7 + $0xd78] sm:$0xff]
        %v780 = vld [vmem:[#allocation7 + $0xd80] sm:$0xff]
        %v781 = vld [vmem:[#allocation7 + $0xd88] sm:$0xff]
        %v782 = vld [vmem:[#allocation7 + $0xd90] sm:$0xff]
        %v783 = vld [vmem:[#allocation7 + $0xd98] sm:$0xff]
        %v784 = vld [vmem:[#allocation7 + $0xda0] sm:$0xff]
        %v785 = vld [vmem:[#allocation7 + $0xda8] sm:$0xff]
        %v786 = vld [vmem:[#allocation7 + $0xdb0] sm:$0xff]
        %v787 = vld [vmem:[#allocation7 + $0xdb8] sm:$0xff]
        %v788 = vld [vmem:[#allocation7 + $0xdc0] sm:$0xff]
        %v789 = vld [vmem:[#allocation7 + $0xdc8] sm:$0xff]
        %v790 = vld [vmem:[#allocation7 + $0xdd0] sm:$0xff]
        %v791 = vld [vmem:[#allocation7 + $0xdd8] sm:$0xff]
        %v792 = vld [vmem:[#allocation7 + $0xde0] sm:$0xff]
        %v793 = vld [vmem:[#allocation7 + $0xde8] sm:$0xff]
        %v794 = vld [vmem:[#allocation7 + $0xdf0] sm:$0xff]
        %v795 = vld [vmem:[#allocation7 + $0xdf8] sm:$0xff]
        %v796 = vld [vmem:[#allocation7 + $0xe00] sm:$0xff]
        %v797 = vld [vmem:[#allocation7 + $0xe08] sm:$0xff]
        %v798 = vld [vmem:[#allocation7 + $0xe10] sm:$0xff]
        %v799 = vld [vmem:[#allocation7 + $0xe18] sm:$0xff]
        %v800 = vld [vmem:[#allocation7 + $0xe20] sm:$0xff]
        %v801 = vld [vmem:[#allocation7 + $0xe28] sm:$0xff]
        %v802 = vld [vmem:[#allocation7 + $0xe30] sm:$0xff]
        %v803 = vld [vmem:[#allocation7 + $0xe38] sm:$0xff]
        %v804 = vld [vmem:[#allocation7 + $0xe40] sm:$0xff]
        %v805 = vld [vmem:[#allocation7 + $0xe48] sm:$0xff]
        %v806 = vld [vmem:[#allocation7 + $0xe50] sm:$0xff]
        %v807 = vld [vmem:[#allocation7 + $0xe58] sm:$0xff]
        %v808 = vld [vmem:[#allocation7 + $0xe60] sm:$0xff]
        %v809 = vld [vmem:[#allocation7 + $0xe68] sm:$0xff]
        %v810 = vld [vmem:[#allocation7 + $0xe70] sm:$0xff]
        %v811 = vld [vmem:[#allocation7 + $0xe78] sm:$0xff]
        %v812 = vld [vmem:[#allocation7 + $0xe80] sm:$0xff]
        %v813 = vld [vmem:[#allocation7 + $0xe88] sm:$0xff]
        %v814 = vld [vmem:[#allocation7 + $0xe90] sm:$0xff]
        %v815 = vld [vmem:[#allocation7 + $0xe98] sm:$0xff]
        %v816 = vld [vmem:[#allocation7 + $0xea0] sm:$0xff]
        %v817 = vld [vmem:[#allocation7 + $0xea8] sm:$0xff]
        %v818 = vld [vmem:[#allocation7 + $0xeb0] sm:$0xff]
        %v819 = vld [vmem:[#allocation7 + $0xeb8] sm:$0xff]
        %v820 = vld [vmem:[#allocation7 + $0xec0] sm:$0xff]
        %v821 = vld [vmem:[#allocation7 + $0xec8] sm:$0xff]
        %v822 = vld [vmem:[#allocation7 + $0xed0] sm:$0xff]
        %v823 = vld [vmem:[#allocation7 + $0xed8] sm:$0xff]
        %v824 = vld [vmem:[#allocation7 + $0xee0] sm:$0xff]
        %v825 = vld [vmem:[#allocation7 + $0xee8] sm:$0xff]
        %v826 = vld [vmem:[#allocation7 + $0xef0] sm:$0xff]
        %v827 = vld [vmem:[#allocation7 + $0xef8] sm:$0xff]
        %v828 = vld [vmem:[#allocation7 + $0xf00] sm:$0xff]
        %v829 = vld [vmem:[#allocation7 + $0xf08] sm:$0xff]
        %v830 = vld [vmem:[#allocation7 + $0xf10] sm:$0xff]
        %v831 = vld [vmem:[#allocation7 + $0xf18] sm:$0xff]
        %v832 = vld [vmem:[#allocation7 + $0xf20] sm:$0xff]
        %v833 = vld [vmem:[#allocation7 + $0xf28] sm:$0xff]
        %v834 = vld [vmem:[#allocation7 + $0xf30] sm:$0xff]
        %v835 = vld [vmem:[#allocation7 + $0xf38] sm:$0xff]
        %v836 = vld [vmem:[#allocation7 + $0xf40] sm:$0xff]
        %v837 = vld [vmem:[#allocation7 + $0xf48] sm:$0xff]
        %v838 = vld [vmem:[#allocation7 + $0xf50] sm:$0xff]
        %v839 = vld [vmem:[#allocation7 + $0xf58] sm:$0xff]
        %v840 = vld [vmem:[#allocation7 + $0xf60] sm:$0xff]
        %v841 = vld [vmem:[#allocation7 + $0xf68] sm:$0xff]
        %v842 = vld [vmem:[#allocation7 + $0xf70] sm:$0xff]
        %v843 = vld [vmem:[#allocation7 + $0xf78] sm:$0xff]
        %v844 = vld [vmem:[#allocation7 + $0xf80] sm:$0xff]
        %v845 = vld [vmem:[#allocation7 + $0xf88] sm:$0xff]
        %v846 = vld [vmem:[#allocation7 + $0xf90] sm:$0xff]
        %v847 = vld [vmem:[#allocation7 + $0xf98] sm:$0xff]
        %v848 = vld [vmem:[#allocation7 + $0xfa0] sm:$0xff]
        %v849 = vld [vmem:[#allocation7 + $0xfa8] sm:$0xff]
        %v850 = vld [vmem:[#allocation7 + $0xfb0] sm:$0xff]
        %v851 = vld [vmem:[#allocation7 + $0xfb8] sm:$0xff]
        %v852 = vld [vmem:[#allocation7 + $0xfc0] sm:$0xff]
        %v853 = vld [vmem:[#allocation7 + $0xfc8] sm:$0xff]
        %v854 = vld [vmem:[#allocation7 + $0xfd0] sm:$0xff]
        %v855 = vld [vmem:[#allocation7 + $0xfd8] sm:$0xff]
        %v856 = vld [vmem:[#allocation7 + $0xfe0] sm:$0xff]
        %v857 = vld [vmem:[#allocation7 + $0xfe8] sm:$0xff]
        %v858 = vld [vmem:[#allocation7 + $0xff0] sm:$0xff]
        %v859 = vld [vmem:[#allocation7 + $0xff8] sm:$0xff]
        %v1372 = vunpack.c.l.b16 %v348
        %v1373 = vunpack.c.h.b16 %v348
        %v1374 = vunpack.c.l.b16 %v349
        %v1375 = vunpack.c.h.b16 %v349
        %v1376 = vunpack.c.l.b16 %v350
        %v1377 = vunpack.c.h.b16 %v350
        %v1378 = vunpack.c.l.b16 %v351
        %v1379 = vunpack.c.h.b16 %v351
        %v1380 = vunpack.c.l.b16 %v352
        %v1381 = vunpack.c.h.b16 %v352
        %v1382 = vunpack.c.l.b16 %v353
        %v1383 = vunpack.c.h.b16 %v353
        %v1384 = vunpack.c.l.b16 %v354
        %v1385 = vunpack.c.h.b16 %v354
        %v1386 = vunpack.c.l.b16 %v355
        %v1387 = vunpack.c.h.b16 %v355
        %v1388 = vunpack.c.l.b16 %v356
        %v1389 = vunpack.c.h.b16 %v356
        %v1390 = vunpack.c.l.b16 %v357
        %v1391 = vunpack.c.h.b16 %v357
        %v1392 = vunpack.c.l.b16 %v358
        %v1393 = vunpack.c.h.b16 %v358
        %v1394 = vunpack.c.l.b16 %v359
        %v1395 = vunpack.c.h.b16 %v359
        %v1396 = vunpack.c.l.b16 %v360
        %v1397 = vunpack.c.h.b16 %v360
        %v1398 = vunpack.c.l.b16 %v361
        %v1399 = vunpack.c.h.b16 %v361
        %v1400 = vunpack.c.l.b16 %v362
        %v1401 = vunpack.c.h.b16 %v362
        %v1402 = vunpack.c.l.b16 %v363
        %v1403 = vunpack.c.h.b16 %v363
        %v1404 = vunpack.c.l.b16 %v364
        %v1405 = vunpack.c.h.b16 %v364
        %v1406 = vunpack.c.l.b16 %v365
        %v1407 = vunpack.c.h.b16 %v365
        %v1408 = vunpack.c.l.b16 %v366
        %v1409 = vunpack.c.h.b16 %v366
        %v1410 = vunpack.c.l.b16 %v367
        %v1411 = vunpack.c.h.b16 %v367
        %v1412 = vunpack.c.l.b16 %v368
        %v1413 = vunpack.c.h.b16 %v368
        %v1414 = vunpack.c.l.b16 %v369
        %v1415 = vunpack.c.h.b16 %v369
        %v1416 = vunpack.c.l.b16 %v370
        %v1417 = vunpack.c.h.b16 %v370
        %v1418 = vunpack.c.l.b16 %v371
        %v1419 = vunpack.c.h.b16 %v371
        %v1420 = vunpack.c.l.b16 %v372
        %v1421 = vunpack.c.h.b16 %v372
        %v1422 = vunpack.c.l.b16 %v373
        %v1423 = vunpack.c.h.b16 %v373
        %v1424 = vunpack.c.l.b16 %v374
        %v1425 = vunpack.c.h.b16 %v374
        %v1426 = vunpack.c.l.b16 %v375
        %v1427 = vunpack.c.h.b16 %v375
        %v1428 = vunpack.c.l.b16 %v376
        %v1429 = vunpack.c.h.b16 %v376
        %v1430 = vunpack.c.l.b16 %v377
        %v1431 = vunpack.c.h.b16 %v377
        %v1432 = vunpack.c.l.b16 %v378
        %v1433 = vunpack.c.h.b16 %v378
        %v1434 = vunpack.c.l.b16 %v379
        %v1435 = vunpack.c.h.b16 %v379
        %v1436 = vunpack.c.l.b16 %v380
        %v1437 = vunpack.c.h.b16 %v380
        %v1438 = vunpack.c.l.b16 %v381
        %v1439 = vunpack.c.h.b16 %v381
        %v1440 = vunpack.c.l.b16 %v382
        %v1441 = vunpack.c.h.b16 %v382
        %v1442 = vunpack.c.l.b16 %v383
        %v1443 = vunpack.c.h.b16 %v383
        %v1444 = vunpack.c.l.b16 %v384
        %v1445 = vunpack.c.h.b16 %v384
        %v1446 = vunpack.c.l.b16 %v385
        %v1447 = vunpack.c.h.b16 %v385
        %v1448 = vunpack.c.l.b16 %v386
        %v1449 = vunpack.c.h.b16 %v386
        %v1450 = vunpack.c.l.b16 %v387
        %v1451 = vunpack.c.h.b16 %v387
        %v1452 = vunpack.c.l.b16 %v388
        %v1453 = vunpack.c.h.b16 %v388
        %v1454 = vunpack.c.l.b16 %v389
        %v1455 = vunpack.c.h.b16 %v389
        %v1456 = vunpack.c.l.b16 %v390
        %v1457 = vunpack.c.h.b16 %v390
        %v1458 = vunpack.c.l.b16 %v391
        %v1459 = vunpack.c.h.b16 %v391
        %v1460 = vunpack.c.l.b16 %v392
        %v1461 = vunpack.c.h.b16 %v392
        %v1462 = vunpack.c.l.b16 %v393
        %v1463 = vunpack.c.h.b16 %v393
        %v1464 = vunpack.c.l.b16 %v394
        %v1465 = vunpack.c.h.b16 %v394
        %v1466 = vunpack.c.l.b16 %v395
        %v1467 = vunpack.c.h.b16 %v395
        %v1468 = vunpack.c.l.b16 %v396
        %v1469 = vunpack.c.h.b16 %v396
        %v1470 = vunpack.c.l.b16 %v397
        %v1471 = vunpack.c.h.b16 %v397
        %v1472 = vunpack.c.l.b16 %v398
        %v1473 = vunpack.c.h.b16 %v398
        %v1474 = vunpack.c.l.b16 %v399
        %v1475 = vunpack.c.h.b16 %v399
        %v1476 = vunpack.c.l.b16 %v400
        %v1477 = vunpack.c.h.b16 %v400
        %v1478 = vunpack.c.l.b16 %v401
        %v1479 = vunpack.c.h.b16 %v401
        %v1480 = vunpack.c.l.b16 %v402
        %v1481 = vunpack.c.h.b16 %v402
        %v1482 = vunpack.c.l.b16 %v403
        %v1483 = vunpack.c.h.b16 %v403
        %v1484 = vunpack.c.l.b16 %v404
        %v1485 = vunpack.c.h.b16 %v404
        %v1486 = vunpack.c.l.b16 %v405
        %v1487 = vunpack.c.h.b16 %v405
        %v1488 = vunpack.c.l.b16 %v406
        %v1489 = vunpack.c.h.b16 %v406
        %v1490 = vunpack.c.l.b16 %v407
        %v1491 = vunpack.c.h.b16 %v407
        %v1492 = vunpack.c.l.b16 %v408
        %v1493 = vunpack.c.h.b16 %v408
        %v1494 = vunpack.c.l.b16 %v409
        %v1495 = vunpack.c.h.b16 %v409
        %v1496 = vunpack.c.l.b16 %v410
        %v1497 = vunpack.c.h.b16 %v410
        %v1498 = vunpack.c.l.b16 %v411
        %v1499 = vunpack.c.h.b16 %v411
        %v1500 = vunpack.c.l.b16 %v412
        %v1501 = vunpack.c.h.b16 %v412
        %v1502 = vunpack.c.l.b16 %v413
        %v1503 = vunpack.c.h.b16 %v413
        %v1504 = vunpack.c.l.b16 %v414
        %v1505 = vunpack.c.h.b16 %v414
        %v1506 = vunpack.c.l.b16 %v415
        %v1507 = vunpack.c.h.b16 %v415
        %v1508 = vunpack.c.l.b16 %v416
        %v1509 = vunpack.c.h.b16 %v416
        %v1510 = vunpack.c.l.b16 %v417
        %v1511 = vunpack.c.h.b16 %v417
        %v1512 = vunpack.c.l.b16 %v418
        %v1513 = vunpack.c.h.b16 %v418
        %v1514 = vunpack.c.l.b16 %v419
        %v1515 = vunpack.c.h.b16 %v419
        %v1516 = vunpack.c.l.b16 %v420
        %v1517 = vunpack.c.h.b16 %v420
        %v1518 = vunpack.c.l.b16 %v421
        %v1519 = vunpack.c.h.b16 %v421
        %v1520 = vunpack.c.l.b16 %v422
        %v1521 = vunpack.c.h.b16 %v422
        %v1522 = vunpack.c.l.b16 %v423
        %v1523 = vunpack.c.h.b16 %v423
        %v1524 = vunpack.c.l.b16 %v424
        %v1525 = vunpack.c.h.b16 %v424
        %v1526 = vunpack.c.l.b16 %v425
        %v1527 = vunpack.c.h.b16 %v425
        %v1528 = vunpack.c.l.b16 %v426
        %v1529 = vunpack.c.h.b16 %v426
        %v1530 = vunpack.c.l.b16 %v427
        %v1531 = vunpack.c.h.b16 %v427
        %v1532 = vunpack.c.l.b16 %v428
        %v1533 = vunpack.c.h.b16 %v428
        %v1534 = vunpack.c.l.b16 %v429
        %v1535 = vunpack.c.h.b16 %v429
        %v1536 = vunpack.c.l.b16 %v430
        %v1537 = vunpack.c.h.b16 %v430
        %v1538 = vunpack.c.l.b16 %v431
        %v1539 = vunpack.c.h.b16 %v431
        %v1540 = vunpack.c.l.b16 %v432
        %v1541 = vunpack.c.h.b16 %v432
        %v1542 = vunpack.c.l.b16 %v433
        %v1543 = vunpack.c.h.b16 %v433
        %v1544 = vunpack.c.l.b16 %v434
        %v1545 = vunpack.c.h.b16 %v434
        %v1546 = vunpack.c.l.b16 %v435
        %v1547 = vunpack.c.h.b16 %v435
        %v1548 = vunpack.c.l.b16 %v436
        %v1549 = vunpack.c.h.b16 %v436
        %v1550 = vunpack.c.l.b16 %v437
        %v1551 = vunpack.c.h.b16 %v437
        %v1552 = vunpack.c.l.b16 %v438
        %v1553 = vunpack.c.h.b16 %v438
        %v1554 = vunpack.c.l.b16 %v439
        %v1555 = vunpack.c.h.b16 %v439
        %v1556 = vunpack.c.l.b16 %v440
        %v1557 = vunpack.c.h.b16 %v440
        %v1558 = vunpack.c.l.b16 %v441
        %v1559 = vunpack.c.h.b16 %v441
        %v1560 = vunpack.c.l.b16 %v442
        %v1561 = vunpack.c.h.b16 %v442
        %v1562 = vunpack.c.l.b16 %v443
        %v1563 = vunpack.c.h.b16 %v443
        %v1564 = vunpack.c.l.b16 %v444
        %v1565 = vunpack.c.h.b16 %v444
        %v1566 = vunpack.c.l.b16 %v445
        %v1567 = vunpack.c.h.b16 %v445
        %v1568 = vunpack.c.l.b16 %v446
        %v1569 = vunpack.c.h.b16 %v446
        %v1570 = vunpack.c.l.b16 %v447
        %v1571 = vunpack.c.h.b16 %v447
        %v1572 = vunpack.c.l.b16 %v448
        %v1573 = vunpack.c.h.b16 %v448
        %v1574 = vunpack.c.l.b16 %v449
        %v1575 = vunpack.c.h.b16 %v449
        %v1576 = vunpack.c.l.b16 %v450
        %v1577 = vunpack.c.h.b16 %v450
        %v1578 = vunpack.c.l.b16 %v451
        %v1579 = vunpack.c.h.b16 %v451
        %v1580 = vunpack.c.l.b16 %v452
        %v1581 = vunpack.c.h.b16 %v452
        %v1582 = vunpack.c.l.b16 %v453
        %v1583 = vunpack.c.h.b16 %v453
        %v1584 = vunpack.c.l.b16 %v454
        %v1585 = vunpack.c.h.b16 %v454
        %v1586 = vunpack.c.l.b16 %v455
        %v1587 = vunpack.c.h.b16 %v455
        %v1588 = vunpack.c.l.b16 %v456
        %v1589 = vunpack.c.h.b16 %v456
        %v1590 = vunpack.c.l.b16 %v457
        %v1591 = vunpack.c.h.b16 %v457
        %v1592 = vunpack.c.l.b16 %v458
        %v1593 = vunpack.c.h.b16 %v458
        %v1594 = vunpack.c.l.b16 %v459
        %v1595 = vunpack.c.h.b16 %v459
        %v1596 = vunpack.c.l.b16 %v460
        %v1597 = vunpack.c.h.b16 %v460
        %v1598 = vunpack.c.l.b16 %v461
        %v1599 = vunpack.c.h.b16 %v461
        %v1600 = vunpack.c.l.b16 %v462
        %v1601 = vunpack.c.h.b16 %v462
        %v1602 = vunpack.c.l.b16 %v463
        %v1603 = vunpack.c.h.b16 %v463
        %v1604 = vunpack.c.l.b16 %v464
        %v1605 = vunpack.c.h.b16 %v464
        %v1606 = vunpack.c.l.b16 %v465
        %v1607 = vunpack.c.h.b16 %v465
        %v1608 = vunpack.c.l.b16 %v466
        %v1609 = vunpack.c.h.b16 %v466
        %v1610 = vunpack.c.l.b16 %v467
        %v1611 = vunpack.c.h.b16 %v467
        %v1612 = vunpack.c.l.b16 %v468
        %v1613 = vunpack.c.h.b16 %v468
        %v1614 = vunpack.c.l.b16 %v469
        %v1615 = vunpack.c.h.b16 %v469
        %v1616 = vunpack.c.l.b16 %v470
        %v1617 = vunpack.c.h.b16 %v470
        %v1618 = vunpack.c.l.b16 %v471
        %v1619 = vunpack.c.h.b16 %v471
        %v1620 = vunpack.c.l.b16 %v472
        %v1621 = vunpack.c.h.b16 %v472
        %v1622 = vunpack.c.l.b16 %v473
        %v1623 = vunpack.c.h.b16 %v473
        %v1624 = vunpack.c.l.b16 %v474
        %v1625 = vunpack.c.h.b16 %v474
        %v1626 = vunpack.c.l.b16 %v475
        %v1627 = vunpack.c.h.b16 %v475
        %v1628 = vunpack.c.l.b16 %v476
        %v1629 = vunpack.c.h.b16 %v476
        %v1630 = vunpack.c.l.b16 %v477
        %v1631 = vunpack.c.h.b16 %v477
        %v1632 = vunpack.c.l.b16 %v478
        %v1633 = vunpack.c.h.b16 %v478
        %v1634 = vunpack.c.l.b16 %v479
        %v1635 = vunpack.c.h.b16 %v479
        %v1636 = vunpack.c.l.b16 %v480
        %v1637 = vunpack.c.h.b16 %v480
        %v1638 = vunpack.c.l.b16 %v481
        %v1639 = vunpack.c.h.b16 %v481
        %v1640 = vunpack.c.l.b16 %v482
        %v1641 = vunpack.c.h.b16 %v482
        %v1642 = vunpack.c.l.b16 %v483
        %v1643 = vunpack.c.h.b16 %v483
        %v1644 = vunpack.c.l.b16 %v484
        %v1645 = vunpack.c.h.b16 %v484
        %v1646 = vunpack.c.l.b16 %v485
        %v1647 = vunpack.c.h.b16 %v485
        %v1648 = vunpack.c.l.b16 %v486
        %v1649 = vunpack.c.h.b16 %v486
        %v1650 = vunpack.c.l.b16 %v487
        %v1651 = vunpack.c.h.b16 %v487
        %v1652 = vunpack.c.l.b16 %v488
        %v1653 = vunpack.c.h.b16 %v488
        %v1654 = vunpack.c.l.b16 %v489
        %v1655 = vunpack.c.h.b16 %v489
        %v1656 = vunpack.c.l.b16 %v490
        %v1657 = vunpack.c.h.b16 %v490
        %v1658 = vunpack.c.l.b16 %v491
        %v1659 = vunpack.c.h.b16 %v491
        %v1660 = vunpack.c.l.b16 %v492
        %v1661 = vunpack.c.h.b16 %v492
        %v1662 = vunpack.c.l.b16 %v493
        %v1663 = vunpack.c.h.b16 %v493
        %v1664 = vunpack.c.l.b16 %v494
        %v1665 = vunpack.c.h.b16 %v494
        %v1666 = vunpack.c.l.b16 %v495
        %v1667 = vunpack.c.h.b16 %v495
        %v1668 = vunpack.c.l.b16 %v496
        %v1669 = vunpack.c.h.b16 %v496
        %v1670 = vunpack.c.l.b16 %v497
        %v1671 = vunpack.c.h.b16 %v497
        %v1672 = vunpack.c.l.b16 %v498
        %v1673 = vunpack.c.h.b16 %v498
        %v1674 = vunpack.c.l.b16 %v499
        %v1675 = vunpack.c.h.b16 %v499
        %v1676 = vunpack.c.l.b16 %v500
        %v1677 = vunpack.c.h.b16 %v500
        %v1678 = vunpack.c.l.b16 %v501
        %v1679 = vunpack.c.h.b16 %v501
        %v1680 = vunpack.c.l.b16 %v502
        %v1681 = vunpack.c.h.b16 %v502
        %v1682 = vunpack.c.l.b16 %v503
        %v1683 = vunpack.c.h.b16 %v503
        %v1684 = vunpack.c.l.b16 %v504
        %v1685 = vunpack.c.h.b16 %v504
        %v1686 = vunpack.c.l.b16 %v505
        %v1687 = vunpack.c.h.b16 %v505
        %v1688 = vunpack.c.l.b16 %v506
        %v1689 = vunpack.c.h.b16 %v506
        %v1690 = vunpack.c.l.b16 %v507
        %v1691 = vunpack.c.h.b16 %v507
        %v1692 = vunpack.c.l.b16 %v508
        %v1693 = vunpack.c.h.b16 %v508
        %v1694 = vunpack.c.l.b16 %v509
        %v1695 = vunpack.c.h.b16 %v509
        %v1696 = vunpack.c.l.b16 %v510
        %v1697 = vunpack.c.h.b16 %v510
        %v1698 = vunpack.c.l.b16 %v511
        %v1699 = vunpack.c.h.b16 %v511
        %v1700 = vunpack.c.l.b16 %v512
        %v1701 = vunpack.c.h.b16 %v512
        %v1702 = vunpack.c.l.b16 %v513
        %v1703 = vunpack.c.h.b16 %v513
        %v1704 = vunpack.c.l.b16 %v514
        %v1705 = vunpack.c.h.b16 %v514
        %v1706 = vunpack.c.l.b16 %v515
        %v1707 = vunpack.c.h.b16 %v515
        %v1708 = vunpack.c.l.b16 %v516
        %v1709 = vunpack.c.h.b16 %v516
        %v1710 = vunpack.c.l.b16 %v517
        %v1711 = vunpack.c.h.b16 %v517
        %v1712 = vunpack.c.l.b16 %v518
        %v1713 = vunpack.c.h.b16 %v518
        %v1714 = vunpack.c.l.b16 %v519
        %v1715 = vunpack.c.h.b16 %v519
        %v1716 = vunpack.c.l.b16 %v520
        %v1717 = vunpack.c.h.b16 %v520
        %v1718 = vunpack.c.l.b16 %v521
        %v1719 = vunpack.c.h.b16 %v521
        %v1720 = vunpack.c.l.b16 %v522
        %v1721 = vunpack.c.h.b16 %v522
        %v1722 = vunpack.c.l.b16 %v523
        %v1723 = vunpack.c.h.b16 %v523
        %v1724 = vunpack.c.l.b16 %v524
        %v1725 = vunpack.c.h.b16 %v524
        %v1726 = vunpack.c.l.b16 %v525
        %v1727 = vunpack.c.h.b16 %v525
        %v1728 = vunpack.c.l.b16 %v526
        %v1729 = vunpack.c.h.b16 %v526
        %v1730 = vunpack.c.l.b16 %v527
        %v1731 = vunpack.c.h.b16 %v527
        %v1732 = vunpack.c.l.b16 %v528
        %v1733 = vunpack.c.h.b16 %v528
        %v1734 = vunpack.c.l.b16 %v529
        %v1735 = vunpack.c.h.b16 %v529
        %v1736 = vunpack.c.l.b16 %v530
        %v1737 = vunpack.c.h.b16 %v530
        %v1738 = vunpack.c.l.b16 %v531
        %v1739 = vunpack.c.h.b16 %v531
        %v1740 = vunpack.c.l.b16 %v532
        %v1741 = vunpack.c.h.b16 %v532
        %v1742 = vunpack.c.l.b16 %v533
        %v1743 = vunpack.c.h.b16 %v533
        %v1744 = vunpack.c.l.b16 %v534
        %v1745 = vunpack.c.h.b16 %v534
        %v1746 = vunpack.c.l.b16 %v535
        %v1747 = vunpack.c.h.b16 %v535
        %v1748 = vunpack.c.l.b16 %v536
        %v1749 = vunpack.c.h.b16 %v536
        %v1750 = vunpack.c.l.b16 %v537
        %v1751 = vunpack.c.h.b16 %v537
        %v1752 = vunpack.c.l.b16 %v538
        %v1753 = vunpack.c.h.b16 %v538
        %v1754 = vunpack.c.l.b16 %v539
        %v1755 = vunpack.c.h.b16 %v539
        %v1756 = vunpack.c.l.b16 %v540
        %v1757 = vunpack.c.h.b16 %v540
        %v1758 = vunpack.c.l.b16 %v541
        %v1759 = vunpack.c.h.b16 %v541
        %v1760 = vunpack.c.l.b16 %v542
        %v1761 = vunpack.c.h.b16 %v542
        %v1762 = vunpack.c.l.b16 %v543
        %v1763 = vunpack.c.h.b16 %v543
        %v1764 = vunpack.c.l.b16 %v544
        %v1765 = vunpack.c.h.b16 %v544
        %v1766 = vunpack.c.l.b16 %v545
        %v1767 = vunpack.c.h.b16 %v545
        %v1768 = vunpack.c.l.b16 %v546
        %v1769 = vunpack.c.h.b16 %v546
        %v1770 = vunpack.c.l.b16 %v547
        %v1771 = vunpack.c.h.b16 %v547
        %v1772 = vunpack.c.l.b16 %v548
        %v1773 = vunpack.c.h.b16 %v548
        %v1774 = vunpack.c.l.b16 %v549
        %v1775 = vunpack.c.h.b16 %v549
        %v1776 = vunpack.c.l.b16 %v550
        %v1777 = vunpack.c.h.b16 %v550
        %v1778 = vunpack.c.l.b16 %v551
        %v1779 = vunpack.c.h.b16 %v551
        %v1780 = vunpack.c.l.b16 %v552
        %v1781 = vunpack.c.h.b16 %v552
        %v1782 = vunpack.c.l.b16 %v553
        %v1783 = vunpack.c.h.b16 %v553
        %v1784 = vunpack.c.l.b16 %v554
        %v1785 = vunpack.c.h.b16 %v554
        %v1786 = vunpack.c.l.b16 %v555
        %v1787 = vunpack.c.h.b16 %v555
        %v1788 = vunpack.c.l.b16 %v556
        %v1789 = vunpack.c.h.b16 %v556
        %v1790 = vunpack.c.l.b16 %v557
        %v1791 = vunpack.c.h.b16 %v557
        %v1792 = vunpack.c.l.b16 %v558
        %v1793 = vunpack.c.h.b16 %v558
        %v1794 = vunpack.c.l.b16 %v559
        %v1795 = vunpack.c.h.b16 %v559
        %v1796 = vunpack.c.l.b16 %v560
        %v1797 = vunpack.c.h.b16 %v560
        %v1798 = vunpack.c.l.b16 %v561
        %v1799 = vunpack.c.h.b16 %v561
        %v1800 = vunpack.c.l.b16 %v562
        %v1801 = vunpack.c.h.b16 %v562
        %v1802 = vunpack.c.l.b16 %v563
        %v1803 = vunpack.c.h.b16 %v563
        %v1804 = vunpack.c.l.b16 %v564
        %v1805 = vunpack.c.h.b16 %v564
        %v1806 = vunpack.c.l.b16 %v565
        %v1807 = vunpack.c.h.b16 %v565
        %v1808 = vunpack.c.l.b16 %v566
        %v1809 = vunpack.c.h.b16 %v566
        %v1810 = vunpack.c.l.b16 %v567
        %v1811 = vunpack.c.h.b16 %v567
        %v1812 = vunpack.c.l.b16 %v568
        %v1813 = vunpack.c.h.b16 %v568
        %v1814 = vunpack.c.l.b16 %v569
        %v1815 = vunpack.c.h.b16 %v569
        %v1816 = vunpack.c.l.b16 %v570
        %v1817 = vunpack.c.h.b16 %v570
        %v1818 = vunpack.c.l.b16 %v571
        %v1819 = vunpack.c.h.b16 %v571
        %v1820 = vunpack.c.l.b16 %v572
        %v1821 = vunpack.c.h.b16 %v572
        %v1822 = vunpack.c.l.b16 %v573
        %v1823 = vunpack.c.h.b16 %v573
        %v1824 = vunpack.c.l.b16 %v574
        %v1825 = vunpack.c.h.b16 %v574
        %v1826 = vunpack.c.l.b16 %v575
        %v1827 = vunpack.c.h.b16 %v575
        %v1828 = vunpack.c.l.b16 %v576
        %v1829 = vunpack.c.h.b16 %v576
        %v1830 = vunpack.c.l.b16 %v577
        %v1831 = vunpack.c.h.b16 %v577
        %v1832 = vunpack.c.l.b16 %v578
        %v1833 = vunpack.c.h.b16 %v578
        %v1834 = vunpack.c.l.b16 %v579
        %v1835 = vunpack.c.h.b16 %v579
        %v1836 = vunpack.c.l.b16 %v580
        %v1837 = vunpack.c.h.b16 %v580
        %v1838 = vunpack.c.l.b16 %v581
        %v1839 = vunpack.c.h.b16 %v581
        %v1840 = vunpack.c.l.b16 %v582
        %v1841 = vunpack.c.h.b16 %v582
        %v1842 = vunpack.c.l.b16 %v583
        %v1843 = vunpack.c.h.b16 %v583
        %v1844 = vunpack.c.l.b16 %v584
        %v1845 = vunpack.c.h.b16 %v584
        %v1846 = vunpack.c.l.b16 %v585
        %v1847 = vunpack.c.h.b16 %v585
        %v1848 = vunpack.c.l.b16 %v586
        %v1849 = vunpack.c.h.b16 %v586
        %v1850 = vunpack.c.l.b16 %v587
        %v1851 = vunpack.c.h.b16 %v587
        %v1852 = vunpack.c.l.b16 %v588
        %v1853 = vunpack.c.h.b16 %v588
        %v1854 = vunpack.c.l.b16 %v589
        %v1855 = vunpack.c.h.b16 %v589
        %v1856 = vunpack.c.l.b16 %v590
        %v1857 = vunpack.c.h.b16 %v590
        %v1858 = vunpack.c.l.b16 %v591
        %v1859 = vunpack.c.h.b16 %v591
        %v1860 = vunpack.c.l.b16 %v592
        %v1861 = vunpack.c.h.b16 %v592
        %v1862 = vunpack.c.l.b16 %v593
        %v1863 = vunpack.c.h.b16 %v593
        %v1864 = vunpack.c.l.b16 %v594
        %v1865 = vunpack.c.h.b16 %v594
        %v1866 = vunpack.c.l.b16 %v595
        %v1867 = vunpack.c.h.b16 %v595
        %v1868 = vunpack.c.l.b16 %v596
        %v1869 = vunpack.c.h.b16 %v596
        %v1870 = vunpack.c.l.b16 %v597
        %v1871 = vunpack.c.h.b16 %v597
        %v1872 = vunpack.c.l.b16 %v598
        %v1873 = vunpack.c.h.b16 %v598
        %v1874 = vunpack.c.l.b16 %v599
        %v1875 = vunpack.c.h.b16 %v599
        %v1876 = vunpack.c.l.b16 %v600
        %v1877 = vunpack.c.h.b16 %v600
        %v1878 = vunpack.c.l.b16 %v601
        %v1879 = vunpack.c.h.b16 %v601
        %v1880 = vunpack.c.l.b16 %v602
        %v1881 = vunpack.c.h.b16 %v602
        %v1882 = vunpack.c.l.b16 %v603
        %v1883 = vunpack.c.h.b16 %v603
        %v1884 = vunpack.c.l.b16 %v604
        %v1885 = vunpack.c.h.b16 %v604
        %v1886 = vunpack.c.l.b16 %v605
        %v1887 = vunpack.c.h.b16 %v605
        %v1888 = vunpack.c.l.b16 %v606
        %v1889 = vunpack.c.h.b16 %v606
        %v1890 = vunpack.c.l.b16 %v607
        %v1891 = vunpack.c.h.b16 %v607
        %v1892 = vunpack.c.l.b16 %v608
        %v1893 = vunpack.c.h.b16 %v608
        %v1894 = vunpack.c.l.b16 %v609
        %v1895 = vunpack.c.h.b16 %v609
        %v1896 = vunpack.c.l.b16 %v610
        %v1897 = vunpack.c.h.b16 %v610
        %v1898 = vunpack.c.l.b16 %v611
        %v1899 = vunpack.c.h.b16 %v611
        %v1900 = vunpack.c.l.b16 %v612
        %v1901 = vunpack.c.h.b16 %v612
        %v1902 = vunpack.c.l.b16 %v613
        %v1903 = vunpack.c.h.b16 %v613
        %v1904 = vunpack.c.l.b16 %v614
        %v1905 = vunpack.c.h.b16 %v614
        %v1906 = vunpack.c.l.b16 %v615
        %v1907 = vunpack.c.h.b16 %v615
        %v1908 = vunpack.c.l.b16 %v616
        %v1909 = vunpack.c.h.b16 %v616
        %v1910 = vunpack.c.l.b16 %v617
        %v1911 = vunpack.c.h.b16 %v617
        %v1912 = vunpack.c.l.b16 %v618
        %v1913 = vunpack.c.h.b16 %v618
        %v1914 = vunpack.c.l.b16 %v619
        %v1915 = vunpack.c.h.b16 %v619
        %v1916 = vunpack.c.l.b16 %v620
        %v1917 = vunpack.c.h.b16 %v620
        %v1918 = vunpack.c.l.b16 %v621
        %v1919 = vunpack.c.h.b16 %v621
        %v1920 = vunpack.c.l.b16 %v622
        %v1921 = vunpack.c.h.b16 %v622
        %v1922 = vunpack.c.l.b16 %v623
        %v1923 = vunpack.c.h.b16 %v623
        %v1924 = vunpack.c.l.b16 %v624
        %v1925 = vunpack.c.h.b16 %v624
        %v1926 = vunpack.c.l.b16 %v625
        %v1927 = vunpack.c.h.b16 %v625
        %v1928 = vunpack.c.l.b16 %v626
        %v1929 = vunpack.c.h.b16 %v626
        %v1930 = vunpack.c.l.b16 %v627
        %v1931 = vunpack.c.h.b16 %v627
        %v1932 = vunpack.c.l.b16 %v628
        %v1933 = vunpack.c.h.b16 %v628
        %v1934 = vunpack.c.l.b16 %v629
        %v1935 = vunpack.c.h.b16 %v629
        %v1936 = vunpack.c.l.b16 %v630
        %v1937 = vunpack.c.h.b16 %v630
        %v1938 = vunpack.c.l.b16 %v631
        %v1939 = vunpack.c.h.b16 %v631
        %v1940 = vunpack.c.l.b16 %v632
        %v1941 = vunpack.c.h.b16 %v632
        %v1942 = vunpack.c.l.b16 %v633
        %v1943 = vunpack.c.h.b16 %v633
        %v1944 = vunpack.c.l.b16 %v634
        %v1945 = vunpack.c.h.b16 %v634
        %v1946 = vunpack.c.l.b16 %v635
        %v1947 = vunpack.c.h.b16 %v635
        %v1948 = vunpack.c.l.b16 %v636
        %v1949 = vunpack.c.h.b16 %v636
        %v1950 = vunpack.c.l.b16 %v637
        %v1951 = vunpack.c.h.b16 %v637
        %v1952 = vunpack.c.l.b16 %v638
        %v1953 = vunpack.c.h.b16 %v638
        %v1954 = vunpack.c.l.b16 %v639
        %v1955 = vunpack.c.h.b16 %v639
        %v1956 = vunpack.c.l.b16 %v640
        %v1957 = vunpack.c.h.b16 %v640
        %v1958 = vunpack.c.l.b16 %v641
        %v1959 = vunpack.c.h.b16 %v641
        %v1960 = vunpack.c.l.b16 %v642
        %v1961 = vunpack.c.h.b16 %v642
        %v1962 = vunpack.c.l.b16 %v643
        %v1963 = vunpack.c.h.b16 %v643
        %v1964 = vunpack.c.l.b16 %v644
        %v1965 = vunpack.c.h.b16 %v644
        %v1966 = vunpack.c.l.b16 %v645
        %v1967 = vunpack.c.h.b16 %v645
        %v1968 = vunpack.c.l.b16 %v646
        %v1969 = vunpack.c.h.b16 %v646
        %v1970 = vunpack.c.l.b16 %v647
        %v1971 = vunpack.c.h.b16 %v647
        %v1972 = vunpack.c.l.b16 %v648
        %v1973 = vunpack.c.h.b16 %v648
        %v1974 = vunpack.c.l.b16 %v649
        %v1975 = vunpack.c.h.b16 %v649
        %v1976 = vunpack.c.l.b16 %v650
        %v1977 = vunpack.c.h.b16 %v650
        %v1978 = vunpack.c.l.b16 %v651
        %v1979 = vunpack.c.h.b16 %v651
        %v1980 = vunpack.c.l.b16 %v652
        %v1981 = vunpack.c.h.b16 %v652
        %v1982 = vunpack.c.l.b16 %v653
        %v1983 = vunpack.c.h.b16 %v653
        %v1984 = vunpack.c.l.b16 %v654
        %v1985 = vunpack.c.h.b16 %v654
        %v1986 = vunpack.c.l.b16 %v655
        %v1987 = vunpack.c.h.b16 %v655
        %v1988 = vunpack.c.l.b16 %v656
        %v1989 = vunpack.c.h.b16 %v656
        %v1990 = vunpack.c.l.b16 %v657
        %v1991 = vunpack.c.h.b16 %v657
        %v1992 = vunpack.c.l.b16 %v658
        %v1993 = vunpack.c.h.b16 %v658
        %v1994 = vunpack.c.l.b16 %v659
        %v1995 = vunpack.c.h.b16 %v659
        %v1996 = vunpack.c.l.b16 %v660
        %v1997 = vunpack.c.h.b16 %v660
        %v1998 = vunpack.c.l.b16 %v661
        %v1999 = vunpack.c.h.b16 %v661
        %v2000 = vunpack.c.l.b16 %v662
        %v2001 = vunpack.c.h.b16 %v662
        %v2002 = vunpack.c.l.b16 %v663
        %v2003 = vunpack.c.h.b16 %v663
        %v2004 = vunpack.c.l.b16 %v664
        %v2005 = vunpack.c.h.b16 %v664
        %v2006 = vunpack.c.l.b16 %v665
        %v2007 = vunpack.c.h.b16 %v665
        %v2008 = vunpack.c.l.b16 %v666
        %v2009 = vunpack.c.h.b16 %v666
        %v2010 = vunpack.c.l.b16 %v667
        %v2011 = vunpack.c.h.b16 %v667
        %v2012 = vunpack.c.l.b16 %v668
        %v2013 = vunpack.c.h.b16 %v668
        %v2014 = vunpack.c.l.b16 %v669
        %v2015 = vunpack.c.h.b16 %v669
        %v2016 = vunpack.c.l.b16 %v670
        %v2017 = vunpack.c.h.b16 %v670
        %v2018 = vunpack.c.l.b16 %v671
        %v2019 = vunpack.c.h.b16 %v671
        %v2020 = vunpack.c.l.b16 %v672
        %v2021 = vunpack.c.h.b16 %v672
        %v2022 = vunpack.c.l.b16 %v673
        %v2023 = vunpack.c.h.b16 %v673
        %v2024 = vunpack.c.l.b16 %v674
        %v2025 = vunpack.c.h.b16 %v674
        %v2026 = vunpack.c.l.b16 %v675
        %v2027 = vunpack.c.h.b16 %v675
        %v2028 = vunpack.c.l.b16 %v676
        %v2029 = vunpack.c.h.b16 %v676
        %v2030 = vunpack.c.l.b16 %v677
        %v2031 = vunpack.c.h.b16 %v677
        %v2032 = vunpack.c.l.b16 %v678
        %v2033 = vunpack.c.h.b16 %v678
        %v2034 = vunpack.c.l.b16 %v679
        %v2035 = vunpack.c.h.b16 %v679
        %v2036 = vunpack.c.l.b16 %v680
        %v2037 = vunpack.c.h.b16 %v680
        %v2038 = vunpack.c.l.b16 %v681
        %v2039 = vunpack.c.h.b16 %v681
        %v2040 = vunpack.c.l.b16 %v682
        %v2041 = vunpack.c.h.b16 %v682
        %v2042 = vunpack.c.l.b16 %v683
        %v2043 = vunpack.c.h.b16 %v683
        %v2044 = vunpack.c.l.b16 %v684
        %v2045 = vunpack.c.h.b16 %v684
        %v2046 = vunpack.c.l.b16 %v685
        %v2047 = vunpack.c.h.b16 %v685
        %v2048 = vunpack.c.l.b16 %v686
        %v2049 = vunpack.c.h.b16 %v686
        %v2050 = vunpack.c.l.b16 %v687
        %v2051 = vunpack.c.h.b16 %v687
        %v2052 = vunpack.c.l.b16 %v688
        %v2053 = vunpack.c.h.b16 %v688
        %v2054 = vunpack.c.l.b16 %v689
        %v2055 = vunpack.c.h.b16 %v689
        %v2056 = vunpack.c.l.b16 %v690
        %v2057 = vunpack.c.h.b16 %v690
        %v2058 = vunpack.c.l.b16 %v691
        %v2059 = vunpack.c.h.b16 %v691
        %v2060 = vunpack.c.l.b16 %v692
        %v2061 = vunpack.c.h.b16 %v692
        %v2062 = vunpack.c.l.b16 %v693
        %v2063 = vunpack.c.h.b16 %v693
        %v2064 = vunpack.c.l.b16 %v694
        %v2065 = vunpack.c.h.b16 %v694
        %v2066 = vunpack.c.l.b16 %v695
        %v2067 = vunpack.c.h.b16 %v695
        %v2068 = vunpack.c.l.b16 %v696
        %v2069 = vunpack.c.h.b16 %v696
        %v2070 = vunpack.c.l.b16 %v697
        %v2071 = vunpack.c.h.b16 %v697
        %v2072 = vunpack.c.l.b16 %v698
        %v2073 = vunpack.c.h.b16 %v698
        %v2074 = vunpack.c.l.b16 %v699
        %v2075 = vunpack.c.h.b16 %v699
        %v2076 = vunpack.c.l.b16 %v700
        %v2077 = vunpack.c.h.b16 %v700
        %v2078 = vunpack.c.l.b16 %v701
        %v2079 = vunpack.c.h.b16 %v701
        %v2080 = vunpack.c.l.b16 %v702
        %v2081 = vunpack.c.h.b16 %v702
        %v2082 = vunpack.c.l.b16 %v703
        %v2083 = vunpack.c.h.b16 %v703
        %v2084 = vunpack.c.l.b16 %v704
        %v2085 = vunpack.c.h.b16 %v704
        %v2086 = vunpack.c.l.b16 %v705
        %v2087 = vunpack.c.h.b16 %v705
        %v2088 = vunpack.c.l.b16 %v706
        %v2089 = vunpack.c.h.b16 %v706
        %v2090 = vunpack.c.l.b16 %v707
        %v2091 = vunpack.c.h.b16 %v707
        %v2092 = vunpack.c.l.b16 %v708
        %v2093 = vunpack.c.h.b16 %v708
        %v2094 = vunpack.c.l.b16 %v709
        %v2095 = vunpack.c.h.b16 %v709
        %v2096 = vunpack.c.l.b16 %v710
        %v2097 = vunpack.c.h.b16 %v710
        %v2098 = vunpack.c.l.b16 %v711
        %v2099 = vunpack.c.h.b16 %v711
        %v2100 = vunpack.c.l.b16 %v712
        %v2101 = vunpack.c.h.b16 %v712
        %v2102 = vunpack.c.l.b16 %v713
        %v2103 = vunpack.c.h.b16 %v713
        %v2104 = vunpack.c.l.b16 %v714
        %v2105 = vunpack.c.h.b16 %v714
        %v2106 = vunpack.c.l.b16 %v715
        %v2107 = vunpack.c.h.b16 %v715
        %v2108 = vunpack.c.l.b16 %v716
        %v2109 = vunpack.c.h.b16 %v716
        %v2110 = vunpack.c.l.b16 %v717
        %v2111 = vunpack.c.h.b16 %v717
        %v2112 = vunpack.c.l.b16 %v718
        %v2113 = vunpack.c.h.b16 %v718
        %v2114 = vunpack.c.l.b16 %v719
        %v2115 = vunpack.c.h.b16 %v719
        %v2116 = vunpack.c.l.b16 %v720
        %v2117 = vunpack.c.h.b16 %v720
        %v2118 = vunpack.c.l.b16 %v721
        %v2119 = vunpack.c.h.b16 %v721
        %v2120 = vunpack.c.l.b16 %v722
        %v2121 = vunpack.c.h.b16 %v722
        %v2122 = vunpack.c.l.b16 %v723
        %v2123 = vunpack.c.h.b16 %v723
        %v2124 = vunpack.c.l.b16 %v724
        %v2125 = vunpack.c.h.b16 %v724
        %v2126 = vunpack.c.l.b16 %v725
        %v2127 = vunpack.c.h.b16 %v725
        %v2128 = vunpack.c.l.b16 %v726
        %v2129 = vunpack.c.h.b16 %v726
        %v2130 = vunpack.c.l.b16 %v727
        %v2131 = vunpack.c.h.b16 %v727
        %v2132 = vunpack.c.l.b16 %v728
        %v2133 = vunpack.c.h.b16 %v728
        %v2134 = vunpack.c.l.b16 %v729
        %v2135 = vunpack.c.h.b16 %v729
        %v2136 = vunpack.c.l.b16 %v730
        %v2137 = vunpack.c.h.b16 %v730
        %v2138 = vunpack.c.l.b16 %v731
        %v2139 = vunpack.c.h.b16 %v731
        %v2140 = vunpack.c.l.b16 %v732
        %v2141 = vunpack.c.h.b16 %v732
        %v2142 = vunpack.c.l.b16 %v733
        %v2143 = vunpack.c.h.b16 %v733
        %v2144 = vunpack.c.l.b16 %v734
        %v2145 = vunpack.c.h.b16 %v734
        %v2146 = vunpack.c.l.b16 %v735
        %v2147 = vunpack.c.h.b16 %v735
        %v2148 = vunpack.c.l.b16 %v736
        %v2149 = vunpack.c.h.b16 %v736
        %v2150 = vunpack.c.l.b16 %v737
        %v2151 = vunpack.c.h.b16 %v737
        %v2152 = vunpack.c.l.b16 %v738
        %v2153 = vunpack.c.h.b16 %v738
        %v2154 = vunpack.c.l.b16 %v739
        %v2155 = vunpack.c.h.b16 %v739
        %v2156 = vunpack.c.l.b16 %v740
        %v2157 = vunpack.c.h.b16 %v740
        %v2158 = vunpack.c.l.b16 %v741
        %v2159 = vunpack.c.h.b16 %v741
        %v2160 = vunpack.c.l.b16 %v742
        %v2161 = vunpack.c.h.b16 %v742
        %v2162 = vunpack.c.l.b16 %v743
        %v2163 = vunpack.c.h.b16 %v743
        %v2164 = vunpack.c.l.b16 %v744
        %v2165 = vunpack.c.h.b16 %v744
        %v2166 = vunpack.c.l.b16 %v745
        %v2167 = vunpack.c.h.b16 %v745
        %v2168 = vunpack.c.l.b16 %v746
        %v2169 = vunpack.c.h.b16 %v746
        %v2170 = vunpack.c.l.b16 %v747
        %v2171 = vunpack.c.h.b16 %v747
        %v2172 = vunpack.c.l.b16 %v748
        %v2173 = vunpack.c.h.b16 %v748
        %v2174 = vunpack.c.l.b16 %v749
        %v2175 = vunpack.c.h.b16 %v749
        %v2176 = vunpack.c.l.b16 %v750
        %v2177 = vunpack.c.h.b16 %v750
        %v2178 = vunpack.c.l.b16 %v751
        %v2179 = vunpack.c.h.b16 %v751
        %v2180 = vunpack.c.l.b16 %v752
        %v2181 = vunpack.c.h.b16 %v752
        %v2182 = vunpack.c.l.b16 %v753
        %v2183 = vunpack.c.h.b16 %v753
        %v2184 = vunpack.c.l.b16 %v754
        %v2185 = vunpack.c.h.b16 %v754
        %v2186 = vunpack.c.l.b16 %v755
        %v2187 = vunpack.c.h.b16 %v755
        %v2188 = vunpack.c.l.b16 %v756
        %v2189 = vunpack.c.h.b16 %v756
        %v2190 = vunpack.c.l.b16 %v757
        %v2191 = vunpack.c.h.b16 %v757
        %v2192 = vunpack.c.l.b16 %v758
        %v2193 = vunpack.c.h.b16 %v758
        %v2194 = vunpack.c.l.b16 %v759
        %v2195 = vunpack.c.h.b16 %v759
        %v2196 = vunpack.c.l.b16 %v760
        %v2197 = vunpack.c.h.b16 %v760
        %v2198 = vunpack.c.l.b16 %v761
        %v2199 = vunpack.c.h.b16 %v761
        %v2200 = vunpack.c.l.b16 %v762
        %v2201 = vunpack.c.h.b16 %v762
        %v2202 = vunpack.c.l.b16 %v763
        %v2203 = vunpack.c.h.b16 %v763
        %v2204 = vunpack.c.l.b16 %v764
        %v2205 = vunpack.c.h.b16 %v764
        %v2206 = vunpack.c.l.b16 %v765
        %v2207 = vunpack.c.h.b16 %v765
        %v2208 = vunpack.c.l.b16 %v766
        %v2209 = vunpack.c.h.b16 %v766
        %v2210 = vunpack.c.l.b16 %v767
        %v2211 = vunpack.c.h.b16 %v767
        %v2212 = vunpack.c.l.b16 %v768
        %v2213 = vunpack.c.h.b16 %v768
        %v2214 = vunpack.c.l.b16 %v769
        %v2215 = vunpack.c.h.b16 %v769
        %v2216 = vunpack.c.l.b16 %v770
        %v2217 = vunpack.c.h.b16 %v770
        %v2218 = vunpack.c.l.b16 %v771
        %v2219 = vunpack.c.h.b16 %v771
        %v2220 = vunpack.c.l.b16 %v772
        %v2221 = vunpack.c.h.b16 %v772
        %v2222 = vunpack.c.l.b16 %v773
        %v2223 = vunpack.c.h.b16 %v773
        %v2224 = vunpack.c.l.b16 %v774
        %v2225 = vunpack.c.h.b16 %v774
        %v2226 = vunpack.c.l.b16 %v775
        %v2227 = vunpack.c.h.b16 %v775
        %v2228 = vunpack.c.l.b16 %v776
        %v2229 = vunpack.c.h.b16 %v776
        %v2230 = vunpack.c.l.b16 %v777
        %v2231 = vunpack.c.h.b16 %v777
        %v2232 = vunpack.c.l.b16 %v778
        %v2233 = vunpack.c.h.b16 %v778
        %v2234 = vunpack.c.l.b16 %v779
        %v2235 = vunpack.c.h.b16 %v779
        %v2236 = vunpack.c.l.b16 %v780
        %v2237 = vunpack.c.h.b16 %v780
        %v2238 = vunpack.c.l.b16 %v781
        %v2239 = vunpack.c.h.b16 %v781
        %v2240 = vunpack.c.l.b16 %v782
        %v2241 = vunpack.c.h.b16 %v782
        %v2242 = vunpack.c.l.b16 %v783
        %v2243 = vunpack.c.h.b16 %v783
        %v2244 = vunpack.c.l.b16 %v784
        %v2245 = vunpack.c.h.b16 %v784
        %v2246 = vunpack.c.l.b16 %v785
        %v2247 = vunpack.c.h.b16 %v785
        %v2248 = vunpack.c.l.b16 %v786
        %v2249 = vunpack.c.h.b16 %v786
        %v2250 = vunpack.c.l.b16 %v787
        %v2251 = vunpack.c.h.b16 %v787
        %v2252 = vunpack.c.l.b16 %v788
        %v2253 = vunpack.c.h.b16 %v788
        %v2254 = vunpack.c.l.b16 %v789
        %v2255 = vunpack.c.h.b16 %v789
        %v2256 = vunpack.c.l.b16 %v790
        %v2257 = vunpack.c.h.b16 %v790
        %v2258 = vunpack.c.l.b16 %v791
        %v2259 = vunpack.c.h.b16 %v791
        %v2260 = vunpack.c.l.b16 %v792
        %v2261 = vunpack.c.h.b16 %v792
        %v2262 = vunpack.c.l.b16 %v793
        %v2263 = vunpack.c.h.b16 %v793
        %v2264 = vunpack.c.l.b16 %v794
        %v2265 = vunpack.c.h.b16 %v794
        %v2266 = vunpack.c.l.b16 %v795
        %v2267 = vunpack.c.h.b16 %v795
        %v2268 = vunpack.c.l.b16 %v796
        %v2269 = vunpack.c.h.b16 %v796
        %v2270 = vunpack.c.l.b16 %v797
        %v2271 = vunpack.c.h.b16 %v797
        %v2272 = vunpack.c.l.b16 %v798
        %v2273 = vunpack.c.h.b16 %v798
        %v2274 = vunpack.c.l.b16 %v799
        %v2275 = vunpack.c.h.b16 %v799
        %v2276 = vunpack.c.l.b16 %v800
        %v2277 = vunpack.c.h.b16 %v800
        %v2278 = vunpack.c.l.b16 %v801
        %v2279 = vunpack.c.h.b16 %v801
        %v2280 = vunpack.c.l.b16 %v802
        %v2281 = vunpack.c.h.b16 %v802
        %v2282 = vunpack.c.l.b16 %v803
        %v2283 = vunpack.c.h.b16 %v803
        %v2284 = vunpack.c.l.b16 %v804
        %v2285 = vunpack.c.h.b16 %v804
        %v2286 = vunpack.c.l.b16 %v805
        %v2287 = vunpack.c.h.b16 %v805
        %v2288 = vunpack.c.l.b16 %v806
        %v2289 = vunpack.c.h.b16 %v806
        %v2290 = vunpack.c.l.b16 %v807
        %v2291 = vunpack.c.h.b16 %v807
        %v2292 = vunpack.c.l.b16 %v808
        %v2293 = vunpack.c.h.b16 %v808
        %v2294 = vunpack.c.l.b16 %v809
        %v2295 = vunpack.c.h.b16 %v809
        %v2296 = vunpack.c.l.b16 %v810
        %v2297 = vunpack.c.h.b16 %v810
        %v2298 = vunpack.c.l.b16 %v811
        %v2299 = vunpack.c.h.b16 %v811
        %v2300 = vunpack.c.l.b16 %v812
        %v2301 = vunpack.c.h.b16 %v812
        %v2302 = vunpack.c.l.b16 %v813
        %v2303 = vunpack.c.h.b16 %v813
        %v2304 = vunpack.c.l.b16 %v814
        %v2305 = vunpack.c.h.b16 %v814
        %v2306 = vunpack.c.l.b16 %v815
        %v2307 = vunpack.c.h.b16 %v815
        %v2308 = vunpack.c.l.b16 %v816
        %v2309 = vunpack.c.h.b16 %v816
        %v2310 = vunpack.c.l.b16 %v817
        %v2311 = vunpack.c.h.b16 %v817
        %v2312 = vunpack.c.l.b16 %v818
        %v2313 = vunpack.c.h.b16 %v818
        %v2314 = vunpack.c.l.b16 %v819
        %v2315 = vunpack.c.h.b16 %v819
        %v2316 = vunpack.c.l.b16 %v820
        %v2317 = vunpack.c.h.b16 %v820
        %v2318 = vunpack.c.l.b16 %v821
        %v2319 = vunpack.c.h.b16 %v821
        %v2320 = vunpack.c.l.b16 %v822
        %v2321 = vunpack.c.h.b16 %v822
        %v2322 = vunpack.c.l.b16 %v823
        %v2323 = vunpack.c.h.b16 %v823
        %v2324 = vunpack.c.l.b16 %v824
        %v2325 = vunpack.c.h.b16 %v824
        %v2326 = vunpack.c.l.b16 %v825
        %v2327 = vunpack.c.h.b16 %v825
        %v2328 = vunpack.c.l.b16 %v826
        %v2329 = vunpack.c.h.b16 %v826
        %v2330 = vunpack.c.l.b16 %v827
        %v2331 = vunpack.c.h.b16 %v827
        %v2332 = vunpack.c.l.b16 %v828
        %v2333 = vunpack.c.h.b16 %v828
        %v2334 = vunpack.c.l.b16 %v829
        %v2335 = vunpack.c.h.b16 %v829
        %v2336 = vunpack.c.l.b16 %v830
        %v2337 = vunpack.c.h.b16 %v830
        %v2338 = vunpack.c.l.b16 %v831
        %v2339 = vunpack.c.h.b16 %v831
        %v2340 = vunpack.c.l.b16 %v832
        %v2341 = vunpack.c.h.b16 %v832
        %v2342 = vunpack.c.l.b16 %v833
        %v2343 = vunpack.c.h.b16 %v833
        %v2344 = vunpack.c.l.b16 %v834
        %v2345 = vunpack.c.h.b16 %v834
        %v2346 = vunpack.c.l.b16 %v835
        %v2347 = vunpack.c.h.b16 %v835
        %v2348 = vunpack.c.l.b16 %v836
        %v2349 = vunpack.c.h.b16 %v836
        %v2350 = vunpack.c.l.b16 %v837
        %v2351 = vunpack.c.h.b16 %v837
        %v2352 = vunpack.c.l.b16 %v838
        %v2353 = vunpack.c.h.b16 %v838
        %v2354 = vunpack.c.l.b16 %v839
        %v2355 = vunpack.c.h.b16 %v839
        %v2356 = vunpack.c.l.b16 %v840
        %v2357 = vunpack.c.h.b16 %v840
        %v2358 = vunpack.c.l.b16 %v841
        %v2359 = vunpack.c.h.b16 %v841
        %v2360 = vunpack.c.l.b16 %v842
        %v2361 = vunpack.c.h.b16 %v842
        %v2362 = vunpack.c.l.b16 %v843
        %v2363 = vunpack.c.h.b16 %v843
        %v2364 = vunpack.c.l.b16 %v844
        %v2365 = vunpack.c.h.b16 %v844
        %v2366 = vunpack.c.l.b16 %v845
        %v2367 = vunpack.c.h.b16 %v845
        %v2368 = vunpack.c.l.b16 %v846
        %v2369 = vunpack.c.h.b16 %v846
        %v2370 = vunpack.c.l.b16 %v847
        %v2371 = vunpack.c.h.b16 %v847
        %v2372 = vunpack.c.l.b16 %v848
        %v2373 = vunpack.c.h.b16 %v848
        %v2374 = vunpack.c.l.b16 %v849
        %v2375 = vunpack.c.h.b16 %v849
        %v2376 = vunpack.c.l.b16 %v850
        %v2377 = vunpack.c.h.b16 %v850
        %v2378 = vunpack.c.l.b16 %v851
        %v2379 = vunpack.c.h.b16 %v851
        %v2380 = vunpack.c.l.b16 %v852
        %v2381 = vunpack.c.h.b16 %v852
        %v2382 = vunpack.c.l.b16 %v853
        %v2383 = vunpack.c.h.b16 %v853
        %v2384 = vunpack.c.l.b16 %v854
        %v2385 = vunpack.c.h.b16 %v854
        %v2386 = vunpack.c.l.b16 %v855
        %v2387 = vunpack.c.h.b16 %v855
        %v2388 = vunpack.c.l.b16 %v856
        %v2389 = vunpack.c.h.b16 %v856
        %v2390 = vunpack.c.l.b16 %v857
        %v2391 = vunpack.c.h.b16 %v857
        %v2392 = vunpack.c.l.b16 %v858
        %v2393 = vunpack.c.h.b16 %v858
        %v2394 = vunpack.c.l.b16 %v859
        %v2395 = vunpack.c.h.b16 %v859
        %v2396 = vpack.c.b16 %v1380, %v1372
        %v2397 = vpack.c.b16 %v1381, %v1373
        %v2398 = vpack.c.b16 %v1382, %v1374
        %v2399 = vpack.c.b16 %v1383, %v1375
        %v2400 = vpack.c.b16 %v1384, %v1376
        %v2401 = vpack.c.b16 %v1385, %v1377
        %v2402 = vpack.c.b16 %v1386, %v1378
        %v2403 = vpack.c.b16 %v1387, %v1379
        %v2404 = vpack.c.b16 %v1396, %v1388
        %v2405 = vpack.c.b16 %v1397, %v1389
        %v2406 = vpack.c.b16 %v1398, %v1390
        %v2407 = vpack.c.b16 %v1399, %v1391
        %v2408 = vpack.c.b16 %v1400, %v1392
        %v2409 = vpack.c.b16 %v1401, %v1393
        %v2410 = vpack.c.b16 %v1402, %v1394
        %v2411 = vpack.c.b16 %v1403, %v1395
        %v2412 = vpack.c.b16 %v1412, %v1404
        %v2413 = vpack.c.b16 %v1413, %v1405
        %v2414 = vpack.c.b16 %v1414, %v1406
        %v2415 = vpack.c.b16 %v1415, %v1407
        %v2416 = vpack.c.b16 %v1416, %v1408
        %v2417 = vpack.c.b16 %v1417, %v1409
        %v2418 = vpack.c.b16 %v1418, %v1410
        %v2419 = vpack.c.b16 %v1419, %v1411
        %v2420 = vpack.c.b16 %v1428, %v1420
        %v2421 = vpack.c.b16 %v1429, %v1421
        %v2422 = vpack.c.b16 %v1430, %v1422
        %v2423 = vpack.c.b16 %v1431, %v1423
        %v2424 = vpack.c.b16 %v1432, %v1424
        %v2425 = vpack.c.b16 %v1433, %v1425
        %v2426 = vpack.c.b16 %v1434, %v1426
        %v2427 = vpack.c.b16 %v1435, %v1427
        %v2428 = vpack.c.b16 %v1444, %v1436
        %v2429 = vpack.c.b16 %v1445, %v1437
        %v2430 = vpack.c.b16 %v1446, %v1438
        %v2431 = vpack.c.b16 %v1447, %v1439
        %v2432 = vpack.c.b16 %v1448, %v1440
        %v2433 = vpack.c.b16 %v1449, %v1441
        %v2434 = vpack.c.b16 %v1450, %v1442
        %v2435 = vpack.c.b16 %v1451, %v1443
        %v2436 = vpack.c.b16 %v1460, %v1452
        %v2437 = vpack.c.b16 %v1461, %v1453
        %v2438 = vpack.c.b16 %v1462, %v1454
        %v2439 = vpack.c.b16 %v1463, %v1455
        %v2440 = vpack.c.b16 %v1464, %v1456
        %v2441 = vpack.c.b16 %v1465, %v1457
        %v2442 = vpack.c.b16 %v1466, %v1458
        %v2443 = vpack.c.b16 %v1467, %v1459
        %v2444 = vpack.c.b16 %v1476, %v1468
        %v2445 = vpack.c.b16 %v1477, %v1469
        %v2446 = vpack.c.b16 %v1478, %v1470
        %v2447 = vpack.c.b16 %v1479, %v1471
        %v2448 = vpack.c.b16 %v1480, %v1472
        %v2449 = vpack.c.b16 %v1481, %v1473
        %v2450 = vpack.c.b16 %v1482, %v1474
        %v2451 = vpack.c.b16 %v1483, %v1475
        %v2452 = vpack.c.b16 %v1492, %v1484
        %v2453 = vpack.c.b16 %v1493, %v1485
        %v2454 = vpack.c.b16 %v1494, %v1486
        %v2455 = vpack.c.b16 %v1495, %v1487
        %v2456 = vpack.c.b16 %v1496, %v1488
        %v2457 = vpack.c.b16 %v1497, %v1489
        %v2458 = vpack.c.b16 %v1498, %v1490
        %v2459 = vpack.c.b16 %v1499, %v1491
        %v2460 = vpack.c.b16 %v1508, %v1500
        %v2461 = vpack.c.b16 %v1509, %v1501
        %v2462 = vpack.c.b16 %v1510, %v1502
        %v2463 = vpack.c.b16 %v1511, %v1503
        %v2464 = vpack.c.b16 %v1512, %v1504
        %v2465 = vpack.c.b16 %v1513, %v1505
        %v2466 = vpack.c.b16 %v1514, %v1506
        %v2467 = vpack.c.b16 %v1515, %v1507
        %v2468 = vpack.c.b16 %v1524, %v1516
        %v2469 = vpack.c.b16 %v1525, %v1517
        %v2470 = vpack.c.b16 %v1526, %v1518
        %v2471 = vpack.c.b16 %v1527, %v1519
        %v2472 = vpack.c.b16 %v1528, %v1520
        %v2473 = vpack.c.b16 %v1529, %v1521
        %v2474 = vpack.c.b16 %v1530, %v1522
        %v2475 = vpack.c.b16 %v1531, %v1523
        %v2476 = vpack.c.b16 %v1540, %v1532
        %v2477 = vpack.c.b16 %v1541, %v1533
        %v2478 = vpack.c.b16 %v1542, %v1534
        %v2479 = vpack.c.b16 %v1543, %v1535
        %v2480 = vpack.c.b16 %v1544, %v1536
        %v2481 = vpack.c.b16 %v1545, %v1537
        %v2482 = vpack.c.b16 %v1546, %v1538
        %v2483 = vpack.c.b16 %v1547, %v1539
        %v2484 = vpack.c.b16 %v1556, %v1548
        %v2485 = vpack.c.b16 %v1557, %v1549
        %v2486 = vpack.c.b16 %v1558, %v1550
        %v2487 = vpack.c.b16 %v1559, %v1551
        %v2488 = vpack.c.b16 %v1560, %v1552
        %v2489 = vpack.c.b16 %v1561, %v1553
        %v2490 = vpack.c.b16 %v1562, %v1554
        %v2491 = vpack.c.b16 %v1563, %v1555
        %v2492 = vpack.c.b16 %v1572, %v1564
        %v2493 = vpack.c.b16 %v1573, %v1565
        %v2494 = vpack.c.b16 %v1574, %v1566
        %v2495 = vpack.c.b16 %v1575, %v1567
        %v2496 = vpack.c.b16 %v1576, %v1568
        %v2497 = vpack.c.b16 %v1577, %v1569
        %v2498 = vpack.c.b16 %v1578, %v1570
        %v2499 = vpack.c.b16 %v1579, %v1571
        %v2500 = vpack.c.b16 %v1588, %v1580
        %v2501 = vpack.c.b16 %v1589, %v1581
        %v2502 = vpack.c.b16 %v1590, %v1582
        %v2503 = vpack.c.b16 %v1591, %v1583
        %v2504 = vpack.c.b16 %v1592, %v1584
        %v2505 = vpack.c.b16 %v1593, %v1585
        %v2506 = vpack.c.b16 %v1594, %v1586
        %v2507 = vpack.c.b16 %v1595, %v1587
        %v2508 = vpack.c.b16 %v1604, %v1596
        %v2509 = vpack.c.b16 %v1605, %v1597
        %v2510 = vpack.c.b16 %v1606, %v1598
        %v2511 = vpack.c.b16 %v1607, %v1599
        %v2512 = vpack.c.b16 %v1608, %v1600
        %v2513 = vpack.c.b16 %v1609, %v1601
        %v2514 = vpack.c.b16 %v1610, %v1602
        %v2515 = vpack.c.b16 %v1611, %v1603
        %v2516 = vpack.c.b16 %v1620, %v1612
        %v2517 = vpack.c.b16 %v1621, %v1613
        %v2518 = vpack.c.b16 %v1622, %v1614
        %v2519 = vpack.c.b16 %v1623, %v1615
        %v2520 = vpack.c.b16 %v1624, %v1616
        %v2521 = vpack.c.b16 %v1625, %v1617
        %v2522 = vpack.c.b16 %v1626, %v1618
        %v2523 = vpack.c.b16 %v1627, %v1619
        %v2524 = vpack.c.b16 %v1636, %v1628
        %v2525 = vpack.c.b16 %v1637, %v1629
        %v2526 = vpack.c.b16 %v1638, %v1630
        %v2527 = vpack.c.b16 %v1639, %v1631
        %v2528 = vpack.c.b16 %v1640, %v1632
        %v2529 = vpack.c.b16 %v1641, %v1633
        %v2530 = vpack.c.b16 %v1642, %v1634
        %v2531 = vpack.c.b16 %v1643, %v1635
        %v2532 = vpack.c.b16 %v1652, %v1644
        %v2533 = vpack.c.b16 %v1653, %v1645
        %v2534 = vpack.c.b16 %v1654, %v1646
        %v2535 = vpack.c.b16 %v1655, %v1647
        %v2536 = vpack.c.b16 %v1656, %v1648
        %v2537 = vpack.c.b16 %v1657, %v1649
        %v2538 = vpack.c.b16 %v1658, %v1650
        %v2539 = vpack.c.b16 %v1659, %v1651
        %v2540 = vpack.c.b16 %v1668, %v1660
        %v2541 = vpack.c.b16 %v1669, %v1661
        %v2542 = vpack.c.b16 %v1670, %v1662
        %v2543 = vpack.c.b16 %v1671, %v1663
        %v2544 = vpack.c.b16 %v1672, %v1664
        %v2545 = vpack.c.b16 %v1673, %v1665
        %v2546 = vpack.c.b16 %v1674, %v1666
        %v2547 = vpack.c.b16 %v1675, %v1667
        %v2548 = vpack.c.b16 %v1684, %v1676
        %v2549 = vpack.c.b16 %v1685, %v1677
        %v2550 = vpack.c.b16 %v1686, %v1678
        %v2551 = vpack.c.b16 %v1687, %v1679
        %v2552 = vpack.c.b16 %v1688, %v1680
        %v2553 = vpack.c.b16 %v1689, %v1681
        %v2554 = vpack.c.b16 %v1690, %v1682
        %v2555 = vpack.c.b16 %v1691, %v1683
        %v2556 = vpack.c.b16 %v1700, %v1692
        %v2557 = vpack.c.b16 %v1701, %v1693
        %v2558 = vpack.c.b16 %v1702, %v1694
        %v2559 = vpack.c.b16 %v1703, %v1695
        %v2560 = vpack.c.b16 %v1704, %v1696
        %v2561 = vpack.c.b16 %v1705, %v1697
        %v2562 = vpack.c.b16 %v1706, %v1698
        %v2563 = vpack.c.b16 %v1707, %v1699
        %v2564 = vpack.c.b16 %v1716, %v1708
        %v2565 = vpack.c.b16 %v1717, %v1709
        %v2566 = vpack.c.b16 %v1718, %v1710
        %v2567 = vpack.c.b16 %v1719, %v1711
        %v2568 = vpack.c.b16 %v1720, %v1712
        %v2569 = vpack.c.b16 %v1721, %v1713
        %v2570 = vpack.c.b16 %v1722, %v1714
        %v2571 = vpack.c.b16 %v1723, %v1715
        %v2572 = vpack.c.b16 %v1732, %v1724
        %v2573 = vpack.c.b16 %v1733, %v1725
        %v2574 = vpack.c.b16 %v1734, %v1726
        %v2575 = vpack.c.b16 %v1735, %v1727
        %v2576 = vpack.c.b16 %v1736, %v1728
        %v2577 = vpack.c.b16 %v1737, %v1729
        %v2578 = vpack.c.b16 %v1738, %v1730
        %v2579 = vpack.c.b16 %v1739, %v1731
        %v2580 = vpack.c.b16 %v1748, %v1740
        %v2581 = vpack.c.b16 %v1749, %v1741
        %v2582 = vpack.c.b16 %v1750, %v1742
        %v2583 = vpack.c.b16 %v1751, %v1743
        %v2584 = vpack.c.b16 %v1752, %v1744
        %v2585 = vpack.c.b16 %v1753, %v1745
        %v2586 = vpack.c.b16 %v1754, %v1746
        %v2587 = vpack.c.b16 %v1755, %v1747
        %v2588 = vpack.c.b16 %v1764, %v1756
        %v2589 = vpack.c.b16 %v1765, %v1757
        %v2590 = vpack.c.b16 %v1766, %v1758
        %v2591 = vpack.c.b16 %v1767, %v1759
        %v2592 = vpack.c.b16 %v1768, %v1760
        %v2593 = vpack.c.b16 %v1769, %v1761
        %v2594 = vpack.c.b16 %v1770, %v1762
        %v2595 = vpack.c.b16 %v1771, %v1763
        %v2596 = vpack.c.b16 %v1780, %v1772
        %v2597 = vpack.c.b16 %v1781, %v1773
        %v2598 = vpack.c.b16 %v1782, %v1774
        %v2599 = vpack.c.b16 %v1783, %v1775
        %v2600 = vpack.c.b16 %v1784, %v1776
        %v2601 = vpack.c.b16 %v1785, %v1777
        %v2602 = vpack.c.b16 %v1786, %v1778
        %v2603 = vpack.c.b16 %v1787, %v1779
        %v2604 = vpack.c.b16 %v1796, %v1788
        %v2605 = vpack.c.b16 %v1797, %v1789
        %v2606 = vpack.c.b16 %v1798, %v1790
        %v2607 = vpack.c.b16 %v1799, %v1791
        %v2608 = vpack.c.b16 %v1800, %v1792
        %v2609 = vpack.c.b16 %v1801, %v1793
        %v2610 = vpack.c.b16 %v1802, %v1794
        %v2611 = vpack.c.b16 %v1803, %v1795
        %v2612 = vpack.c.b16 %v1812, %v1804
        %v2613 = vpack.c.b16 %v1813, %v1805
        %v2614 = vpack.c.b16 %v1814, %v1806
        %v2615 = vpack.c.b16 %v1815, %v1807
        %v2616 = vpack.c.b16 %v1816, %v1808
        %v2617 = vpack.c.b16 %v1817, %v1809
        %v2618 = vpack.c.b16 %v1818, %v1810
        %v2619 = vpack.c.b16 %v1819, %v1811
        %v2620 = vpack.c.b16 %v1828, %v1820
        %v2621 = vpack.c.b16 %v1829, %v1821
        %v2622 = vpack.c.b16 %v1830, %v1822
        %v2623 = vpack.c.b16 %v1831, %v1823
        %v2624 = vpack.c.b16 %v1832, %v1824
        %v2625 = vpack.c.b16 %v1833, %v1825
        %v2626 = vpack.c.b16 %v1834, %v1826
        %v2627 = vpack.c.b16 %v1835, %v1827
        %v2628 = vpack.c.b16 %v1844, %v1836
        %v2629 = vpack.c.b16 %v1845, %v1837
        %v2630 = vpack.c.b16 %v1846, %v1838
        %v2631 = vpack.c.b16 %v1847, %v1839
        %v2632 = vpack.c.b16 %v1848, %v1840
        %v2633 = vpack.c.b16 %v1849, %v1841
        %v2634 = vpack.c.b16 %v1850, %v1842
        %v2635 = vpack.c.b16 %v1851, %v1843
        %v2636 = vpack.c.b16 %v1860, %v1852
        %v2637 = vpack.c.b16 %v1861, %v1853
        %v2638 = vpack.c.b16 %v1862, %v1854
        %v2639 = vpack.c.b16 %v1863, %v1855
        %v2640 = vpack.c.b16 %v1864, %v1856
        %v2641 = vpack.c.b16 %v1865, %v1857
        %v2642 = vpack.c.b16 %v1866, %v1858
        %v2643 = vpack.c.b16 %v1867, %v1859
        %v2644 = vpack.c.b16 %v1876, %v1868
        %v2645 = vpack.c.b16 %v1877, %v1869
        %v2646 = vpack.c.b16 %v1878, %v1870
        %v2647 = vpack.c.b16 %v1879, %v1871
        %v2648 = vpack.c.b16 %v1880, %v1872
        %v2649 = vpack.c.b16 %v1881, %v1873
        %v2650 = vpack.c.b16 %v1882, %v1874
        %v2651 = vpack.c.b16 %v1883, %v1875
        %v2652 = vpack.c.b16 %v1892, %v1884
        %v2653 = vpack.c.b16 %v1893, %v1885
        %v2654 = vpack.c.b16 %v1894, %v1886
        %v2655 = vpack.c.b16 %v1895, %v1887
        %v2656 = vpack.c.b16 %v1896, %v1888
        %v2657 = vpack.c.b16 %v1897, %v1889
        %v2658 = vpack.c.b16 %v1898, %v1890
        %v2659 = vpack.c.b16 %v1899, %v1891
        %v2660 = vpack.c.b16 %v1908, %v1900
        %v2661 = vpack.c.b16 %v1909, %v1901
        %v2662 = vpack.c.b16 %v1910, %v1902
        %v2663 = vpack.c.b16 %v1911, %v1903
        %v2664 = vpack.c.b16 %v1912, %v1904
        %v2665 = vpack.c.b16 %v1913, %v1905
        %v2666 = vpack.c.b16 %v1914, %v1906
        %v2667 = vpack.c.b16 %v1915, %v1907
        %v2668 = vpack.c.b16 %v1924, %v1916
        %v2669 = vpack.c.b16 %v1925, %v1917
        %v2670 = vpack.c.b16 %v1926, %v1918
        %v2671 = vpack.c.b16 %v1927, %v1919
        %v2672 = vpack.c.b16 %v1928, %v1920
        %v2673 = vpack.c.b16 %v1929, %v1921
        %v2674 = vpack.c.b16 %v1930, %v1922
        %v2675 = vpack.c.b16 %v1931, %v1923
        %v2676 = vpack.c.b16 %v1940, %v1932
        %v2677 = vpack.c.b16 %v1941, %v1933
        %v2678 = vpack.c.b16 %v1942, %v1934
        %v2679 = vpack.c.b16 %v1943, %v1935
        %v2680 = vpack.c.b16 %v1944, %v1936
        %v2681 = vpack.c.b16 %v1945, %v1937
        %v2682 = vpack.c.b16 %v1946, %v1938
        %v2683 = vpack.c.b16 %v1947, %v1939
        %v2684 = vpack.c.b16 %v1956, %v1948
        %v2685 = vpack.c.b16 %v1957, %v1949
        %v2686 = vpack.c.b16 %v1958, %v1950
        %v2687 = vpack.c.b16 %v1959, %v1951
        %v2688 = vpack.c.b16 %v1960, %v1952
        %v2689 = vpack.c.b16 %v1961, %v1953
        %v2690 = vpack.c.b16 %v1962, %v1954
        %v2691 = vpack.c.b16 %v1963, %v1955
        %v2692 = vpack.c.b16 %v1972, %v1964
        %v2693 = vpack.c.b16 %v1973, %v1965
        %v2694 = vpack.c.b16 %v1974, %v1966
        %v2695 = vpack.c.b16 %v1975, %v1967
        %v2696 = vpack.c.b16 %v1976, %v1968
        %v2697 = vpack.c.b16 %v1977, %v1969
        %v2698 = vpack.c.b16 %v1978, %v1970
        %v2699 = vpack.c.b16 %v1979, %v1971
        %v2700 = vpack.c.b16 %v1988, %v1980
        %v2701 = vpack.c.b16 %v1989, %v1981
        %v2702 = vpack.c.b16 %v1990, %v1982
        %v2703 = vpack.c.b16 %v1991, %v1983
        %v2704 = vpack.c.b16 %v1992, %v1984
        %v2705 = vpack.c.b16 %v1993, %v1985
        %v2706 = vpack.c.b16 %v1994, %v1986
        %v2707 = vpack.c.b16 %v1995, %v1987
        %v2708 = vpack.c.b16 %v2004, %v1996
        %v2709 = vpack.c.b16 %v2005, %v1997
        %v2710 = vpack.c.b16 %v2006, %v1998
        %v2711 = vpack.c.b16 %v2007, %v1999
        %v2712 = vpack.c.b16 %v2008, %v2000
        %v2713 = vpack.c.b16 %v2009, %v2001
        %v2714 = vpack.c.b16 %v2010, %v2002
        %v2715 = vpack.c.b16 %v2011, %v2003
        %v2716 = vpack.c.b16 %v2020, %v2012
        %v2717 = vpack.c.b16 %v2021, %v2013
        %v2718 = vpack.c.b16 %v2022, %v2014
        %v2719 = vpack.c.b16 %v2023, %v2015
        %v2720 = vpack.c.b16 %v2024, %v2016
        %v2721 = vpack.c.b16 %v2025, %v2017
        %v2722 = vpack.c.b16 %v2026, %v2018
        %v2723 = vpack.c.b16 %v2027, %v2019
        %v2724 = vpack.c.b16 %v2036, %v2028
        %v2725 = vpack.c.b16 %v2037, %v2029
        %v2726 = vpack.c.b16 %v2038, %v2030
        %v2727 = vpack.c.b16 %v2039, %v2031
        %v2728 = vpack.c.b16 %v2040, %v2032
        %v2729 = vpack.c.b16 %v2041, %v2033
        %v2730 = vpack.c.b16 %v2042, %v2034
        %v2731 = vpack.c.b16 %v2043, %v2035
        %v2732 = vpack.c.b16 %v2052, %v2044
        %v2733 = vpack.c.b16 %v2053, %v2045
        %v2734 = vpack.c.b16 %v2054, %v2046
        %v2735 = vpack.c.b16 %v2055, %v2047
        %v2736 = vpack.c.b16 %v2056, %v2048
        %v2737 = vpack.c.b16 %v2057, %v2049
        %v2738 = vpack.c.b16 %v2058, %v2050
        %v2739 = vpack.c.b16 %v2059, %v2051
        %v2740 = vpack.c.b16 %v2068, %v2060
        %v2741 = vpack.c.b16 %v2069, %v2061
        %v2742 = vpack.c.b16 %v2070, %v2062
        %v2743 = vpack.c.b16 %v2071, %v2063
        %v2744 = vpack.c.b16 %v2072, %v2064
        %v2745 = vpack.c.b16 %v2073, %v2065
        %v2746 = vpack.c.b16 %v2074, %v2066
        %v2747 = vpack.c.b16 %v2075, %v2067
        %v2748 = vpack.c.b16 %v2084, %v2076
        %v2749 = vpack.c.b16 %v2085, %v2077
        %v2750 = vpack.c.b16 %v2086, %v2078
        %v2751 = vpack.c.b16 %v2087, %v2079
        %v2752 = vpack.c.b16 %v2088, %v2080
        %v2753 = vpack.c.b16 %v2089, %v2081
        %v2754 = vpack.c.b16 %v2090, %v2082
        %v2755 = vpack.c.b16 %v2091, %v2083
        %v2756 = vpack.c.b16 %v2100, %v2092
        %v2757 = vpack.c.b16 %v2101, %v2093
        %v2758 = vpack.c.b16 %v2102, %v2094
        %v2759 = vpack.c.b16 %v2103, %v2095
        %v2760 = vpack.c.b16 %v2104, %v2096
        %v2761 = vpack.c.b16 %v2105, %v2097
        %v2762 = vpack.c.b16 %v2106, %v2098
        %v2763 = vpack.c.b16 %v2107, %v2099
        %v2764 = vpack.c.b16 %v2116, %v2108
        %v2765 = vpack.c.b16 %v2117, %v2109
        %v2766 = vpack.c.b16 %v2118, %v2110
        %v2767 = vpack.c.b16 %v2119, %v2111
        %v2768 = vpack.c.b16 %v2120, %v2112
        %v2769 = vpack.c.b16 %v2121, %v2113
        %v2770 = vpack.c.b16 %v2122, %v2114
        %v2771 = vpack.c.b16 %v2123, %v2115
        %v2772 = vpack.c.b16 %v2132, %v2124
        %v2773 = vpack.c.b16 %v2133, %v2125
        %v2774 = vpack.c.b16 %v2134, %v2126
        %v2775 = vpack.c.b16 %v2135, %v2127
        %v2776 = vpack.c.b16 %v2136, %v2128
        %v2777 = vpack.c.b16 %v2137, %v2129
        %v2778 = vpack.c.b16 %v2138, %v2130
        %v2779 = vpack.c.b16 %v2139, %v2131
        %v2780 = vpack.c.b16 %v2148, %v2140
        %v2781 = vpack.c.b16 %v2149, %v2141
        %v2782 = vpack.c.b16 %v2150, %v2142
        %v2783 = vpack.c.b16 %v2151, %v2143
        %v2784 = vpack.c.b16 %v2152, %v2144
        %v2785 = vpack.c.b16 %v2153, %v2145
        %v2786 = vpack.c.b16 %v2154, %v2146
        %v2787 = vpack.c.b16 %v2155, %v2147
        %v2788 = vpack.c.b16 %v2164, %v2156
        %v2789 = vpack.c.b16 %v2165, %v2157
        %v2790 = vpack.c.b16 %v2166, %v2158
        %v2791 = vpack.c.b16 %v2167, %v2159
        %v2792 = vpack.c.b16 %v2168, %v2160
        %v2793 = vpack.c.b16 %v2169, %v2161
        %v2794 = vpack.c.b16 %v2170, %v2162
        %v2795 = vpack.c.b16 %v2171, %v2163
        %v2796 = vpack.c.b16 %v2180, %v2172
        %v2797 = vpack.c.b16 %v2181, %v2173
        %v2798 = vpack.c.b16 %v2182, %v2174
        %v2799 = vpack.c.b16 %v2183, %v2175
        %v2800 = vpack.c.b16 %v2184, %v2176
        %v2801 = vpack.c.b16 %v2185, %v2177
        %v2802 = vpack.c.b16 %v2186, %v2178
        %v2803 = vpack.c.b16 %v2187, %v2179
        %v2804 = vpack.c.b16 %v2196, %v2188
        %v2805 = vpack.c.b16 %v2197, %v2189
        %v2806 = vpack.c.b16 %v2198, %v2190
        %v2807 = vpack.c.b16 %v2199, %v2191
        %v2808 = vpack.c.b16 %v2200, %v2192
        %v2809 = vpack.c.b16 %v2201, %v2193
        %v2810 = vpack.c.b16 %v2202, %v2194
        %v2811 = vpack.c.b16 %v2203, %v2195
        %v2812 = vpack.c.b16 %v2212, %v2204
        %v2813 = vpack.c.b16 %v2213, %v2205
        %v2814 = vpack.c.b16 %v2214, %v2206
        %v2815 = vpack.c.b16 %v2215, %v2207
        %v2816 = vpack.c.b16 %v2216, %v2208
        %v2817 = vpack.c.b16 %v2217, %v2209
        %v2818 = vpack.c.b16 %v2218, %v2210
        %v2819 = vpack.c.b16 %v2219, %v2211
        %v2820 = vpack.c.b16 %v2228, %v2220
        %v2821 = vpack.c.b16 %v2229, %v2221
        %v2822 = vpack.c.b16 %v2230, %v2222
        %v2823 = vpack.c.b16 %v2231, %v2223
        %v2824 = vpack.c.b16 %v2232, %v2224
        %v2825 = vpack.c.b16 %v2233, %v2225
        %v2826 = vpack.c.b16 %v2234, %v2226
        %v2827 = vpack.c.b16 %v2235, %v2227
        %v2828 = vpack.c.b16 %v2244, %v2236
        %v2829 = vpack.c.b16 %v2245, %v2237
        %v2830 = vpack.c.b16 %v2246, %v2238
        %v2831 = vpack.c.b16 %v2247, %v2239
        %v2832 = vpack.c.b16 %v2248, %v2240
        %v2833 = vpack.c.b16 %v2249, %v2241
        %v2834 = vpack.c.b16 %v2250, %v2242
        %v2835 = vpack.c.b16 %v2251, %v2243
        %v2836 = vpack.c.b16 %v2260, %v2252
        %v2837 = vpack.c.b16 %v2261, %v2253
        %v2838 = vpack.c.b16 %v2262, %v2254
        %v2839 = vpack.c.b16 %v2263, %v2255
        %v2840 = vpack.c.b16 %v2264, %v2256
        %v2841 = vpack.c.b16 %v2265, %v2257
        %v2842 = vpack.c.b16 %v2266, %v2258
        %v2843 = vpack.c.b16 %v2267, %v2259
        %v2844 = vpack.c.b16 %v2276, %v2268
        %v2845 = vpack.c.b16 %v2277, %v2269
        %v2846 = vpack.c.b16 %v2278, %v2270
        %v2847 = vpack.c.b16 %v2279, %v2271
        %v2848 = vpack.c.b16 %v2280, %v2272
        %v2849 = vpack.c.b16 %v2281, %v2273
        %v2850 = vpack.c.b16 %v2282, %v2274
        %v2851 = vpack.c.b16 %v2283, %v2275
        %v2852 = vpack.c.b16 %v2292, %v2284
        %v2853 = vpack.c.b16 %v2293, %v2285
        %v2854 = vpack.c.b16 %v2294, %v2286
        %v2855 = vpack.c.b16 %v2295, %v2287
        %v2856 = vpack.c.b16 %v2296, %v2288
        %v2857 = vpack.c.b16 %v2297, %v2289
        %v2858 = vpack.c.b16 %v2298, %v2290
        %v2859 = vpack.c.b16 %v2299, %v2291
        %v2860 = vpack.c.b16 %v2308, %v2300
        %v2861 = vpack.c.b16 %v2309, %v2301
        %v2862 = vpack.c.b16 %v2310, %v2302
        %v2863 = vpack.c.b16 %v2311, %v2303
        %v2864 = vpack.c.b16 %v2312, %v2304
        %v2865 = vpack.c.b16 %v2313, %v2305
        %v2866 = vpack.c.b16 %v2314, %v2306
        %v2867 = vpack.c.b16 %v2315, %v2307
        %v2868 = vpack.c.b16 %v2324, %v2316
        %v2869 = vpack.c.b16 %v2325, %v2317
        %v2870 = vpack.c.b16 %v2326, %v2318
        %v2871 = vpack.c.b16 %v2327, %v2319
        %v2872 = vpack.c.b16 %v2328, %v2320
        %v2873 = vpack.c.b16 %v2329, %v2321
        %v2874 = vpack.c.b16 %v2330, %v2322
        %v2875 = vpack.c.b16 %v2331, %v2323
        %v2876 = vpack.c.b16 %v2340, %v2332
        %v2877 = vpack.c.b16 %v2341, %v2333
        %v2878 = vpack.c.b16 %v2342, %v2334
        %v2879 = vpack.c.b16 %v2343, %v2335
        %v2880 = vpack.c.b16 %v2344, %v2336
        %v2881 = vpack.c.b16 %v2345, %v2337
        %v2882 = vpack.c.b16 %v2346, %v2338
        %v2883 = vpack.c.b16 %v2347, %v2339
        %v2884 = vpack.c.b16 %v2356, %v2348
        %v2885 = vpack.c.b16 %v2357, %v2349
        %v2886 = vpack.c.b16 %v2358, %v2350
        %v2887 = vpack.c.b16 %v2359, %v2351
        %v2888 = vpack.c.b16 %v2360, %v2352
        %v2889 = vpack.c.b16 %v2361, %v2353
        %v2890 = vpack.c.b16 %v2362, %v2354
        %v2891 = vpack.c.b16 %v2363, %v2355
        %v2892 = vpack.c.b16 %v2372, %v2364
        %v2893 = vpack.c.b16 %v2373, %v2365
        %v2894 = vpack.c.b16 %v2374, %v2366
        %v2895 = vpack.c.b16 %v2375, %v2367
        %v2896 = vpack.c.b16 %v2376, %v2368
        %v2897 = vpack.c.b16 %v2377, %v2369
        %v2898 = vpack.c.b16 %v2378, %v2370
        %v2899 = vpack.c.b16 %v2379, %v2371
        %v2900 = vpack.c.b16 %v2388, %v2380
        %v2901 = vpack.c.b16 %v2389, %v2381
        %v2902 = vpack.c.b16 %v2390, %v2382
        %v2903 = vpack.c.b16 %v2391, %v2383
        %v2904 = vpack.c.b16 %v2392, %v2384
        %v2905 = vpack.c.b16 %v2393, %v2385
        %v2906 = vpack.c.b16 %v2394, %v2386
        %v2907 = vpack.c.b16 %v2395, %v2387
        %3420 = vmatpush.bf16.msra.mxu0 %v2452
        %3421 = vmatpush.bf16.msra.mxu0 %v2444
        %3422 = vmatpush.bf16.msra.mxu0 %v2436
        %3423 = vmatpush.bf16.msra.mxu0 %v2428
        %3424 = vmatpush.bf16.msra.mxu0 %v2420
        %3425 = vmatpush.bf16.msra.mxu0 %v2412
        %3426 = vmatpush.bf16.msra.mxu0 %v2404
        %3427 = vmatpush.bf16.msra.mxu0 %v2396
        %3428 = vmatmul.bf16.gmra.mxu0 %v340
        %v3429 = vpop.f32.mrf.mxu0
        %v3430 = vadd.f32 0.0, %v3429
        %v3431 = vpop.f32.mrf.mxu0
        %v3432 = vadd.f32 0.0, %v3431
        %3433 = vdwg.mxu0
        %3434 = vmatpush.bf16.msra.mxu0 %v2516
        %3435 = vmatpush.bf16.msra.mxu0 %v2508
        %3436 = vmatpush.bf16.msra.mxu0 %v2500
        %3437 = vmatpush.bf16.msra.mxu0 %v2492
        %3438 = vmatpush.bf16.msra.mxu0 %v2484
        %3439 = vmatpush.bf16.msra.mxu0 %v2476
        %3440 = vmatpush.bf16.msra.mxu0 %v2468
        %3441 = vmatpush.bf16.msra.mxu0 %v2460
        %3442 = vmatmul.bf16.gmra.mxu0 %v341
        %v3443 = vpop.f32.mrf.mxu0
        %v3444 = vadd.f32 %v3430, %v3443
        %v3445 = vpop.f32.mrf.mxu0
        %v3446 = vadd.f32 %v3432, %v3445
        %3447 = vdwg.mxu0
        %3448 = vmatpush.bf16.msra.mxu0 %v2580
        %3449 = vmatpush.bf16.msra.mxu0 %v2572
        %3450 = vmatpush.bf16.msra.mxu0 %v2564
        %3451 = vmatpush.bf16.msra.mxu0 %v2556
        %3452 = vmatpush.bf16.msra.mxu0 %v2548
        %3453 = vmatpush.bf16.msra.mxu0 %v2540
        %3454 = vmatpush.bf16.msra.mxu0 %v2532
        %3455 = vmatpush.bf16.msra.mxu0 %v2524
        %3456 = vmatmul.bf16.gmra.mxu0 %v342
        %v3457 = vpop.f32.mrf.mxu0
        %v3458 = vadd.f32 %v3444, %v3457
        %v3459 = vpop.f32.mrf.mxu0
        %v3460 = vadd.f32 %v3446, %v3459
        %3461 = vdwg.mxu0
        %3462 = vmatpush.bf16.msra.mxu0 %v2644
        %3463 = vmatpush.bf16.msra.mxu0 %v2636
        %3464 = vmatpush.bf16.msra.mxu0 %v2628
        %3465 = vmatpush.bf16.msra.mxu0 %v2620
        %3466 = vmatpush.bf16.msra.mxu0 %v2612
        %3467 = vmatpush.bf16.msra.mxu0 %v2604
        %3468 = vmatpush.bf16.msra.mxu0 %v2596
        %3469 = vmatpush.bf16.msra.mxu0 %v2588
        %3470 = vmatmul.bf16.gmra.mxu0 %v343
        %v3471 = vpop.f32.mrf.mxu0
        %v3472 = vadd.f32 %v3458, %v3471
        %v3473 = vpop.f32.mrf.mxu0
        %v3474 = vadd.f32 %v3460, %v3473
        %3475 = vdwg.mxu0
        %3476 = vmatpush.bf16.msra.mxu0 %v2708
        %3477 = vmatpush.bf16.msra.mxu0 %v2700
        %3478 = vmatpush.bf16.msra.mxu0 %v2692
        %3479 = vmatpush.bf16.msra.mxu0 %v2684
        %3480 = vmatpush.bf16.msra.mxu0 %v2676
        %3481 = vmatpush.bf16.msra.mxu0 %v2668
        %3482 = vmatpush.bf16.msra.mxu0 %v2660
        %3483 = vmatpush.bf16.msra.mxu0 %v2652
        %3484 = vmatmul.bf16.gmra.mxu0 %v344
        %v3485 = vpop.f32.mrf.mxu0
        %v3486 = vadd.f32 %v3472, %v3485
        %v3487 = vpop.f32.mrf.mxu0
        %v3488 = vadd.f32 %v3474, %v3487
        %3489 = vdwg.mxu0
        %3490 = vmatpush.bf16.msra.mxu0 %v2772
        %3491 = vmatpush.bf16.msra.mxu0 %v2764
        %3492 = vmatpush.bf16.msra.mxu0 %v2756
        %3493 = vmatpush.bf16.msra.mxu0 %v2748
        %3494 = vmatpush.bf16.msra.mxu0 %v2740
        %3495 = vmatpush.bf16.msra.mxu0 %v2732
        %3496 = vmatpush.bf16.msra.mxu0 %v2724
        %3497 = vmatpush.bf16.msra.mxu0 %v2716
        %3498 = vmatmul.bf16.gmra.mxu0 %v345
        %v3499 = vpop.f32.mrf.mxu0
        %v3500 = vadd.f32 %v3486, %v3499
        %v3501 = vpop.f32.mrf.mxu0
        %v3502 = vadd.f32 %v3488, %v3501
        %3503 = vdwg.mxu0
        %3504 = vmatpush.bf16.msra.mxu0 %v2836
        %3505 = vmatpush.bf16.msra.mxu0 %v2828
        %3506 = vmatpush.bf16.msra.mxu0 %v2820
        %3507 = vmatpush.bf16.msra.mxu0 %v2812
        %3508 = vmatpush.bf16.msra.mxu0 %v2804
        %3509 = vmatpush.bf16.msra.mxu0 %v2796
        %3510 = vmatpush.bf16.msra.mxu0 %v2788
        %3511 = vmatpush.bf16.msra.mxu0 %v2780
        %3512 = vmatmul.bf16.gmra.mxu0 %v346
        %v3513 = vpop.f32.mrf.mxu0
        %v3514 = vadd.f32 %v3500, %v3513
        %v3515 = vpop.f32.mrf.mxu0
        %v3516 = vadd.f32 %v3502, %v3515
        %3517 = vdwg.mxu0
        %3518 = vmatpush.bf16.msra.mxu0 %v2900
        %3519 = vmatpush.bf16.msra.mxu0 %v2892
        %3520 = vmatpush.bf16.msra.mxu0 %v2884
        %3521 = vmatpush.bf16.msra.mxu0 %v2876
        %3522 = vmatpush.bf16.msra.mxu0 %v2868
        %3523 = vmatpush.bf16.msra.mxu0 %v2860
        %3524 = vmatpush.bf16.msra.mxu0 %v2852
        %3525 = vmatpush.bf16.msra.mxu0 %v2844
        %3526 = vmatmul.bf16.gmra.mxu0 %v347
        %v3527 = vpop.f32.mrf.mxu0
        %v3528 = vadd.f32 %v3514, %v3527
        %v3529 = vpop.f32.mrf.mxu0
        %v3530 = vadd.f32 %v3516, %v3529
        %3531 = vdwg.mxu0
        %3532 = vmatpush.bf16.msra.mxu0 %v2453
        %3533 = vmatpush.bf16.msra.mxu0 %v2445
        %3534 = vmatpush.bf16.msra.mxu0 %v2437
        %3535 = vmatpush.bf16.msra.mxu0 %v2429
        %3536 = vmatpush.bf16.msra.mxu0 %v2421
        %3537 = vmatpush.bf16.msra.mxu0 %v2413
        %3538 = vmatpush.bf16.msra.mxu0 %v2405
        %3539 = vmatpush.bf16.msra.mxu0 %v2397
        %3540 = vmatmul.bf16.gmra.mxu0 %v340
        %v3541 = vpop.f32.mrf.mxu0
        %v3542 = vadd.f32 0.0, %v3541
        %v3543 = vpop.f32.mrf.mxu0
        %v3544 = vadd.f32 0.0, %v3543
        %3545 = vdwg.mxu0
        %3546 = vmatpush.bf16.msra.mxu0 %v2517
        %3547 = vmatpush.bf16.msra.mxu0 %v2509
        %3548 = vmatpush.bf16.msra.mxu0 %v2501
        %3549 = vmatpush.bf16.msra.mxu0 %v2493
        %3550 = vmatpush.bf16.msra.mxu0 %v2485
        %3551 = vmatpush.bf16.msra.mxu0 %v2477
        %3552 = vmatpush.bf16.msra.mxu0 %v2469
        %3553 = vmatpush.bf16.msra.mxu0 %v2461
        %3554 = vmatmul.bf16.gmra.mxu0 %v341
        %v3555 = vpop.f32.mrf.mxu0
        %v3556 = vadd.f32 %v3542, %v3555
        %v3557 = vpop.f32.mrf.mxu0
        %v3558 = vadd.f32 %v3544, %v3557
        %3559 = vdwg.mxu0
        %3560 = vmatpush.bf16.msra.mxu0 %v2581
        %3561 = vmatpush.bf16.msra.mxu0 %v2573
        %3562 = vmatpush.bf16.msra.mxu0 %v2565
        %3563 = vmatpush.bf16.msra.mxu0 %v2557
        %3564 = vmatpush.bf16.msra.mxu0 %v2549
        %3565 = vmatpush.bf16.msra.mxu0 %v2541
        %3566 = vmatpush.bf16.msra.mxu0 %v2533
        %3567 = vmatpush.bf16.msra.mxu0 %v2525
        %3568 = vmatmul.bf16.gmra.mxu0 %v342
        %v3569 = vpop.f32.mrf.mxu0
        %v3570 = vadd.f32 %v3556, %v3569
        %v3571 = vpop.f32.mrf.mxu0
        %v3572 = vadd.f32 %v3558, %v3571
        %3573 = vdwg.mxu0
        %3574 = vmatpush.bf16.msra.mxu0 %v2645
        %3575 = vmatpush.bf16.msra.mxu0 %v2637
        %3576 = vmatpush.bf16.msra.mxu0 %v2629
        %3577 = vmatpush.bf16.msra.mxu0 %v2621
        %3578 = vmatpush.bf16.msra.mxu0 %v2613
        %3579 = vmatpush.bf16.msra.mxu0 %v2605
        %3580 = vmatpush.bf16.msra.mxu0 %v2597
        %3581 = vmatpush.bf16.msra.mxu0 %v2589
        %3582 = vmatmul.bf16.gmra.mxu0 %v343
        %v3583 = vpop.f32.mrf.mxu0
        %v3584 = vadd.f32 %v3570, %v3583
        %v3585 = vpop.f32.mrf.mxu0
        %v3586 = vadd.f32 %v3572, %v3585
        %3587 = vdwg.mxu0
        %3588 = vmatpush.bf16.msra.mxu0 %v2709
        %3589 = vmatpush.bf16.msra.mxu0 %v2701
        %3590 = vmatpush.bf16.msra.mxu0 %v2693
        %3591 = vmatpush.bf16.msra.mxu0 %v2685
        %3592 = vmatpush.bf16.msra.mxu0 %v2677
        %3593 = vmatpush.bf16.msra.mxu0 %v2669
        %3594 = vmatpush.bf16.msra.mxu0 %v2661
        %3595 = vmatpush.bf16.msra.mxu0 %v2653
        %3596 = vmatmul.bf16.gmra.mxu0 %v344
        %v3597 = vpop.f32.mrf.mxu0
        %v3598 = vadd.f32 %v3584, %v3597
        %v3599 = vpop.f32.mrf.mxu0
        %v3600 = vadd.f32 %v3586, %v3599
        %3601 = vdwg.mxu0
        %3602 = vmatpush.bf16.msra.mxu0 %v2773
        %3603 = vmatpush.bf16.msra.mxu0 %v2765
        %3604 = vmatpush.bf16.msra.mxu0 %v2757
        %3605 = vmatpush.bf16.msra.mxu0 %v2749
        %3606 = vmatpush.bf16.msra.mxu0 %v2741
        %3607 = vmatpush.bf16.msra.mxu0 %v2733
        %3608 = vmatpush.bf16.msra.mxu0 %v2725
        %3609 = vmatpush.bf16.msra.mxu0 %v2717
        %3610 = vmatmul.bf16.gmra.mxu0 %v345
        %v3611 = vpop.f32.mrf.mxu0
        %v3612 = vadd.f32 %v3598, %v3611
        %v3613 = vpop.f32.mrf.mxu0
        %v3614 = vadd.f32 %v3600, %v3613
        %3615 = vdwg.mxu0
        %3616 = vmatpush.bf16.msra.mxu0 %v2837
        %3617 = vmatpush.bf16.msra.mxu0 %v2829
        %3618 = vmatpush.bf16.msra.mxu0 %v2821
        %3619 = vmatpush.bf16.msra.mxu0 %v2813
        %3620 = vmatpush.bf16.msra.mxu0 %v2805
        %3621 = vmatpush.bf16.msra.mxu0 %v2797
        %3622 = vmatpush.bf16.msra.mxu0 %v2789
        %3623 = vmatpush.bf16.msra.mxu0 %v2781
        %3624 = vmatmul.bf16.gmra.mxu0 %v346
        %v3625 = vpop.f32.mrf.mxu0
        %v3626 = vadd.f32 %v3612, %v3625
        %v3627 = vpop.f32.mrf.mxu0
        %v3628 = vadd.f32 %v3614, %v3627
        %3629 = vdwg.mxu0
        %3630 = vmatpush.bf16.msra.mxu0 %v2901
        %3631 = vmatpush.bf16.msra.mxu0 %v2893
        %3632 = vmatpush.bf16.msra.mxu0 %v2885
        %3633 = vmatpush.bf16.msra.mxu0 %v2877
        %3634 = vmatpush.bf16.msra.mxu0 %v2869
        %3635 = vmatpush.bf16.msra.mxu0 %v2861
        %3636 = vmatpush.bf16.msra.mxu0 %v2853
        %3637 = vmatpush.bf16.msra.mxu0 %v2845
        %3638 = vmatmul.bf16.gmra.mxu0 %v347
        %v3639 = vpop.f32.mrf.mxu0
        %v3640 = vadd.f32 %v3626, %v3639
        %v3641 = vpop.f32.mrf.mxu0
        %v3642 = vadd.f32 %v3628, %v3641
        %3643 = vdwg.mxu0
        %3644 = vmatpush.bf16.msra.mxu0 %v2454
        %3645 = vmatpush.bf16.msra.mxu0 %v2446
        %3646 = vmatpush.bf16.msra.mxu0 %v2438
        %3647 = vmatpush.bf16.msra.mxu0 %v2430
        %3648 = vmatpush.bf16.msra.mxu0 %v2422
        %3649 = vmatpush.bf16.msra.mxu0 %v2414
        %3650 = vmatpush.bf16.msra.mxu0 %v2406
        %3651 = vmatpush.bf16.msra.mxu0 %v2398
        %3652 = vmatmul.bf16.gmra.mxu0 %v340
        %v3653 = vpop.f32.mrf.mxu0
        %v3654 = vadd.f32 0.0, %v3653
        %v3655 = vpop.f32.mrf.mxu0
        %v3656 = vadd.f32 0.0, %v3655
        %3657 = vdwg.mxu0
        %3658 = vmatpush.bf16.msra.mxu0 %v2518
        %3659 = vmatpush.bf16.msra.mxu0 %v2510
        %3660 = vmatpush.bf16.msra.mxu0 %v2502
        %3661 = vmatpush.bf16.msra.mxu0 %v2494
        %3662 = vmatpush.bf16.msra.mxu0 %v2486
        %3663 = vmatpush.bf16.msra.mxu0 %v2478
        %3664 = vmatpush.bf16.msra.mxu0 %v2470
        %3665 = vmatpush.bf16.msra.mxu0 %v2462
        %3666 = vmatmul.bf16.gmra.mxu0 %v341
        %v3667 = vpop.f32.mrf.mxu0
        %v3668 = vadd.f32 %v3654, %v3667
        %v3669 = vpop.f32.mrf.mxu0
        %v3670 = vadd.f32 %v3656, %v3669
        %3671 = vdwg.mxu0
        %3672 = vmatpush.bf16.msra.mxu0 %v2582
        %3673 = vmatpush.bf16.msra.mxu0 %v2574
        %3674 = vmatpush.bf16.msra.mxu0 %v2566
        %3675 = vmatpush.bf16.msra.mxu0 %v2558
        %3676 = vmatpush.bf16.msra.mxu0 %v2550
        %3677 = vmatpush.bf16.msra.mxu0 %v2542
        %3678 = vmatpush.bf16.msra.mxu0 %v2534
        %3679 = vmatpush.bf16.msra.mxu0 %v2526
        %3680 = vmatmul.bf16.gmra.mxu0 %v342
        %v3681 = vpop.f32.mrf.mxu0
        %v3682 = vadd.f32 %v3668, %v3681
        %v3683 = vpop.f32.mrf.mxu0
        %v3684 = vadd.f32 %v3670, %v3683
        %3685 = vdwg.mxu0
        %3686 = vmatpush.bf16.msra.mxu0 %v2646
        %3687 = vmatpush.bf16.msra.mxu0 %v2638
        %3688 = vmatpush.bf16.msra.mxu0 %v2630
        %3689 = vmatpush.bf16.msra.mxu0 %v2622
        %3690 = vmatpush.bf16.msra.mxu0 %v2614
        %3691 = vmatpush.bf16.msra.mxu0 %v2606
        %3692 = vmatpush.bf16.msra.mxu0 %v2598
        %3693 = vmatpush.bf16.msra.mxu0 %v2590
        %3694 = vmatmul.bf16.gmra.mxu0 %v343
        %v3695 = vpop.f32.mrf.mxu0
        %v3696 = vadd.f32 %v3682, %v3695
        %v3697 = vpop.f32.mrf.mxu0
        %v3698 = vadd.f32 %v3684, %v3697
        %3699 = vdwg.mxu0
        %3700 = vmatpush.bf16.msra.mxu0 %v2710
        %3701 = vmatpush.bf16.msra.mxu0 %v2702
        %3702 = vmatpush.bf16.msra.mxu0 %v2694
        %3703 = vmatpush.bf16.msra.mxu0 %v2686
        %3704 = vmatpush.bf16.msra.mxu0 %v2678
        %3705 = vmatpush.bf16.msra.mxu0 %v2670
        %3706 = vmatpush.bf16.msra.mxu0 %v2662
        %3707 = vmatpush.bf16.msra.mxu0 %v2654
        %3708 = vmatmul.bf16.gmra.mxu0 %v344
        %v3709 = vpop.f32.mrf.mxu0
        %v3710 = vadd.f32 %v3696, %v3709
        %v3711 = vpop.f32.mrf.mxu0
        %v3712 = vadd.f32 %v3698, %v3711
        %3713 = vdwg.mxu0
        %3714 = vmatpush.bf16.msra.mxu0 %v2774
        %3715 = vmatpush.bf16.msra.mxu0 %v2766
        %3716 = vmatpush.bf16.msra.mxu0 %v2758
        %3717 = vmatpush.bf16.msra.mxu0 %v2750
        %3718 = vmatpush.bf16.msra.mxu0 %v2742
        %3719 = vmatpush.bf16.msra.mxu0 %v2734
        %3720 = vmatpush.bf16.msra.mxu0 %v2726
        %3721 = vmatpush.bf16.msra.mxu0 %v2718
        %3722 = vmatmul.bf16.gmra.mxu0 %v345
        %v3723 = vpop.f32.mrf.mxu0
        %v3724 = vadd.f32 %v3710, %v3723
        %v3725 = vpop.f32.mrf.mxu0
        %v3726 = vadd.f32 %v3712, %v3725
        %3727 = vdwg.mxu0
        %3728 = vmatpush.bf16.msra.mxu0 %v2838
        %3729 = vmatpush.bf16.msra.mxu0 %v2830
        %3730 = vmatpush.bf16.msra.mxu0 %v2822
        %3731 = vmatpush.bf16.msra.mxu0 %v2814
        %3732 = vmatpush.bf16.msra.mxu0 %v2806
        %3733 = vmatpush.bf16.msra.mxu0 %v2798
        %3734 = vmatpush.bf16.msra.mxu0 %v2790
        %3735 = vmatpush.bf16.msra.mxu0 %v2782
        %3736 = vmatmul.bf16.gmra.mxu0 %v346
        %v3737 = vpop.f32.mrf.mxu0
        %v3738 = vadd.f32 %v3724, %v3737
        %v3739 = vpop.f32.mrf.mxu0
        %v3740 = vadd.f32 %v3726, %v3739
        %3741 = vdwg.mxu0
        %3742 = vmatpush.bf16.msra.mxu0 %v2902
        %3743 = vmatpush.bf16.msra.mxu0 %v2894
        %3744 = vmatpush.bf16.msra.mxu0 %v2886
        %3745 = vmatpush.bf16.msra.mxu0 %v2878
        %3746 = vmatpush.bf16.msra.mxu0 %v2870
        %3747 = vmatpush.bf16.msra.mxu0 %v2862
        %3748 = vmatpush.bf16.msra.mxu0 %v2854
        %3749 = vmatpush.bf16.msra.mxu0 %v2846
        %3750 = vmatmul.bf16.gmra.mxu0 %v347
        %v3751 = vpop.f32.mrf.mxu0
        %v3752 = vadd.f32 %v3738, %v3751
        %v3753 = vpop.f32.mrf.mxu0
        %v3754 = vadd.f32 %v3740, %v3753
        %3755 = vdwg.mxu0
        %3756 = vmatpush.bf16.msra.mxu0 %v2455
        %3757 = vmatpush.bf16.msra.mxu0 %v2447
        %3758 = vmatpush.bf16.msra.mxu0 %v2439
        %3759 = vmatpush.bf16.msra.mxu0 %v2431
        %3760 = vmatpush.bf16.msra.mxu0 %v2423
        %3761 = vmatpush.bf16.msra.mxu0 %v2415
        %3762 = vmatpush.bf16.msra.mxu0 %v2407
        %3763 = vmatpush.bf16.msra.mxu0 %v2399
        %3764 = vmatmul.bf16.gmra.mxu0 %v340
        %v3765 = vpop.f32.mrf.mxu0
        %v3766 = vadd.f32 0.0, %v3765
        %v3767 = vpop.f32.mrf.mxu0
        %v3768 = vadd.f32 0.0, %v3767
        %3769 = vdwg.mxu0
        %3770 = vmatpush.bf16.msra.mxu0 %v2519
        %3771 = vmatpush.bf16.msra.mxu0 %v2511
        %3772 = vmatpush.bf16.msra.mxu0 %v2503
        %3773 = vmatpush.bf16.msra.mxu0 %v2495
        %3774 = vmatpush.bf16.msra.mxu0 %v2487
        %3775 = vmatpush.bf16.msra.mxu0 %v2479
        %3776 = vmatpush.bf16.msra.mxu0 %v2471
        %3777 = vmatpush.bf16.msra.mxu0 %v2463
        %3778 = vmatmul.bf16.gmra.mxu0 %v341
        %v3779 = vpop.f32.mrf.mxu0
        %v3780 = vadd.f32 %v3766, %v3779
        %v3781 = vpop.f32.mrf.mxu0
        %v3782 = vadd.f32 %v3768, %v3781
        %3783 = vdwg.mxu0
        %3784 = vmatpush.bf16.msra.mxu0 %v2583
        %3785 = vmatpush.bf16.msra.mxu0 %v2575
        %3786 = vmatpush.bf16.msra.mxu0 %v2567
        %3787 = vmatpush.bf16.msra.mxu0 %v2559
        %3788 = vmatpush.bf16.msra.mxu0 %v2551
        %3789 = vmatpush.bf16.msra.mxu0 %v2543
        %3790 = vmatpush.bf16.msra.mxu0 %v2535
        %3791 = vmatpush.bf16.msra.mxu0 %v2527
        %3792 = vmatmul.bf16.gmra.mxu0 %v342
        %v3793 = vpop.f32.mrf.mxu0
        %v3794 = vadd.f32 %v3780, %v3793
        %v3795 = vpop.f32.mrf.mxu0
        %v3796 = vadd.f32 %v3782, %v3795
        %3797 = vdwg.mxu0
        %3798 = vmatpush.bf16.msra.mxu0 %v2647
        %3799 = vmatpush.bf16.msra.mxu0 %v2639
        %3800 = vmatpush.bf16.msra.mxu0 %v2631
        %3801 = vmatpush.bf16.msra.mxu0 %v2623
        %3802 = vmatpush.bf16.msra.mxu0 %v2615
        %3803 = vmatpush.bf16.msra.mxu0 %v2607
        %3804 = vmatpush.bf16.msra.mxu0 %v2599
        %3805 = vmatpush.bf16.msra.mxu0 %v2591
        %3806 = vmatmul.bf16.gmra.mxu0 %v343
        %v3807 = vpop.f32.mrf.mxu0
        %v3808 = vadd.f32 %v3794, %v3807
        %v3809 = vpop.f32.mrf.mxu0
        %v3810 = vadd.f32 %v3796, %v3809
        %3811 = vdwg.mxu0
        %3812 = vmatpush.bf16.msra.mxu0 %v2711
        %3813 = vmatpush.bf16.msra.mxu0 %v2703
        %3814 = vmatpush.bf16.msra.mxu0 %v2695
        %3815 = vmatpush.bf16.msra.mxu0 %v2687
        %3816 = vmatpush.bf16.msra.mxu0 %v2679
        %3817 = vmatpush.bf16.msra.mxu0 %v2671
        %3818 = vmatpush.bf16.msra.mxu0 %v2663
        %3819 = vmatpush.bf16.msra.mxu0 %v2655
        %3820 = vmatmul.bf16.gmra.mxu0 %v344
        %v3821 = vpop.f32.mrf.mxu0
        %v3822 = vadd.f32 %v3808, %v3821
        %v3823 = vpop.f32.mrf.mxu0
        %v3824 = vadd.f32 %v3810, %v3823
        %3825 = vdwg.mxu0
        %3826 = vmatpush.bf16.msra.mxu0 %v2775
        %3827 = vmatpush.bf16.msra.mxu0 %v2767
        %3828 = vmatpush.bf16.msra.mxu0 %v2759
        %3829 = vmatpush.bf16.msra.mxu0 %v2751
        %3830 = vmatpush.bf16.msra.mxu0 %v2743
        %3831 = vmatpush.bf16.msra.mxu0 %v2735
        %3832 = vmatpush.bf16.msra.mxu0 %v2727
        %3833 = vmatpush.bf16.msra.mxu0 %v2719
        %3834 = vmatmul.bf16.gmra.mxu0 %v345
        %v3835 = vpop.f32.mrf.mxu0
        %v3836 = vadd.f32 %v3822, %v3835
        %v3837 = vpop.f32.mrf.mxu0
        %v3838 = vadd.f32 %v3824, %v3837
        %3839 = vdwg.mxu0
        %3840 = vmatpush.bf16.msra.mxu0 %v2839
        %3841 = vmatpush.bf16.msra.mxu0 %v2831
        %3842 = vmatpush.bf16.msra.mxu0 %v2823
        %3843 = vmatpush.bf16.msra.mxu0 %v2815
        %3844 = vmatpush.bf16.msra.mxu0 %v2807
        %3845 = vmatpush.bf16.msra.mxu0 %v2799
        %3846 = vmatpush.bf16.msra.mxu0 %v2791
        %3847 = vmatpush.bf16.msra.mxu0 %v2783
        %3848 = vmatmul.bf16.gmra.mxu0 %v346
        %v3849 = vpop.f32.mrf.mxu0
        %v3850 = vadd.f32 %v3836, %v3849
        %v3851 = vpop.f32.mrf.mxu0
        %v3852 = vadd.f32 %v3838, %v3851
        %3853 = vdwg.mxu0
        %3854 = vmatpush.bf16.msra.mxu0 %v2903
        %3855 = vmatpush.bf16.msra.mxu0 %v2895
        %3856 = vmatpush.bf16.msra.mxu0 %v2887
        %3857 = vmatpush.bf16.msra.mxu0 %v2879
        %3858 = vmatpush.bf16.msra.mxu0 %v2871
        %3859 = vmatpush.bf16.msra.mxu0 %v2863
        %3860 = vmatpush.bf16.msra.mxu0 %v2855
        %3861 = vmatpush.bf16.msra.mxu0 %v2847
        %3862 = vmatmul.bf16.gmra.mxu0 %v347
        %v3863 = vpop.f32.mrf.mxu0
        %v3864 = vadd.f32 %v3850, %v3863
        %v3865 = vpop.f32.mrf.mxu0
        %v3866 = vadd.f32 %v3852, %v3865
        %3867 = vdwg.mxu0
        %3868 = vmatpush.bf16.msra.mxu0 %v2456
        %3869 = vmatpush.bf16.msra.mxu0 %v2448
        %3870 = vmatpush.bf16.msra.mxu0 %v2440
        %3871 = vmatpush.bf16.msra.mxu0 %v2432
        %3872 = vmatpush.bf16.msra.mxu0 %v2424
        %3873 = vmatpush.bf16.msra.mxu0 %v2416
        %3874 = vmatpush.bf16.msra.mxu0 %v2408
        %3875 = vmatpush.bf16.msra.mxu0 %v2400
        %3876 = vmatmul.bf16.gmra.mxu0 %v340
        %v3877 = vpop.f32.mrf.mxu0
        %v3878 = vadd.f32 0.0, %v3877
        %v3879 = vpop.f32.mrf.mxu0
        %v3880 = vadd.f32 0.0, %v3879
        %3881 = vdwg.mxu0
        %3882 = vmatpush.bf16.msra.mxu0 %v2520
        %3883 = vmatpush.bf16.msra.mxu0 %v2512
        %3884 = vmatpush.bf16.msra.mxu0 %v2504
        %3885 = vmatpush.bf16.msra.mxu0 %v2496
        %3886 = vmatpush.bf16.msra.mxu0 %v2488
        %3887 = vmatpush.bf16.msra.mxu0 %v2480
        %3888 = vmatpush.bf16.msra.mxu0 %v2472
        %3889 = vmatpush.bf16.msra.mxu0 %v2464
        %3890 = vmatmul.bf16.gmra.mxu0 %v341
        %v3891 = vpop.f32.mrf.mxu0
        %v3892 = vadd.f32 %v3878, %v3891
        %v3893 = vpop.f32.mrf.mxu0
        %v3894 = vadd.f32 %v3880, %v3893
        %3895 = vdwg.mxu0
        %3896 = vmatpush.bf16.msra.mxu0 %v2584
        %3897 = vmatpush.bf16.msra.mxu0 %v2576
        %3898 = vmatpush.bf16.msra.mxu0 %v2568
        %3899 = vmatpush.bf16.msra.mxu0 %v2560
        %3900 = vmatpush.bf16.msra.mxu0 %v2552
        %3901 = vmatpush.bf16.msra.mxu0 %v2544
        %3902 = vmatpush.bf16.msra.mxu0 %v2536
        %3903 = vmatpush.bf16.msra.mxu0 %v2528
        %3904 = vmatmul.bf16.gmra.mxu0 %v342
        %v3905 = vpop.f32.mrf.mxu0
        %v3906 = vadd.f32 %v3892, %v3905
        %v3907 = vpop.f32.mrf.mxu0
        %v3908 = vadd.f32 %v3894, %v3907
        %3909 = vdwg.mxu0
        %3910 = vmatpush.bf16.msra.mxu0 %v2648
        %3911 = vmatpush.bf16.msra.mxu0 %v2640
        %3912 = vmatpush.bf16.msra.mxu0 %v2632
        %3913 = vmatpush.bf16.msra.mxu0 %v2624
        %3914 = vmatpush.bf16.msra.mxu0 %v2616
        %3915 = vmatpush.bf16.msra.mxu0 %v2608
        %3916 = vmatpush.bf16.msra.mxu0 %v2600
        %3917 = vmatpush.bf16.msra.mxu0 %v2592
        %3918 = vmatmul.bf16.gmra.mxu0 %v343
        %v3919 = vpop.f32.mrf.mxu0
        %v3920 = vadd.f32 %v3906, %v3919
        %v3921 = vpop.f32.mrf.mxu0
        %v3922 = vadd.f32 %v3908, %v3921
        %3923 = vdwg.mxu0
        %3924 = vmatpush.bf16.msra.mxu0 %v2712
        %3925 = vmatpush.bf16.msra.mxu0 %v2704
        %3926 = vmatpush.bf16.msra.mxu0 %v2696
        %3927 = vmatpush.bf16.msra.mxu0 %v2688
        %3928 = vmatpush.bf16.msra.mxu0 %v2680
        %3929 = vmatpush.bf16.msra.mxu0 %v2672
        %3930 = vmatpush.bf16.msra.mxu0 %v2664
        %3931 = vmatpush.bf16.msra.mxu0 %v2656
        %3932 = vmatmul.bf16.gmra.mxu0 %v344
        %v3933 = vpop.f32.mrf.mxu0
        %v3934 = vadd.f32 %v3920, %v3933
        %v3935 = vpop.f32.mrf.mxu0
        %v3936 = vadd.f32 %v3922, %v3935
        %3937 = vdwg.mxu0
        %3938 = vmatpush.bf16.msra.mxu0 %v2776
        %3939 = vmatpush.bf16.msra.mxu0 %v2768
        %3940 = vmatpush.bf16.msra.mxu0 %v2760
        %3941 = vmatpush.bf16.msra.mxu0 %v2752
        %3942 = vmatpush.bf16.msra.mxu0 %v2744
        %3943 = vmatpush.bf16.msra.mxu0 %v2736
        %3944 = vmatpush.bf16.msra.mxu0 %v2728
        %3945 = vmatpush.bf16.msra.mxu0 %v2720
        %3946 = vmatmul.bf16.gmra.mxu0 %v345
        %v3947 = vpop.f32.mrf.mxu0
        %v3948 = vadd.f32 %v3934, %v3947
        %v3949 = vpop.f32.mrf.mxu0
        %v3950 = vadd.f32 %v3936, %v3949
        %3951 = vdwg.mxu0
        %3952 = vmatpush.bf16.msra.mxu0 %v2840
        %3953 = vmatpush.bf16.msra.mxu0 %v2832
        %3954 = vmatpush.bf16.msra.mxu0 %v2824
        %3955 = vmatpush.bf16.msra.mxu0 %v2816
        %3956 = vmatpush.bf16.msra.mxu0 %v2808
        %3957 = vmatpush.bf16.msra.mxu0 %v2800
        %3958 = vmatpush.bf16.msra.mxu0 %v2792
        %3959 = vmatpush.bf16.msra.mxu0 %v2784
        %3960 = vmatmul.bf16.gmra.mxu0 %v346
        %v3961 = vpop.f32.mrf.mxu0
        %v3962 = vadd.f32 %v3948, %v3961
        %v3963 = vpop.f32.mrf.mxu0
        %v3964 = vadd.f32 %v3950, %v3963
        %3965 = vdwg.mxu0
        %3966 = vmatpush.bf16.msra.mxu0 %v2904
        %3967 = vmatpush.bf16.msra.mxu0 %v2896
        %3968 = vmatpush.bf16.msra.mxu0 %v2888
        %3969 = vmatpush.bf16.msra.mxu0 %v2880
        %3970 = vmatpush.bf16.msra.mxu0 %v2872
        %3971 = vmatpush.bf16.msra.mxu0 %v2864
        %3972 = vmatpush.bf16.msra.mxu0 %v2856
        %3973 = vmatpush.bf16.msra.mxu0 %v2848
        %3974 = vmatmul.bf16.gmra.mxu0 %v347
        %v3975 = vpop.f32.mrf.mxu0
        %v3976 = vadd.f32 %v3962, %v3975
        %v3977 = vpop.f32.mrf.mxu0
        %v3978 = vadd.f32 %v3964, %v3977
        %3979 = vdwg.mxu0
        %3980 = vmatpush.bf16.msra.mxu0 %v2457
        %3981 = vmatpush.bf16.msra.mxu0 %v2449
        %3982 = vmatpush.bf16.msra.mxu0 %v2441
        %3983 = vmatpush.bf16.msra.mxu0 %v2433
        %3984 = vmatpush.bf16.msra.mxu0 %v2425
        %3985 = vmatpush.bf16.msra.mxu0 %v2417
        %3986 = vmatpush.bf16.msra.mxu0 %v2409
        %3987 = vmatpush.bf16.msra.mxu0 %v2401
        %3988 = vmatmul.bf16.gmra.mxu0 %v340
        %v3989 = vpop.f32.mrf.mxu0
        %v3990 = vadd.f32 0.0, %v3989
        %v3991 = vpop.f32.mrf.mxu0
        %v3992 = vadd.f32 0.0, %v3991
        %3993 = vdwg.mxu0
        %3994 = vmatpush.bf16.msra.mxu0 %v2521
        %3995 = vmatpush.bf16.msra.mxu0 %v2513
        %3996 = vmatpush.bf16.msra.mxu0 %v2505
        %3997 = vmatpush.bf16.msra.mxu0 %v2497
        %3998 = vmatpush.bf16.msra.mxu0 %v2489
        %3999 = vmatpush.bf16.msra.mxu0 %v2481
        %4000 = vmatpush.bf16.msra.mxu0 %v2473
        %4001 = vmatpush.bf16.msra.mxu0 %v2465
        %4002 = vmatmul.bf16.gmra.mxu0 %v341
        %v4003 = vpop.f32.mrf.mxu0
        %v4004 = vadd.f32 %v3990, %v4003
        %v4005 = vpop.f32.mrf.mxu0
        %v4006 = vadd.f32 %v3992, %v4005
        %4007 = vdwg.mxu0
        %4008 = vmatpush.bf16.msra.mxu0 %v2585
        %4009 = vmatpush.bf16.msra.mxu0 %v2577
        %4010 = vmatpush.bf16.msra.mxu0 %v2569
        %4011 = vmatpush.bf16.msra.mxu0 %v2561
        %4012 = vmatpush.bf16.msra.mxu0 %v2553
        %4013 = vmatpush.bf16.msra.mxu0 %v2545
        %4014 = vmatpush.bf16.msra.mxu0 %v2537
        %4015 = vmatpush.bf16.msra.mxu0 %v2529
        %4016 = vmatmul.bf16.gmra.mxu0 %v342
        %v4017 = vpop.f32.mrf.mxu0
        %v4018 = vadd.f32 %v4004, %v4017
        %v4019 = vpop.f32.mrf.mxu0
        %v4020 = vadd.f32 %v4006, %v4019
        %4021 = vdwg.mxu0
        %4022 = vmatpush.bf16.msra.mxu0 %v2649
        %4023 = vmatpush.bf16.msra.mxu0 %v2641
        %4024 = vmatpush.bf16.msra.mxu0 %v2633
        %4025 = vmatpush.bf16.msra.mxu0 %v2625
        %4026 = vmatpush.bf16.msra.mxu0 %v2617
        %4027 = vmatpush.bf16.msra.mxu0 %v2609
        %4028 = vmatpush.bf16.msra.mxu0 %v2601
        %4029 = vmatpush.bf16.msra.mxu0 %v2593
        %4030 = vmatmul.bf16.gmra.mxu0 %v343
        %v4031 = vpop.f32.mrf.mxu0
        %v4032 = vadd.f32 %v4018, %v4031
        %v4033 = vpop.f32.mrf.mxu0
        %v4034 = vadd.f32 %v4020, %v4033
        %4035 = vdwg.mxu0
        %4036 = vmatpush.bf16.msra.mxu0 %v2713
        %4037 = vmatpush.bf16.msra.mxu0 %v2705
        %4038 = vmatpush.bf16.msra.mxu0 %v2697
        %4039 = vmatpush.bf16.msra.mxu0 %v2689
        %4040 = vmatpush.bf16.msra.mxu0 %v2681
        %4041 = vmatpush.bf16.msra.mxu0 %v2673
        %4042 = vmatpush.bf16.msra.mxu0 %v2665
        %4043 = vmatpush.bf16.msra.mxu0 %v2657
        %4044 = vmatmul.bf16.gmra.mxu0 %v344
        %v4045 = vpop.f32.mrf.mxu0
        %v4046 = vadd.f32 %v4032, %v4045
        %v4047 = vpop.f32.mrf.mxu0
        %v4048 = vadd.f32 %v4034, %v4047
        %4049 = vdwg.mxu0
        %4050 = vmatpush.bf16.msra.mxu0 %v2777
        %4051 = vmatpush.bf16.msra.mxu0 %v2769
        %4052 = vmatpush.bf16.msra.mxu0 %v2761
        %4053 = vmatpush.bf16.msra.mxu0 %v2753
        %4054 = vmatpush.bf16.msra.mxu0 %v2745
        %4055 = vmatpush.bf16.msra.mxu0 %v2737
        %4056 = vmatpush.bf16.msra.mxu0 %v2729
        %4057 = vmatpush.bf16.msra.mxu0 %v2721
        %4058 = vmatmul.bf16.gmra.mxu0 %v345
        %v4059 = vpop.f32.mrf.mxu0
        %v4060 = vadd.f32 %v4046, %v4059
        %v4061 = vpop.f32.mrf.mxu0
        %v4062 = vadd.f32 %v4048, %v4061
        %4063 = vdwg.mxu0
        %4064 = vmatpush.bf16.msra.mxu0 %v2841
        %4065 = vmatpush.bf16.msra.mxu0 %v2833
        %4066 = vmatpush.bf16.msra.mxu0 %v2825
        %4067 = vmatpush.bf16.msra.mxu0 %v2817
        %4068 = vmatpush.bf16.msra.mxu0 %v2809
        %4069 = vmatpush.bf16.msra.mxu0 %v2801
        %4070 = vmatpush.bf16.msra.mxu0 %v2793
        %4071 = vmatpush.bf16.msra.mxu0 %v2785
        %4072 = vmatmul.bf16.gmra.mxu0 %v346
        %v4073 = vpop.f32.mrf.mxu0
        %v4074 = vadd.f32 %v4060, %v4073
        %v4075 = vpop.f32.mrf.mxu0
        %v4076 = vadd.f32 %v4062, %v4075
        %4077 = vdwg.mxu0
        %4078 = vmatpush.bf16.msra.mxu0 %v2905
        %4079 = vmatpush.bf16.msra.mxu0 %v2897
        %4080 = vmatpush.bf16.msra.mxu0 %v2889
        %4081 = vmatpush.bf16.msra.mxu0 %v2881
        %4082 = vmatpush.bf16.msra.mxu0 %v2873
        %4083 = vmatpush.bf16.msra.mxu0 %v2865
        %4084 = vmatpush.bf16.msra.mxu0 %v2857
        %4085 = vmatpush.bf16.msra.mxu0 %v2849
        %4086 = vmatmul.bf16.gmra.mxu0 %v347
        %v4087 = vpop.f32.mrf.mxu0
        %v4088 = vadd.f32 %v4074, %v4087
        %v4089 = vpop.f32.mrf.mxu0
        %v4090 = vadd.f32 %v4076, %v4089
        %4091 = vdwg.mxu0
        %4092 = vmatpush.bf16.msra.mxu0 %v2458
        %4093 = vmatpush.bf16.msra.mxu0 %v2450
        %4094 = vmatpush.bf16.msra.mxu0 %v2442
        %4095 = vmatpush.bf16.msra.mxu0 %v2434
        %4096 = vmatpush.bf16.msra.mxu0 %v2426
        %4097 = vmatpush.bf16.msra.mxu0 %v2418
        %4098 = vmatpush.bf16.msra.mxu0 %v2410
        %4099 = vmatpush.bf16.msra.mxu0 %v2402
        %4100 = vmatmul.bf16.gmra.mxu0 %v340
        %v4101 = vpop.f32.mrf.mxu0
        %v4102 = vadd.f32 0.0, %v4101
        %v4103 = vpop.f32.mrf.mxu0
        %v4104 = vadd.f32 0.0, %v4103
        %4105 = vdwg.mxu0
        %4106 = vmatpush.bf16.msra.mxu0 %v2522
        %4107 = vmatpush.bf16.msra.mxu0 %v2514
        %4108 = vmatpush.bf16.msra.mxu0 %v2506
        %4109 = vmatpush.bf16.msra.mxu0 %v2498
        %4110 = vmatpush.bf16.msra.mxu0 %v2490
        %4111 = vmatpush.bf16.msra.mxu0 %v2482
        %4112 = vmatpush.bf16.msra.mxu0 %v2474
        %4113 = vmatpush.bf16.msra.mxu0 %v2466
        %4114 = vmatmul.bf16.gmra.mxu0 %v341
        %v4115 = vpop.f32.mrf.mxu0
        %v4116 = vadd.f32 %v4102, %v4115
        %v4117 = vpop.f32.mrf.mxu0
        %v4118 = vadd.f32 %v4104, %v4117
        %4119 = vdwg.mxu0
        %4120 = vmatpush.bf16.msra.mxu0 %v2586
        %4121 = vmatpush.bf16.msra.mxu0 %v2578
        %4122 = vmatpush.bf16.msra.mxu0 %v2570
        %4123 = vmatpush.bf16.msra.mxu0 %v2562
        %4124 = vmatpush.bf16.msra.mxu0 %v2554
        %4125 = vmatpush.bf16.msra.mxu0 %v2546
        %4126 = vmatpush.bf16.msra.mxu0 %v2538
        %4127 = vmatpush.bf16.msra.mxu0 %v2530
        %4128 = vmatmul.bf16.gmra.mxu0 %v342
        %v4129 = vpop.f32.mrf.mxu0
        %v4130 = vadd.f32 %v4116, %v4129
        %v4131 = vpop.f32.mrf.mxu0
        %v4132 = vadd.f32 %v4118, %v4131
        %4133 = vdwg.mxu0
        %4134 = vmatpush.bf16.msra.mxu0 %v2650
        %4135 = vmatpush.bf16.msra.mxu0 %v2642
        %4136 = vmatpush.bf16.msra.mxu0 %v2634
        %4137 = vmatpush.bf16.msra.mxu0 %v2626
        %4138 = vmatpush.bf16.msra.mxu0 %v2618
        %4139 = vmatpush.bf16.msra.mxu0 %v2610
        %4140 = vmatpush.bf16.msra.mxu0 %v2602
        %4141 = vmatpush.bf16.msra.mxu0 %v2594
        %4142 = vmatmul.bf16.gmra.mxu0 %v343
        %v4143 = vpop.f32.mrf.mxu0
        %v4144 = vadd.f32 %v4130, %v4143
        %v4145 = vpop.f32.mrf.mxu0
        %v4146 = vadd.f32 %v4132, %v4145
        %4147 = vdwg.mxu0
        %4148 = vmatpush.bf16.msra.mxu0 %v2714
        %4149 = vmatpush.bf16.msra.mxu0 %v2706
        %4150 = vmatpush.bf16.msra.mxu0 %v2698
        %4151 = vmatpush.bf16.msra.mxu0 %v2690
        %4152 = vmatpush.bf16.msra.mxu0 %v2682
        %4153 = vmatpush.bf16.msra.mxu0 %v2674
        %4154 = vmatpush.bf16.msra.mxu0 %v2666
        %4155 = vmatpush.bf16.msra.mxu0 %v2658
        %4156 = vmatmul.bf16.gmra.mxu0 %v344
        %v4157 = vpop.f32.mrf.mxu0
        %v4158 = vadd.f32 %v4144, %v4157
        %v4159 = vpop.f32.mrf.mxu0
        %v4160 = vadd.f32 %v4146, %v4159
        %4161 = vdwg.mxu0
        %4162 = vmatpush.bf16.msra.mxu0 %v2778
        %4163 = vmatpush.bf16.msra.mxu0 %v2770
        %4164 = vmatpush.bf16.msra.mxu0 %v2762
        %4165 = vmatpush.bf16.msra.mxu0 %v2754
        %4166 = vmatpush.bf16.msra.mxu0 %v2746
        %4167 = vmatpush.bf16.msra.mxu0 %v2738
        %4168 = vmatpush.bf16.msra.mxu0 %v2730
        %4169 = vmatpush.bf16.msra.mxu0 %v2722
        %4170 = vmatmul.bf16.gmra.mxu0 %v345
        %v4171 = vpop.f32.mrf.mxu0
        %v4172 = vadd.f32 %v4158, %v4171
        %v4173 = vpop.f32.mrf.mxu0
        %v4174 = vadd.f32 %v4160, %v4173
        %4175 = vdwg.mxu0
        %4176 = vmatpush.bf16.msra.mxu0 %v2842
        %4177 = vmatpush.bf16.msra.mxu0 %v2834
        %4178 = vmatpush.bf16.msra.mxu0 %v2826
        %4179 = vmatpush.bf16.msra.mxu0 %v2818
        %4180 = vmatpush.bf16.msra.mxu0 %v2810
        %4181 = vmatpush.bf16.msra.mxu0 %v2802
        %4182 = vmatpush.bf16.msra.mxu0 %v2794
        %4183 = vmatpush.bf16.msra.mxu0 %v2786
        %4184 = vmatmul.bf16.gmra.mxu0 %v346
        %v4185 = vpop.f32.mrf.mxu0
        %v4186 = vadd.f32 %v4172, %v4185
        %v4187 = vpop.f32.mrf.mxu0
        %v4188 = vadd.f32 %v4174, %v4187
        %4189 = vdwg.mxu0
        %4190 = vmatpush.bf16.msra.mxu0 %v2906
        %4191 = vmatpush.bf16.msra.mxu0 %v2898
        %4192 = vmatpush.bf16.msra.mxu0 %v2890
        %4193 = vmatpush.bf16.msra.mxu0 %v2882
        %4194 = vmatpush.bf16.msra.mxu0 %v2874
        %4195 = vmatpush.bf16.msra.mxu0 %v2866
        %4196 = vmatpush.bf16.msra.mxu0 %v2858
        %4197 = vmatpush.bf16.msra.mxu0 %v2850
        %4198 = vmatmul.bf16.gmra.mxu0 %v347
        %v4199 = vpop.f32.mrf.mxu0
        %v4200 = vadd.f32 %v4186, %v4199
        %v4201 = vpop.f32.mrf.mxu0
        %v4202 = vadd.f32 %v4188, %v4201
        %4203 = vdwg.mxu0
        %4204 = vmatpush.bf16.msra.mxu0 %v2459
        %4205 = vmatpush.bf16.msra.mxu0 %v2451
        %4206 = vmatpush.bf16.msra.mxu0 %v2443
        %4207 = vmatpush.bf16.msra.mxu0 %v2435
        %4208 = vmatpush.bf16.msra.mxu0 %v2427
        %4209 = vmatpush.bf16.msra.mxu0 %v2419
        %4210 = vmatpush.bf16.msra.mxu0 %v2411
        %4211 = vmatpush.bf16.msra.mxu0 %v2403
        %4212 = vmatmul.bf16.gmra.mxu0 %v340
        %v4213 = vpop.f32.mrf.mxu0
        %v4214 = vadd.f32 0.0, %v4213
        %v4215 = vpop.f32.mrf.mxu0
        %v4216 = vadd.f32 0.0, %v4215
        %4217 = vdwg.mxu0
        %4218 = vmatpush.bf16.msra.mxu0 %v2523
        %4219 = vmatpush.bf16.msra.mxu0 %v2515
        %4220 = vmatpush.bf16.msra.mxu0 %v2507
        %4221 = vmatpush.bf16.msra.mxu0 %v2499
        %4222 = vmatpush.bf16.msra.mxu0 %v2491
        %4223 = vmatpush.bf16.msra.mxu0 %v2483
        %4224 = vmatpush.bf16.msra.mxu0 %v2475
        %4225 = vmatpush.bf16.msra.mxu0 %v2467
        %4226 = vmatmul.bf16.gmra.mxu0 %v341
        %v4227 = vpop.f32.mrf.mxu0
        %v4228 = vadd.f32 %v4214, %v4227
        %v4229 = vpop.f32.mrf.mxu0
        %v4230 = vadd.f32 %v4216, %v4229
        %4231 = vdwg.mxu0
        %4232 = vmatpush.bf16.msra.mxu0 %v2587
        %4233 = vmatpush.bf16.msra.mxu0 %v2579
        %4234 = vmatpush.bf16.msra.mxu0 %v2571
        %4235 = vmatpush.bf16.msra.mxu0 %v2563
        %4236 = vmatpush.bf16.msra.mxu0 %v2555
        %4237 = vmatpush.bf16.msra.mxu0 %v2547
        %4238 = vmatpush.bf16.msra.mxu0 %v2539
        %4239 = vmatpush.bf16.msra.mxu0 %v2531
        %4240 = vmatmul.bf16.gmra.mxu0 %v342
        %v4241 = vpop.f32.mrf.mxu0
        %v4242 = vadd.f32 %v4228, %v4241
        %v4243 = vpop.f32.mrf.mxu0
        %v4244 = vadd.f32 %v4230, %v4243
        %4245 = vdwg.mxu0
        %4246 = vmatpush.bf16.msra.mxu0 %v2651
        %4247 = vmatpush.bf16.msra.mxu0 %v2643
        %4248 = vmatpush.bf16.msra.mxu0 %v2635
        %4249 = vmatpush.bf16.msra.mxu0 %v2627
        %4250 = vmatpush.bf16.msra.mxu0 %v2619
        %4251 = vmatpush.bf16.msra.mxu0 %v2611
        %4252 = vmatpush.bf16.msra.mxu0 %v2603
        %4253 = vmatpush.bf16.msra.mxu0 %v2595
        %4254 = vmatmul.bf16.gmra.mxu0 %v343
        %v4255 = vpop.f32.mrf.mxu0
        %v4256 = vadd.f32 %v4242, %v4255
        %v4257 = vpop.f32.mrf.mxu0
        %v4258 = vadd.f32 %v4244, %v4257
        %4259 = vdwg.mxu0
        %4260 = vmatpush.bf16.msra.mxu0 %v2715
        %4261 = vmatpush.bf16.msra.mxu0 %v2707
        %4262 = vmatpush.bf16.msra.mxu0 %v2699
        %4263 = vmatpush.bf16.msra.mxu0 %v2691
        %4264 = vmatpush.bf16.msra.mxu0 %v2683
        %4265 = vmatpush.bf16.msra.mxu0 %v2675
        %4266 = vmatpush.bf16.msra.mxu0 %v2667
        %4267 = vmatpush.bf16.msra.mxu0 %v2659
        %4268 = vmatmul.bf16.gmra.mxu0 %v344
        %v4269 = vpop.f32.mrf.mxu0
        %v4270 = vadd.f32 %v4256, %v4269
        %v4271 = vpop.f32.mrf.mxu0
        %v4272 = vadd.f32 %v4258, %v4271
        %4273 = vdwg.mxu0
        %4274 = vmatpush.bf16.msra.mxu0 %v2779
        %4275 = vmatpush.bf16.msra.mxu0 %v2771
        %4276 = vmatpush.bf16.msra.mxu0 %v2763
        %4277 = vmatpush.bf16.msra.mxu0 %v2755
        %4278 = vmatpush.bf16.msra.mxu0 %v2747
        %4279 = vmatpush.bf16.msra.mxu0 %v2739
        %4280 = vmatpush.bf16.msra.mxu0 %v2731
        %4281 = vmatpush.bf16.msra.mxu0 %v2723
        %4282 = vmatmul.bf16.gmra.mxu0 %v345
        %v4283 = vpop.f32.mrf.mxu0
        %v4284 = vadd.f32 %v4270, %v4283
        %v4285 = vpop.f32.mrf.mxu0
        %v4286 = vadd.f32 %v4272, %v4285
        %4287 = vdwg.mxu0
        %4288 = vmatpush.bf16.msra.mxu0 %v2843
        %4289 = vmatpush.bf16.msra.mxu0 %v2835
        %4290 = vmatpush.bf16.msra.mxu0 %v2827
        %4291 = vmatpush.bf16.msra.mxu0 %v2819
        %4292 = vmatpush.bf16.msra.mxu0 %v2811
        %4293 = vmatpush.bf16.msra.mxu0 %v2803
        %4294 = vmatpush.bf16.msra.mxu0 %v2795
        %4295 = vmatpush.bf16.msra.mxu0 %v2787
        %4296 = vmatmul.bf16.gmra.mxu0 %v346
        %v4297 = vpop.f32.mrf.mxu0
        %v4298 = vadd.f32 %v4284, %v4297
        %v4299 = vpop.f32.mrf.mxu0
        %v4300 = vadd.f32 %v4286, %v4299
        %4301 = vdwg.mxu0
        %4302 = vmatpush.bf16.msra.mxu0 %v2907
        %4303 = vmatpush.bf16.msra.mxu0 %v2899
        %4304 = vmatpush.bf16.msra.mxu0 %v2891
        %4305 = vmatpush.bf16.msra.mxu0 %v2883
        %4306 = vmatpush.bf16.msra.mxu0 %v2875
        %4307 = vmatpush.bf16.msra.mxu0 %v2867
        %4308 = vmatpush.bf16.msra.mxu0 %v2859
        %4309 = vmatpush.bf16.msra.mxu0 %v2851
        %4310 = vmatmul.bf16.gmra.mxu0 %v347
        %v4311 = vpop.f32.mrf.mxu0
        %v4312 = vadd.f32 %v4298, %v4311
        %v4313 = vpop.f32.mrf.mxu0
        %v4314 = vadd.f32 %v4300, %v4313
        %4315 = vdwg.mxu0
        %v4316 = vlaneseq
        %v4317 = vand.u32 %v4316, 127
        %v4318 = vadd.s32 %v4317, 128
        %v4319 = vadd.s32 %v4317, 256
        %v4320 = vadd.s32 %v4317, 384
        %v4321 = vadd.s32 %v4317, 512
        %vm4322 = vcmp.eq.s32.totalorder %v4317, 0
        %vm4323 = vcmp.eq.s32.totalorder %v4318, 0
        %vm4324 = vcmp.eq.s32.totalorder %v4319, 0
        %vm4325 = vcmp.eq.s32.totalorder %v4320, 0
        %vm4326 = vcmp.eq.s32.totalorder %v4321, 0
        %vm4327 = vcmp.eq.s32.totalorder %v4317, 512
        %vm4328 = vcmp.eq.s32.totalorder %v4318, 512
        %vm4329 = vcmp.eq.s32.totalorder %v4319, 512
        %vm4330 = vcmp.eq.s32.totalorder %v4320, 512
        %vm4331 = vcmp.eq.s32.totalorder %v4321, 512
        %vm4332 = vmor %vm4322, %vm4327
        %vm4333 = vmor %vm4323, %vm4328
        %vm4334 = vmor %vm4324, %vm4329
        %vm4335 = vmor %vm4325, %vm4330
        %vm4336 = vmor %vm4326, %vm4331
        %v4337 = vsel %vm4332, 0.0, %v3976
        %v4338 = vsel %vm4333, 0.0, %v4088
        %v4339 = vsel %vm4334, 0.0, %v4200
        %v4340 = vsel %vm4335, 0.0, %v4312
        %v4341 = vsel %vm4336, 0.0, %v3528
        %v4342 = vsel %vm4332, 0.0, %v3978
        %v4343 = vsel %vm4333, 0.0, %v4090
        %v4344 = vsel %vm4334, 0.0, %v4202
        %v4345 = vsel %vm4335, 0.0, %v4314
        %v4346 = vsel %vm4336, 0.0, %v3530
        %v4347 = vmul.f32 %v3528, %v3528
        %v4348 = vmul.f32 %v3640, %v3640
        %v4349 = vmul.f32 %v3752, %v3752
        %v4350 = vmul.f32 %v3864, %v3864
        %v4351 = vmul.f32 %v3976, %v3976
        %v4352 = vmul.f32 %v3530, %v3530
        %v4353 = vmul.f32 %v3642, %v3642
        %v4354 = vmul.f32 %v3754, %v3754
        %v4355 = vmul.f32 %v3866, %v3866
        %v4356 = vmul.f32 %v3978, %v3978
        %v4357 = vmul.f32 %v4337, %v4337
        %v4358 = vmul.f32 %v4338, %v4338
        %v4359 = vmul.f32 %v4339, %v4339
        %v4360 = vmul.f32 %v4340, %v4340
        %v4361 = vmul.f32 %v4341, %v4341
        %v4362 = vmul.f32 %v4342, %v4342
        %v4363 = vmul.f32 %v4343, %v4343
        %v4364 = vmul.f32 %v4344, %v4344
        %v4365 = vmul.f32 %v4345, %v4345
        %v4366 = vmul.f32 %v4346, %v4346
        %v4367 = vadd.f32 %v4347, %v4357
        %v4368 = vadd.f32 %v4348, %v4358
        %v4369 = vadd.f32 %v4349, %v4359
        %v4370 = vadd.f32 %v4350, %v4360
        %v4371 = vadd.f32 %v4351, %v4361
        %v4372 = vadd.f32 %v4352, %v4362
        %v4373 = vadd.f32 %v4353, %v4363
        %v4374 = vadd.f32 %v4354, %v4364
        %v4375 = vadd.f32 %v4355, %v4365
        %v4376 = vadd.f32 %v4356, %v4366
        %v4377 = vrsqrt.pop %v4367
        %v4378 = vmul.f32 %v4377, %v4367
        %v4379 = vmul.f32 %v4378, %v4377
        %v4380 = vmul.f32 0.5, %v4379
        %v4381 = vsub.f32 1.5, %v4380
        %v4382 = vmul.f32 %v4377, %v4381
        %v4383 = vmul.f32 %v4367, %v4382
        %vm4384 = vcmp.eq.f32.partialorder %v4367, inf
        %v4385 = vsel %vm4384, %v4367, %v4383
        %vm4386 = vcmp.eq.f32.partialorder %v4367, 0.0
        %v4387 = vand.u32 %v4367, 2147483648
        %v4388 = vsel %vm4386, %v4387, %v4385
        %v4389 = vrsqrt.pop %v4368
        %v4390 = vmul.f32 %v4389, %v4368
        %v4391 = vmul.f32 %v4390, %v4389
        %v4392 = vmul.f32 0.5, %v4391
        %v4393 = vsub.f32 1.5, %v4392
        %v4394 = vmul.f32 %v4389, %v4393
        %v4395 = vmul.f32 %v4368, %v4394
        %vm4396 = vcmp.eq.f32.partialorder %v4368, inf
        %v4397 = vsel %vm4396, %v4368, %v4395
        %vm4398 = vcmp.eq.f32.partialorder %v4368, 0.0
        %v4399 = vand.u32 %v4368, 2147483648
        %v4400 = vsel %vm4398, %v4399, %v4397
        %v4401 = vrsqrt.pop %v4369
        %v4402 = vmul.f32 %v4401, %v4369
        %v4403 = vmul.f32 %v4402, %v4401
        %v4404 = vmul.f32 0.5, %v4403
        %v4405 = vsub.f32 1.5, %v4404
        %v4406 = vmul.f32 %v4401, %v4405
        %v4407 = vmul.f32 %v4369, %v4406
        %vm4408 = vcmp.eq.f32.partialorder %v4369, inf
        %v4409 = vsel %vm4408, %v4369, %v4407
        %vm4410 = vcmp.eq.f32.partialorder %v4369, 0.0
        %v4411 = vand.u32 %v4369, 2147483648
        %v4412 = vsel %vm4410, %v4411, %v4409
        %v4413 = vrsqrt.pop %v4370
        %v4414 = vmul.f32 %v4413, %v4370
        %v4415 = vmul.f32 %v4414, %v4413
        %v4416 = vmul.f32 0.5, %v4415
        %v4417 = vsub.f32 1.5, %v4416
        %v4418 = vmul.f32 %v4413, %v4417
        %v4419 = vmul.f32 %v4370, %v4418
        %vm4420 = vcmp.eq.f32.partialorder %v4370, inf
        %v4421 = vsel %vm4420, %v4370, %v4419
        %vm4422 = vcmp.eq.f32.partialorder %v4370, 0.0
        %v4423 = vand.u32 %v4370, 2147483648
        %v4424 = vsel %vm4422, %v4423, %v4421
        %v4425 = vrsqrt.pop %v4371
        %v4426 = vmul.f32 %v4425, %v4371
        %v4427 = vmul.f32 %v4426, %v4425
        %v4428 = vmul.f32 0.5, %v4427
        %v4429 = vsub.f32 1.5, %v4428
        %v4430 = vmul.f32 %v4425, %v4429
        %v4431 = vmul.f32 %v4371, %v4430
        %vm4432 = vcmp.eq.f32.partialorder %v4371, inf
        %v4433 = vsel %vm4432, %v4371, %v4431
        %vm4434 = vcmp.eq.f32.partialorder %v4371, 0.0
        %v4435 = vand.u32 %v4371, 2147483648
        %v4436 = vsel %vm4434, %v4435, %v4433
        %v4437 = vrsqrt.pop %v4372
        %v4438 = vmul.f32 %v4437, %v4372
        %v4439 = vmul.f32 %v4438, %v4437
        %v4440 = vmul.f32 0.5, %v4439
        %v4441 = vsub.f32 1.5, %v4440
        %v4442 = vmul.f32 %v4437, %v4441
        %v4443 = vmul.f32 %v4372, %v4442
        %vm4444 = vcmp.eq.f32.partialorder %v4372, inf
        %v4445 = vsel %vm4444, %v4372, %v4443
        %vm4446 = vcmp.eq.f32.partialorder %v4372, 0.0
        %v4447 = vand.u32 %v4372, 2147483648
        %v4448 = vsel %vm4446, %v4447, %v4445
        %v4449 = vrsqrt.pop %v4373
        %v4450 = vmul.f32 %v4449, %v4373
        %v4451 = vmul.f32 %v4450, %v4449
        %v4452 = vmul.f32 0.5, %v4451
        %v4453 = vsub.f32 1.5, %v4452
        %v4454 = vmul.f32 %v4449, %v4453
        %v4455 = vmul.f32 %v4373, %v4454
        %vm4456 = vcmp.eq.f32.partialorder %v4373, inf
        %v4457 = vsel %vm4456, %v4373, %v4455
        %vm4458 = vcmp.eq.f32.partialorder %v4373, 0.0
        %v4459 = vand.u32 %v4373, 2147483648
        %v4460 = vsel %vm4458, %v4459, %v4457
        %v4461 = vrsqrt.pop %v4374
        %v4462 = vmul.f32 %v4461, %v4374
        %v4463 = vmul.f32 %v4462, %v4461
        %v4464 = vmul.f32 0.5, %v4463
        %v4465 = vsub.f32 1.5, %v4464
        %v4466 = vmul.f32 %v4461, %v4465
        %v4467 = vmul.f32 %v4374, %v4466
        %vm4468 = vcmp.eq.f32.partialorder %v4374, inf
        %v4469 = vsel %vm4468, %v4374, %v4467
        %vm4470 = vcmp.eq.f32.partialorder %v4374, 0.0
        %v4471 = vand.u32 %v4374, 2147483648
        %v4472 = vsel %vm4470, %v4471, %v4469
        %v4473 = vrsqrt.pop %v4375
        %v4474 = vmul.f32 %v4473, %v4375
        %v4475 = vmul.f32 %v4474, %v4473
        %v4476 = vmul.f32 0.5, %v4475
        %v4477 = vsub.f32 1.5, %v4476
        %v4478 = vmul.f32 %v4473, %v4477
        %v4479 = vmul.f32 %v4375, %v4478
        %vm4480 = vcmp.eq.f32.partialorder %v4375, inf
        %v4481 = vsel %vm4480, %v4375, %v4479
        %vm4482 = vcmp.eq.f32.partialorder %v4375, 0.0
        %v4483 = vand.u32 %v4375, 2147483648
        %v4484 = vsel %vm4482, %v4483, %v4481
        %v4485 = vrsqrt.pop %v4376
        %v4486 = vmul.f32 %v4485, %v4376
        %v4487 = vmul.f32 %v4486, %v4485
        %v4488 = vmul.f32 0.5, %v4487
        %v4489 = vsub.f32 1.5, %v4488
        %v4490 = vmul.f32 %v4485, %v4489
        %v4491 = vmul.f32 %v4376, %v4490
        %vm4492 = vcmp.eq.f32.partialorder %v4376, inf
        %v4493 = vsel %vm4492, %v4376, %v4491
        %vm4494 = vcmp.eq.f32.partialorder %v4376, 0.0
        %v4495 = vand.u32 %v4376, 2147483648
        %v4496 = vsel %vm4494, %v4495, %v4493
        %4497 = vst [vmem:[%s273] sm:$0xff] %v4388
        %4498 = vst [vmem:[%s273 + $0x8] sm:$0xff] %v4400
        %4499 = vst [vmem:[%s273 + $0x10] sm:$0xff] %v4412
        %4500 = vst [vmem:[%s273 + $0x18] sm:$0xff] %v4424
        %4501 = vst [vmem:[%s273 + $0x20] sm:$0xff] %v4436
        %4502 = vst [vmem:[%s273 + $0x28] sm:$0xff] %v4448
        %4503 = vst [vmem:[%s273 + $0x30] sm:$0xff] %v4460
        %4504 = vst [vmem:[%s273 + $0x38] sm:$0xff] %v4472
        %4505 = vst [vmem:[%s273 + $0x40] sm:$0xff] %v4484
        %4506 = vst [vmem:[%s273 + $0x48] sm:$0xff] %v4496
        %s4507 = sand.u32 %s124, 1
        %s4508 = scalar_lea.sflag [#allocation4], %s4507
        %s4509 = sand.u32 %s124, 1
        %s4510 = smul.addr %s4509, 80
        %s4511 = scalar_lea.vmem [#allocation8], %s4510
        // Predicated region
        $region45: #{tpu_custom_call.1} parent=31 // pred_check
          %p4512 = pneg %p134
        $region46: #{tpu_custom_call.1} parent=31 // pred_check_branch
          %4514 = sbr.rel (%p4512) target = $region48
        $region47: #{tpu_custom_call.1} parent=31 // pred_region
          %s4515 = smul.u32 2, %s28
          %4517 = vsyncadd %s4508, 0
          %s4518 = smul.addr %s4515, 5
          %s4519 = smul.addr %s27, 10
          %s4520 = sadd.s32 %s4518, %s4519
          %s4521 = smul.addr %s4520, 8
          %s4522 = scalar_lea.hbm %s3, %s4521
          %s4523 = sshll.u32 %s4511, 4
          %s4524 = int_to_ptr.vmem [resolvable:$true] %s4523
          %s4525 = sshll.u32 %s4522, 4
          %s4526 = int_to_ptr.hbm [resolvable:$true] %s4525
          %4531 = dma.vmem_to_hbm [thread:$0]  %s4524, 1280, %s4526, %s4508, 640, 640, 40
        $region48: #{tpu_custom_call.1} parent=31 // pred_fallthru
          _
      $region32: #{tpu_custom_call.1} parent=5 // pred_fallthru
        _
      %p4532 = scmp.le.s32.totalorder 2, %s18
      // Predicated region
      $region49: #{tpu_custom_call.1} parent=5 // pred_check
        %p4533 = pneg %p4532
      $region50: #{tpu_custom_call.1} parent=5 // pred_check_branch
        %4535 = sbr.rel (%p4533) target = $region52
      $region51: #{tpu_custom_call.1} parent=5 // pred_region
        %s4536 = ssub.s32 %s18, 2
        // Predicated region
        $region53: #{tpu_custom_call.1} parent=51 // pred_check
          %p4537 = pneg %p140
        $region54: #{tpu_custom_call.1} parent=51 // pred_check_branch
          %4539 = sbr.rel (%p4537) target = $region56
        $region55: #{tpu_custom_call.1} parent=51 // pred_region
          %s4540 = sand.u32 %s125, 1
          %s4541 = scalar_lea.sflag [#allocation4], %s4540
          %s4542 = sand.u32 %s125, 1
          %s4543 = smul.addr %s4542, 80
          %s4544 = scalar_lea.vmem [#allocation8], %s4543
          %4546 = dma.done %s4541, 1280
        $region56: #{tpu_custom_call.1} parent=51 // pred_fallthru
          _
      $region52: #{tpu_custom_call.1} parent=5 // pred_fallthru
        _
    $region6: #{tpu_custom_call.1} parent=1 // loop_footer
      %s22 = sadd.s32 1, %s18
    $region7: #{tpu_custom_call.1} parent=1 // loop_footer_branch
      %17 = sbr.rel target = $region3
    $region8: #{tpu_custom_call.1} parent=1 // loop_exit
      _
    %4547 = vsyncpa [#allocation3], 1
    %s4548 = scalar_lea.sflag [#allocation3], 1
    %4549 = vsyncpa %s4548, 1
    %4550 = vsyncpa [#allocation6], 1
    %s4551 = scalar_lea.sflag [#allocation6], 1
    %4552 = vsyncpa %s4551, 1
    %4553 = vsyncpa [#allocation4], 1
    %s4554 = scalar_lea.sflag [#allocation4], 1
    %4555 = vsyncpa %s4554, 1

</llo_original>
